<compile_context>
chip_gen: v7x
topology: tpu7x:2x2x1
jax: 0.10.0
libtpu: 0.0.40
codegen_flags: <defaults>
</compile_context>

<pallas_src>
import jax
import jax.numpy as jnp
import numpy as np
from jax.experimental import pallas as pl
from jax.experimental.pallas import tpu as pltpu

IN_FEATURES = 12
LAYER_1, LAYER_2, LAYER_3 = 16, 16, 8
OUT_FEATURES = 1
BATCH = 8
BN_EPS = 1e-5
LANES = 128

DIMS = [(IN_FEATURES, LAYER_1), (LAYER_1, LAYER_2), (LAYER_2, LAYER_3), (LAYER_3, OUT_FEATURES)]
VEC_NAMES = ("b", "wsig", "bsig", "gamma", "beta")


# ---------------- static parameter-slab layout & host-side packing ----------------------

def _param_layout():
    """Static (row_offset, n_rows, n_cols) layout for every parameter in the packed slab."""
    layout = []
    row = 0
    for fin, fout in DIMS:
        entry = {"w": (row, fin, fout)}
        row += fin
        entry["wt"] = (row, fout, fin)          # pre-transposed weight (host-side, free)
        row += fout
        for name in VEC_NAMES:
            entry[name] = (row, 1, fout)
            row += 1
        layout.append(entry)
    total = ((row + 7) // 8) * 8                # pad row count to a sublane multiple
    return layout, total


def pack_params(layers):
    layout, total = _param_layout()
    slab = np.zeros((total, LANES), np.float32)
    for lyr, entry in zip(layers, layout):
        w = np.asarray(lyr["w"], np.float32)
        r, fin, fout = entry["w"]
        slab[r:r + fin, :fout] = w
        r, a, c = entry["wt"]
        slab[r:r + a, :c] = w.T
        for name in VEC_NAMES:
            r, _, fo = entry[name]
            slab[r, :fo] = np.asarray(lyr[name], np.float32).reshape(fo)
    return jnp.asarray(slab)


# ---------------- Pallas kernel ----------------------------------------------------------

def _eye(n, dtype):
    r = jax.lax.broadcasted_iota(jnp.int32, (n, n), 0)
    c = jax.lax.broadcasted_iota(jnp.int32, (n, n), 1)
    return (r == c).astype(dtype)


def _make_kernel(layout, batch):
    def kernel(x_ref, p_ref, out_ref):
        def param(li, name):
            r, nrow, ncol = layout[li][name]
            return p_ref[r:r + nrow, 0:ncol]

        # Hoisted identity matrices (built once per unique hidden size, reused everywhere).
        eyes = {n: _eye(n, jnp.float32) for n in {LAYER_1, LAYER_2, LAYER_3}}

        def fc_input(x, li):
            w, b = param(li, "w"), param(li, "b")
            ws, bs = param(li, "wsig"), param(li, "bsig")
            fout = w.shape[1]
            mu = jnp.dot(x, w, preferred_element_type=jnp.float32) + b
            diag = (jnp.sum(x * x, axis=1, keepdims=True) * jax.nn.softplus(ws)
                    + jax.nn.softplus(bs))
            sigma = diag[:, :, None] * eyes[fout][None]
            return mu, sigma

        def fc(mu_in, sigma_in, li):
            w, wt = param(li, "w"), param(li, "wt")
            b = param(li, "b")
            ws, bs = param(li, "wsig"), param(li, "bsig")
            n_in, n_out = w.shape

            tr = jnp.sum(jnp.sum(sigma_in * eyes[n_in][None], axis=2), axis=1, keepdims=True)
            musq = jnp.sum(mu_in * mu_in, axis=1, keepdims=True)
            diag = jax.nn.softplus(ws) * (tr + musq) + jax.nn.softplus(bs)

            if n_out == 1:
                # out_features == 1: pure VPU (broadcast-mul + reduce), no MXU fill/drain.
                mu = jnp.sum(mu_in * wt, axis=1, keepdims=True) + b                 # (B,1)
                outer = w * wt                                                      # (in,in)
                quad = jnp.sum(jnp.sum(sigma_in * outer[None], axis=2), axis=1,
                               keepdims=True)[:, :, None]                           # (B,1,1)
                demb = diag[:, :, None]
            else:
                mu = jnp.dot(mu_in, w, preferred_element_type=jnp.float32) + b
                wb = jnp.broadcast_to(w[None], (batch, n_in, n_out))
                wtb = jnp.broadcast_to(wt[None], (batch, n_out, n_in))
                # T = Sigma @ W, quad = W^T @ T  (two batched matmuls, no per-sample loop)
                t = jnp.einsum('bij,bjo->bio', sigma_in, wb,
                               preferred_element_type=jnp.float32)
                quad = jnp.einsum('bpi,biq->bpq', wtb, t,
                                  preferred_element_type=jnp.float32)
                demb = diag[:, :, None] * eyes[n_out][None]
            return mu, quad + demb

        def bn(mu, li):
            g, be = param(li, "gamma"), param(li, "beta")
            m = jnp.mean(mu, axis=0, keepdims=True)
            v = jnp.mean((mu - m) ** 2, axis=0, keepdims=True)
            return g * (mu - m) * jax.lax.rsqrt(v + BN_EPS) + be

        def relu(mu, sigma):
            gate = (mu > 0).astype(mu.dtype)
            return mu * gate, sigma * gate[:, :, None] * gate[:, None, :]

        x = x_ref[:, 0:IN_FEATURES]

        mu, sigma = fc_input(x, 0)
        mu = bn(mu, 0)
        mu, sigma = relu(mu, sigma)
        for li in range(1, 4):
            mu, sigma = fc(mu, sigma, li)
            mu = bn(mu, li)
            if li < 3:                    # no ReLU after fullyCon4 / bn4
                mu, sigma = relu(mu, sigma)

        # Pack both outputs into one lane-dense (B, 128) buffer: lane 0 = mu, lane 1 = sigma.
        lane = jax.lax.broadcasted_iota(jnp.int32, (batch, LANES), 1)
        sig_flat = sigma.reshape(batch, OUT_FEATURES)
        out_ref[...] = (jnp.where(lane == 0, mu, 0.0)
                        + jnp.where(lane == 1, sig_flat, 0.0))

    return kernel


def vdpnet_forward(x, layers):
    layout, _ = _param_layout()
    batch, feat = x.shape
    x_pad = jnp.zeros((batch, LANES), jnp.float32).at[:, :feat].set(x)
    slab = pack_params(layers)

    out = pl.pallas_call(
        _make_kernel(layout, batch),
        out_shape=jax.ShapeDtypeStruct((batch, LANES), jnp.float32),
        in_specs=[pl.BlockSpec(memory_space=pltpu.MemorySpace.VMEM),
                  pl.BlockSpec(memory_space=pltpu.MemorySpace.VMEM)],
        out_specs=pl.BlockSpec(memory_space=pltpu.MemorySpace.VMEM),
    )(x_pad, slab)

    mu = out[:, 0:OUT_FEATURES]
    sigma = out[:, OUT_FEATURES:2 * OUT_FEATURES].reshape(batch, OUT_FEATURES, OUT_FEATURES)
    return mu, sigma


# ---------------- Pure-JAX reference (same math, independent formulation) ----------------

def vdpnet_reference(x, layers):
    sp = jax.nn.softplus

    def bn(mu, g, be):
        m = jnp.mean(mu, axis=0, keepdims=True)
        v = jnp.mean((mu - m) ** 2, axis=0, keepdims=True)
        return g * (mu - m) * jax.lax.rsqrt(v + BN_EPS) + be

    def relu(mu, sigma):
        gt = (mu > 0).astype(mu.dtype)
        return mu * gt, sigma * gt[:, :, None] * gt[:, None, :]

    l = layers[0]
    mu = x @ l["w"] + l["b"]
    diag = jnp.sum(x * x, axis=1, keepdims=True) * sp(l["wsig"]) + sp(l["bsig"])
    sigma = jax.vmap(jnp.diag)(diag)
    mu = bn(mu, l["gamma"], l["beta"])
    mu, sigma = relu(mu, sigma)

    for li in range(1, 4):
        l = layers[li]
        w = l["w"]
        new_mu = mu @ w + l["b"]
        quad = jnp.einsum('ip,bij,jq->bpq', w, sigma, w)
        tr = jnp.trace(sigma, axis1=1, axis2=2)[:, None]
        musq = jnp.sum(mu * mu, axis=1, keepdims=True)
        diag = sp(l["wsig"]) * (tr + musq) + sp(l["bsig"])
        sigma = quad + jax.vmap(jnp.diag)(diag)
        mu = bn(new_mu, l["gamma"], l["beta"])
        if li < 3:
            mu, sigma = relu(mu, sigma)
    return mu, sigma


# ---------------- Deterministic parameter init -------------------------------------------

def init_params(key):
    layers = []
    for fin, fout in DIMS:
        key, k1, k2, k3, k4 = jax.random.split(key, 5)
        layers.append(dict(
            w=jax.random.normal(k1, (fin, fout), jnp.float32) * (1.0 / np.sqrt(fin)),
            b=jax.random.normal(k2, (1, fout), jnp.float32) * 0.1,
            # raw (pre-softplus) weight/bias variance parameters -> small positive variances
            wsig=jax.random.normal(k3, (1, fout), jnp.float32) * 0.1 - 4.0,
            bsig=jax.random.normal(k4, (1, fout), jnp.float32) * 0.1 - 4.0,
            gamma=jnp.ones((1, fout), jnp.float32),   # BatchNorm1d default affine init
            beta=jnp.zeros((1, fout), jnp.float32),
        ))
    return layers


if __name__ == "__main__":
    key = jax.random.PRNGKey(0)
    key, kx = jax.random.split(key)
    x = jax.random.normal(kx, (BATCH, IN_FEATURES), jnp.float32)
    layers = init_params(key)

    mu, sigma = vdpnet_forward(x, layers)
    jax.block_until_ready((mu, sigma))

    mu_ref, sigma_ref = vdpnet_reference(x, layers)
    np.testing.assert_allclose(np.asarray(mu), np.asarray(mu_ref), rtol=1e-4, atol=1e-4)
    np.testing.assert_allclose(np.asarray(sigma), np.asarray(sigma_ref), rtol=1e-4, atol=1e-4)

    print("KERNEL_OK")
</pallas_src>

<mosaic_0001>
module attributes {stable_mosaic.version = 11 : i64} {
  func.func @kernel(%arg0: memref<8x128xf32, #tpu.memory_space<vmem>>, %arg1: memref<120x128xf32, #tpu.memory_space<vmem>>, %arg2: memref<8x128xf32, #tpu.memory_space<vmem>>) attributes {dimension_semantics = [], scalar_prefetch = 0 : i64, scratch_operands = 0 : i64, tpu.core_type = #tpu.core_type<tc>} {
    %0 = tpu.iota {dimensions = array<i32: 0>} : vector<16x16xi32>
    %1 = tpu.iota {dimensions = array<i32: 1>} : vector<16x16xi32>
    %2 = arith.cmpi eq, %0, %1 : vector<16x16xi32>
    %3 = arith.extui %2 : vector<16x16xi1> to vector<16x16xi32>
    %4 = arith.sitofp %3 : vector<16x16xi32> to vector<16x16xf32>
    %5 = tpu.iota {dimensions = array<i32: 0>} : vector<8x8xi32>
    %6 = tpu.iota {dimensions = array<i32: 1>} : vector<8x8xi32>
    %7 = arith.cmpi eq, %5, %6 : vector<8x8xi32>
    %8 = arith.extui %7 : vector<8x8xi1> to vector<8x8xi32>
    %9 = arith.sitofp %8 : vector<8x8xi32> to vector<8x8xf32>
    %c0 = arith.constant 0 : index
    %c0_0 = arith.constant 0 : index
    %10 = vector.load %arg0[%c0, %c0_0] : memref<8x128xf32, #tpu.memory_space<vmem>>, vector<8x12xf32>
    %c0_1 = arith.constant 0 : index
    %c0_2 = arith.constant 0 : index
    %11 = vector.load %arg1[%c0_1, %c0_2] : memref<120x128xf32, #tpu.memory_space<vmem>>, vector<12x16xf32>
    %c28 = arith.constant 28 : index
    %c0_3 = arith.constant 0 : index
    %12 = vector.load %arg1[%c28, %c0_3] : memref<120x128xf32, #tpu.memory_space<vmem>>, vector<1x16xf32>
    %c29 = arith.constant 29 : index
    %c0_4 = arith.constant 0 : index
    %13 = vector.load %arg1[%c29, %c0_4] : memref<120x128xf32, #tpu.memory_space<vmem>>, vector<1x16xf32>
    %c30 = arith.constant 30 : index
    %c0_5 = arith.constant 0 : index
    %14 = vector.load %arg1[%c30, %c0_5] : memref<120x128xf32, #tpu.memory_space<vmem>>, vector<1x16xf32>
    %cst = arith.constant dense<0.000000e+00> : vector<8x16xf32>
    %15 = tpu.matmul %10, %11, %cst {dimension_numbers = #tpu.dot_dimension_numbers<[1], [0], [0], [1], [0, 0, 1, 1], [], []>} : vector<8x12xf32>, vector<12x16xf32>, vector<8x16xf32> -> vector<8x16xf32>
    %16 = vector.broadcast %12 : vector<1x16xf32> to vector<8x16xf32>
    %17 = arith.addf %15, %16 : vector<8x16xf32>
    %18 = arith.mulf %10, %10 : vector<8x12xf32>
    %cst_6 = arith.constant dense<0.000000e+00> : vector<8xf32>
    %19 = vector.multi_reduction <add>, %18, %cst_6 [1] : vector<8x12xf32> to vector<8xf32>
    %20 = vector.shape_cast %19 : vector<8xf32> to vector<8x1xf32>
    %cst_7 = arith.constant 0.000000e+00 : f32
    %21 = vector.broadcast %cst_7 : f32 to vector<1x16xf32>
    %22 = arith.maximumf %13, %21 : vector<1x16xf32>
    %23 = vector.broadcast %cst_7 : f32 to vector<1x16xf32>
    %24 = arith.subf %13, %23 : vector<1x16xf32>
    %25 = arith.cmpf one, %24, %24 : vector<1x16xf32>
    %26 = vector.broadcast %cst_7 : f32 to vector<1x16xf32>
    %27 = arith.addf %13, %26 : vector<1x16xf32>
    %28 = math.absf %24 : vector<1x16xf32>
    %cst_8 = arith.constant 0.000000e+00 : f32
    %29 = vector.broadcast %cst_8 : f32 to vector<1x16xf32>
    %30 = arith.subf %29, %28 : vector<1x16xf32>
    %31 = math.exp %30 : vector<1x16xf32>
    %32 = math.log1p %31 : vector<1x16xf32>
    %33 = arith.addf %22, %32 : vector<1x16xf32>
    %34 = arith.select %25, %27, %33 : vector<1x16xi1>, vector<1x16xf32>
    %35 = vector.broadcast %20 : vector<8x1xf32> to vector<8x16xf32>
    %36 = vector.broadcast %34 : vector<1x16xf32> to vector<8x16xf32>
    %37 = arith.mulf %35, %36 : vector<8x16xf32>
    %cst_9 = arith.constant 0.000000e+00 : f32
    %38 = vector.broadcast %cst_9 : f32 to vector<1x16xf32>
    %39 = arith.maximumf %14, %38 : vector<1x16xf32>
    %40 = vector.broadcast %cst_9 : f32 to vector<1x16xf32>
    %41 = arith.subf %14, %40 : vector<1x16xf32>
    %42 = arith.cmpf one, %41, %41 : vector<1x16xf32>
    %43 = vector.broadcast %cst_9 : f32 to vector<1x16xf32>
    %44 = arith.addf %14, %43 : vector<1x16xf32>
    %45 = math.absf %41 : vector<1x16xf32>
    %cst_10 = arith.constant 0.000000e+00 : f32
    %46 = vector.broadcast %cst_10 : f32 to vector<1x16xf32>
    %47 = arith.subf %46, %45 : vector<1x16xf32>
    %48 = math.exp %47 : vector<1x16xf32>
    %49 = math.log1p %48 : vector<1x16xf32>
    %50 = arith.addf %39, %49 : vector<1x16xf32>
    %51 = arith.select %42, %44, %50 : vector<1x16xi1>, vector<1x16xf32>
    %52 = vector.broadcast %51 : vector<1x16xf32> to vector<8x16xf32>
    %53 = arith.addf %37, %52 : vector<8x16xf32>
    %54 = vector.shape_cast %53 : vector<8x16xf32> to vector<8x16x1xf32>
    %55 = vector.shape_cast %4 : vector<16x16xf32> to vector<1x16x16xf32>
    %56 = vector.broadcast %54 : vector<8x16x1xf32> to vector<8x16x16xf32>
    %57 = vector.broadcast %55 : vector<1x16x16xf32> to vector<8x16x16xf32>
    %58 = arith.mulf %56, %57 : vector<8x16x16xf32>
    %c31 = arith.constant 31 : index
    %c0_11 = arith.constant 0 : index
    %59 = vector.load %arg1[%c31, %c0_11] : memref<120x128xf32, #tpu.memory_space<vmem>>, vector<1x16xf32>
    %c32 = arith.constant 32 : index
    %c0_12 = arith.constant 0 : index
    %60 = vector.load %arg1[%c32, %c0_12] : memref<120x128xf32, #tpu.memory_space<vmem>>, vector<1x16xf32>
    %cst_13 = arith.constant dense<0.000000e+00> : vector<16xf32>
    %61 = vector.multi_reduction <add>, %17, %cst_13 [0] : vector<8x16xf32> to vector<16xf32>
    %62 = vector.shape_cast %61 : vector<16xf32> to vector<1x16xf32>
    %cst_14 = arith.constant 8.000000e+00 : f32
    %63 = vector.broadcast %cst_14 : f32 to vector<1x16xf32>
    %64 = arith.divf %62, %63 : vector<1x16xf32>
    %65 = vector.broadcast %64 : vector<1x16xf32> to vector<8x16xf32>
    %66 = arith.subf %17, %65 : vector<8x16xf32>
    %67 = arith.mulf %66, %66 : vector<8x16xf32>
    %cst_15 = arith.constant dense<0.000000e+00> : vector<16xf32>
    %68 = vector.multi_reduction <add>, %67, %cst_15 [0] : vector<8x16xf32> to vector<16xf32>
    %69 = vector.shape_cast %68 : vector<16xf32> to vector<1x16xf32>
    %cst_16 = arith.constant 8.000000e+00 : f32
    %70 = vector.broadcast %cst_16 : f32 to vector<1x16xf32>
    %71 = arith.divf %69, %70 : vector<1x16xf32>
    %72 = vector.broadcast %64 : vector<1x16xf32> to vector<8x16xf32>
    %73 = arith.subf %17, %72 : vector<8x16xf32>
    %74 = vector.broadcast %59 : vector<1x16xf32> to vector<8x16xf32>
    %75 = arith.mulf %74, %73 : vector<8x16xf32>
    %cst_17 = arith.constant 9.99999974E-6 : f32
    %76 = vector.broadcast %cst_17 : f32 to vector<1x16xf32>
    %77 = arith.addf %71, %76 : vector<1x16xf32>
    %78 = math.rsqrt %77 : vector<1x16xf32>
    %79 = vector.broadcast %78 : vector<1x16xf32> to vector<8x16xf32>
    %80 = arith.mulf %75, %79 : vector<8x16xf32>
    %81 = vector.broadcast %60 : vector<1x16xf32> to vector<8x16xf32>
    %82 = arith.addf %80, %81 : vector<8x16xf32>
    %cst_18 = arith.constant 0.000000e+00 : f32
    %83 = vector.broadcast %cst_18 : f32 to vector<8x16xf32>
    %84 = arith.cmpf ogt, %82, %83 : vector<8x16xf32>
    %85 = arith.extui %84 : vector<8x16xi1> to vector<8x16xi32>
    %86 = arith.sitofp %85 : vector<8x16xi32> to vector<8x16xf32>
    %87 = arith.mulf %82, %86 : vector<8x16xf32>
    %88 = vector.shape_cast %86 : vector<8x16xf32> to vector<8x16x1xf32>
    %89 = vector.broadcast %88 : vector<8x16x1xf32> to vector<8x16x16xf32>
    %90 = arith.mulf %58, %89 : vector<8x16x16xf32>
    %91 = vector.shape_cast %86 : vector<8x16xf32> to vector<8x1x16xf32>
    %92 = vector.broadcast %91 : vector<8x1x16xf32> to vector<8x16x16xf32>
    %93 = arith.mulf %90, %92 : vector<8x16x16xf32>
    %c33 = arith.constant 33 : index
    %c0_19 = arith.constant 0 : index
    %94 = vector.load %arg1[%c33, %c0_19] : memref<120x128xf32, #tpu.memory_space<vmem>>, vector<16x16xf32>
    %c49 = arith.constant 49 : index
    %c0_20 = arith.constant 0 : index
    %95 = vector.load %arg1[%c49, %c0_20] : memref<120x128xf32, #tpu.memory_space<vmem>>, vector<16x16xf32>
    %c65 = arith.constant 65 : index
    %c0_21 = arith.constant 0 : index
    %96 = vector.load %arg1[%c65, %c0_21] : memref<120x128xf32, #tpu.memory_space<vmem>>, vector<1x16xf32>
    %c66 = arith.constant 66 : index
    %c0_22 = arith.constant 0 : index
    %97 = vector.load %arg1[%c66, %c0_22] : memref<120x128xf32, #tpu.memory_space<vmem>>, vector<1x16xf32>
    %c67 = arith.constant 67 : index
    %c0_23 = arith.constant 0 : index
    %98 = vector.load %arg1[%c67, %c0_23] : memref<120x128xf32, #tpu.memory_space<vmem>>, vector<1x16xf32>
    %99 = vector.shape_cast %4 : vector<16x16xf32> to vector<1x16x16xf32>
    %100 = vector.broadcast %99 : vector<1x16x16xf32> to vector<8x16x16xf32>
    %101 = arith.mulf %93, %100 : vector<8x16x16xf32>
    %cst_24 = arith.constant dense<0.000000e+00> : vector<8x16xf32>
    %102 = vector.multi_reduction <add>, %101, %cst_24 [2] : vector<8x16x16xf32> to vector<8x16xf32>
    %cst_25 = arith.constant dense<0.000000e+00> : vector<8xf32>
    %103 = vector.multi_reduction <add>, %102, %cst_25 [1] : vector<8x16xf32> to vector<8xf32>
    %104 = vector.shape_cast %103 : vector<8xf32> to vector<8x1xf32>
    %105 = arith.mulf %87, %87 : vector<8x16xf32>
    %cst_26 = arith.constant dense<0.000000e+00> : vector<8xf32>
    %106 = vector.multi_reduction <add>, %105, %cst_26 [1] : vector<8x16xf32> to vector<8xf32>
    %107 = vector.shape_cast %106 : vector<8xf32> to vector<8x1xf32>
    %cst_27 = arith.constant 0.000000e+00 : f32
    %108 = vector.broadcast %cst_27 : f32 to vector<1x16xf32>
    %109 = arith.maximumf %97, %108 : vector<1x16xf32>
    %110 = vector.broadcast %cst_27 : f32 to vector<1x16xf32>
    %111 = arith.subf %97, %110 : vector<1x16xf32>
    %112 = arith.cmpf one, %111, %111 : vector<1x16xf32>
    %113 = vector.broadcast %cst_27 : f32 to vector<1x16xf32>
    %114 = arith.addf %97, %113 : vector<1x16xf32>
    %115 = math.absf %111 : vector<1x16xf32>
    %cst_28 = arith.constant 0.000000e+00 : f32
    %116 = vector.broadcast %cst_28 : f32 to vector<1x16xf32>
    %117 = arith.subf %116, %115 : vector<1x16xf32>
    %118 = math.exp %117 : vector<1x16xf32>
    %119 = math.log1p %118 : vector<1x16xf32>
    %120 = arith.addf %109, %119 : vector<1x16xf32>
    %121 = arith.select %112, %114, %120 : vector<1x16xi1>, vector<1x16xf32>
    %122 = arith.addf %104, %107 : vector<8x1xf32>
    %123 = vector.broadcast %121 : vector<1x16xf32> to vector<8x16xf32>
    %124 = vector.broadcast %122 : vector<8x1xf32> to vector<8x16xf32>
    %125 = arith.mulf %123, %124 : vector<8x16xf32>
    %cst_29 = arith.constant 0.000000e+00 : f32
    %126 = vector.broadcast %cst_29 : f32 to vector<1x16xf32>
    %127 = arith.maximumf %98, %126 : vector<1x16xf32>
    %128 = vector.broadcast %cst_29 : f32 to vector<1x16xf32>
    %129 = arith.subf %98, %128 : vector<1x16xf32>
    %130 = arith.cmpf one, %129, %129 : vector<1x16xf32>
    %131 = vector.broadcast %cst_29 : f32 to vector<1x16xf32>
    %132 = arith.addf %98, %131 : vector<1x16xf32>
    %133 = math.absf %129 : vector<1x16xf32>
    %cst_30 = arith.constant 0.000000e+00 : f32
    %134 = vector.broadcast %cst_30 : f32 to vector<1x16xf32>
    %135 = arith.subf %134, %133 : vector<1x16xf32>
    %136 = math.exp %135 : vector<1x16xf32>
    %137 = math.log1p %136 : vector<1x16xf32>
    %138 = arith.addf %127, %137 : vector<1x16xf32>
    %139 = arith.select %130, %132, %138 : vector<1x16xi1>, vector<1x16xf32>
    %140 = vector.broadcast %139 : vector<1x16xf32> to vector<8x16xf32>
    %141 = arith.addf %125, %140 : vector<8x16xf32>
    %cst_31 = arith.constant dense<0.000000e+00> : vector<8x16xf32>
    %142 = tpu.matmul %87, %94, %cst_31 {dimension_numbers = #tpu.dot_dimension_numbers<[1], [0], [0], [1], [0, 0, 1, 1], [], []>} : vector<8x16xf32>, vector<16x16xf32>, vector<8x16xf32> -> vector<8x16xf32>
    %143 = vector.broadcast %96 : vector<1x16xf32> to vector<8x16xf32>
    %144 = arith.addf %142, %143 : vector<8x16xf32>
    %145 = vector.shape_cast %94 : vector<16x16xf32> to vector<1x16x16xf32>
    %146 = vector.shape_cast %145 : vector<1x16x16xf32> to vector<1x16x16xf32>
    %147 = vector.broadcast %146 : vector<1x16x16xf32> to vector<8x16x16xf32>
    %148 = vector.shape_cast %95 : vector<16x16xf32> to vector<1x16x16xf32>
    %149 = vector.shape_cast %148 : vector<1x16x16xf32> to vector<1x16x16xf32>
    %150 = vector.broadcast %149 : vector<1x16x16xf32> to vector<8x16x16xf32>
    "tpu.trace_start"() <{level = 10 : i32, message = "bij,bjo->bio"}> : () -> ()
    %cst_32 = arith.constant dense<0.000000e+00> : vector<8x16x16xf32>
    %151 = tpu.matmul %93, %147, %cst_32 {dimension_numbers = #tpu.dot_dimension_numbers<[2], [1], [1], [2], [0, 0, 0, 1, 1, 2], [0], [0]>} : vector<8x16x16xf32>, vector<8x16x16xf32>, vector<8x16x16xf32> -> vector<8x16x16xf32>
    "tpu.trace_stop"() : () -> ()
    "tpu.trace_start"() <{level = 10 : i32, message = "bpi,biq->bpq"}> : () -> ()
    %cst_33 = arith.constant dense<0.000000e+00> : vector<8x16x16xf32>
    %152 = tpu.matmul %150, %151, %cst_33 {dimension_numbers = #tpu.dot_dimension_numbers<[2], [1], [1], [2], [0, 0, 0, 1, 1, 2], [0], [0]>} : vector<8x16x16xf32>, vector<8x16x16xf32>, vector<8x16x16xf32> -> vector<8x16x16xf32>
    "tpu.trace_stop"() : () -> ()
    %153 = vector.shape_cast %141 : vector<8x16xf32> to vector<8x16x1xf32>
    %154 = vector.shape_cast %4 : vector<16x16xf32> to vector<1x16x16xf32>
    %155 = vector.broadcast %153 : vector<8x16x1xf32> to vector<8x16x16xf32>
    %156 = vector.broadcast %154 : vector<1x16x16xf32> to vector<8x16x16xf32>
    %157 = arith.mulf %155, %156 : vector<8x16x16xf32>
    %158 = arith.addf %152, %157 : vector<8x16x16xf32>
    %c68 = arith.constant 68 : index
    %c0_34 = arith.constant 0 : index
    %159 = vector.load %arg1[%c68, %c0_34] : memref<120x128xf32, #tpu.memory_space<vmem>>, vector<1x16xf32>
    %c69 = arith.constant 69 : index
    %c0_35 = arith.constant 0 : index
    %160 = vector.load %arg1[%c69, %c0_35] : memref<120x128xf32, #tpu.memory_space<vmem>>, vector<1x16xf32>
    %cst_36 = arith.constant dense<0.000000e+00> : vector<16xf32>
    %161 = vector.multi_reduction <add>, %144, %cst_36 [0] : vector<8x16xf32> to vector<16xf32>
    %162 = vector.shape_cast %161 : vector<16xf32> to vector<1x16xf32>
    %cst_37 = arith.constant 8.000000e+00 : f32
    %163 = vector.broadcast %cst_37 : f32 to vector<1x16xf32>
    %164 = arith.divf %162, %163 : vector<1x16xf32>
    %165 = vector.broadcast %164 : vector<1x16xf32> to vector<8x16xf32>
    %166 = arith.subf %144, %165 : vector<8x16xf32>
    %167 = arith.mulf %166, %166 : vector<8x16xf32>
    %cst_38 = arith.constant dense<0.000000e+00> : vector<16xf32>
    %168 = vector.multi_reduction <add>, %167, %cst_38 [0] : vector<8x16xf32> to vector<16xf32>
    %169 = vector.shape_cast %168 : vector<16xf32> to vector<1x16xf32>
    %cst_39 = arith.constant 8.000000e+00 : f32
    %170 = vector.broadcast %cst_39 : f32 to vector<1x16xf32>
    %171 = arith.divf %169, %170 : vector<1x16xf32>
    %172 = vector.broadcast %164 : vector<1x16xf32> to vector<8x16xf32>
    %173 = arith.subf %144, %172 : vector<8x16xf32>
    %174 = vector.broadcast %159 : vector<1x16xf32> to vector<8x16xf32>
    %175 = arith.mulf %174, %173 : vector<8x16xf32>
    %cst_40 = arith.constant 9.99999974E-6 : f32
    %176 = vector.broadcast %cst_40 : f32 to vector<1x16xf32>
    %177 = arith.addf %171, %176 : vector<1x16xf32>
    %178 = math.rsqrt %177 : vector<1x16xf32>
    %179 = vector.broadcast %178 : vector<1x16xf32> to vector<8x16xf32>
    %180 = arith.mulf %175, %179 : vector<8x16xf32>
    %181 = vector.broadcast %160 : vector<1x16xf32> to vector<8x16xf32>
    %182 = arith.addf %180, %181 : vector<8x16xf32>
    %cst_41 = arith.constant 0.000000e+00 : f32
    %183 = vector.broadcast %cst_41 : f32 to vector<8x16xf32>
    %184 = arith.cmpf ogt, %182, %183 : vector<8x16xf32>
    %185 = arith.extui %184 : vector<8x16xi1> to vector<8x16xi32>
    %186 = arith.sitofp %185 : vector<8x16xi32> to vector<8x16xf32>
    %187 = arith.mulf %182, %186 : vector<8x16xf32>
    %188 = vector.shape_cast %186 : vector<8x16xf32> to vector<8x16x1xf32>
    %189 = vector.broadcast %188 : vector<8x16x1xf32> to vector<8x16x16xf32>
    %190 = arith.mulf %158, %189 : vector<8x16x16xf32>
    %191 = vector.shape_cast %186 : vector<8x16xf32> to vector<8x1x16xf32>
    %192 = vector.broadcast %191 : vector<8x1x16xf32> to vector<8x16x16xf32>
    %193 = arith.mulf %190, %192 : vector<8x16x16xf32>
    %c70 = arith.constant 70 : index
    %c0_42 = arith.constant 0 : index
    %194 = vector.load %arg1[%c70, %c0_42] : memref<120x128xf32, #tpu.memory_space<vmem>>, vector<16x8xf32>
    %c86 = arith.constant 86 : index
    %c0_43 = arith.constant 0 : index
    %195 = vector.load %arg1[%c86, %c0_43] : memref<120x128xf32, #tpu.memory_space<vmem>>, vector<8x16xf32>
    %c94 = arith.constant 94 : index
    %c0_44 = arith.constant 0 : index
    %196 = vector.load %arg1[%c94, %c0_44] : memref<120x128xf32, #tpu.memory_space<vmem>>, vector<1x8xf32>
    %c95 = arith.constant 95 : index
    %c0_45 = arith.constant 0 : index
    %197 = vector.load %arg1[%c95, %c0_45] : memref<120x128xf32, #tpu.memory_space<vmem>>, vector<1x8xf32>
    %c96 = arith.constant 96 : index
    %c0_46 = arith.constant 0 : index
    %198 = vector.load %arg1[%c96, %c0_46] : memref<120x128xf32, #tpu.memory_space<vmem>>, vector<1x8xf32>
    %199 = vector.shape_cast %4 : vector<16x16xf32> to vector<1x16x16xf32>
    %200 = vector.broadcast %199 : vector<1x16x16xf32> to vector<8x16x16xf32>
    %201 = arith.mulf %193, %200 : vector<8x16x16xf32>
    %cst_47 = arith.constant dense<0.000000e+00> : vector<8x16xf32>
    %202 = vector.multi_reduction <add>, %201, %cst_47 [2] : vector<8x16x16xf32> to vector<8x16xf32>
    %cst_48 = arith.constant dense<0.000000e+00> : vector<8xf32>
    %203 = vector.multi_reduction <add>, %202, %cst_48 [1] : vector<8x16xf32> to vector<8xf32>
    %204 = vector.shape_cast %203 : vector<8xf32> to vector<8x1xf32>
    %205 = arith.mulf %187, %187 : vector<8x16xf32>
    %cst_49 = arith.constant dense<0.000000e+00> : vector<8xf32>
    %206 = vector.multi_reduction <add>, %205, %cst_49 [1] : vector<8x16xf32> to vector<8xf32>
    %207 = vector.shape_cast %206 : vector<8xf32> to vector<8x1xf32>
    %cst_50 = arith.constant 0.000000e+00 : f32
    %208 = vector.broadcast %cst_50 : f32 to vector<1x8xf32>
    %209 = arith.maximumf %197, %208 : vector<1x8xf32>
    %210 = vector.broadcast %cst_50 : f32 to vector<1x8xf32>
    %211 = arith.subf %197, %210 : vector<1x8xf32>
    %212 = arith.cmpf one, %211, %211 : vector<1x8xf32>
    %213 = vector.broadcast %cst_50 : f32 to vector<1x8xf32>
    %214 = arith.addf %197, %213 : vector<1x8xf32>
    %215 = math.absf %211 : vector<1x8xf32>
    %cst_51 = arith.constant 0.000000e+00 : f32
    %216 = vector.broadcast %cst_51 : f32 to vector<1x8xf32>
    %217 = arith.subf %216, %215 : vector<1x8xf32>
    %218 = math.exp %217 : vector<1x8xf32>
    %219 = math.log1p %218 : vector<1x8xf32>
    %220 = arith.addf %209, %219 : vector<1x8xf32>
    %221 = arith.select %212, %214, %220 : vector<1x8xi1>, vector<1x8xf32>
    %222 = arith.addf %204, %207 : vector<8x1xf32>
    %223 = vector.broadcast %221 : vector<1x8xf32> to vector<8x8xf32>
    %224 = vector.broadcast %222 : vector<8x1xf32> to vector<8x8xf32>
    %225 = arith.mulf %223, %224 : vector<8x8xf32>
    %cst_52 = arith.constant 0.000000e+00 : f32
    %226 = vector.broadcast %cst_52 : f32 to vector<1x8xf32>
    %227 = arith.maximumf %198, %226 : vector<1x8xf32>
    %228 = vector.broadcast %cst_52 : f32 to vector<1x8xf32>
    %229 = arith.subf %198, %228 : vector<1x8xf32>
    %230 = arith.cmpf one, %229, %229 : vector<1x8xf32>
    %231 = vector.broadcast %cst_52 : f32 to vector<1x8xf32>
    %232 = arith.addf %198, %231 : vector<1x8xf32>
    %233 = math.absf %229 : vector<1x8xf32>
    %cst_53 = arith.constant 0.000000e+00 : f32
    %234 = vector.broadcast %cst_53 : f32 to vector<1x8xf32>
    %235 = arith.subf %234, %233 : vector<1x8xf32>
    %236 = math.exp %235 : vector<1x8xf32>
    %237 = math.log1p %236 : vector<1x8xf32>
    %238 = arith.addf %227, %237 : vector<1x8xf32>
    %239 = arith.select %230, %232, %238 : vector<1x8xi1>, vector<1x8xf32>
    %240 = vector.broadcast %239 : vector<1x8xf32> to vector<8x8xf32>
    %241 = arith.addf %225, %240 : vector<8x8xf32>
    %cst_54 = arith.constant dense<0.000000e+00> : vector<8x8xf32>
    %242 = tpu.matmul %187, %194, %cst_54 {dimension_numbers = #tpu.dot_dimension_numbers<[1], [0], [0], [1], [0, 0, 1, 1], [], []>} : vector<8x16xf32>, vector<16x8xf32>, vector<8x8xf32> -> vector<8x8xf32>
    %243 = vector.broadcast %196 : vector<1x8xf32> to vector<8x8xf32>
    %244 = arith.addf %242, %243 : vector<8x8xf32>
    %245 = vector.shape_cast %194 : vector<16x8xf32> to vector<1x16x8xf32>
    %246 = vector.shape_cast %245 : vector<1x16x8xf32> to vector<1x16x8xf32>
    %247 = vector.broadcast %246 : vector<1x16x8xf32> to vector<8x16x8xf32>
    %248 = vector.shape_cast %195 : vector<8x16xf32> to vector<1x8x16xf32>
    %249 = vector.shape_cast %248 : vector<1x8x16xf32> to vector<1x8x16xf32>
    %250 = vector.broadcast %249 : vector<1x8x16xf32> to vector<8x8x16xf32>
    "tpu.trace_start"() <{level = 10 : i32, message = "bij,bjo->bio"}> : () -> ()
    %cst_55 = arith.constant dense<0.000000e+00> : vector<8x16x8xf32>
    %251 = tpu.matmul %193, %247, %cst_55 {dimension_numbers = #tpu.dot_dimension_numbers<[2], [1], [1], [2], [0, 0, 0, 1, 1, 2], [0], [0]>} : vector<8x16x16xf32>, vector<8x16x8xf32>, vector<8x16x8xf32> -> vector<8x16x8xf32>
    "tpu.trace_stop"() : () -> ()
    "tpu.trace_start"() <{level = 10 : i32, message = "bpi,biq->bpq"}> : () -> ()
    %cst_56 = arith.constant dense<0.000000e+00> : vector<8x8x8xf32>
    %252 = tpu.matmul %250, %251, %cst_56 {dimension_numbers = #tpu.dot_dimension_numbers<[2], [1], [1], [2], [0, 0, 0, 1, 1, 2], [0], [0]>} : vector<8x8x16xf32>, vector<8x16x8xf32>, vector<8x8x8xf32> -> vector<8x8x8xf32>
    "tpu.trace_stop"() : () -> ()
    %253 = vector.shape_cast %241 : vector<8x8xf32> to vector<8x8x1xf32>
    %254 = vector.shape_cast %9 : vector<8x8xf32> to vector<1x8x8xf32>
    %255 = vector.broadcast %253 : vector<8x8x1xf32> to vector<8x8x8xf32>
    %256 = vector.broadcast %254 : vector<1x8x8xf32> to vector<8x8x8xf32>
    %257 = arith.mulf %255, %256 : vector<8x8x8xf32>
    %258 = arith.addf %252, %257 : vector<8x8x8xf32>
    %c97 = arith.constant 97 : index
    %c0_57 = arith.constant 0 : index
    %259 = vector.load %arg1[%c97, %c0_57] : memref<120x128xf32, #tpu.memory_space<vmem>>, vector<1x8xf32>
    %c98 = arith.constant 98 : index
    %c0_58 = arith.constant 0 : index
    %260 = vector.load %arg1[%c98, %c0_58] : memref<120x128xf32, #tpu.memory_space<vmem>>, vector<1x8xf32>
    %cst_59 = arith.constant dense<0.000000e+00> : vector<8xf32>
    %261 = vector.multi_reduction <add>, %244, %cst_59 [0] : vector<8x8xf32> to vector<8xf32>
    %262 = vector.shape_cast %261 : vector<8xf32> to vector<1x8xf32>
    %cst_60 = arith.constant 8.000000e+00 : f32
    %263 = vector.broadcast %cst_60 : f32 to vector<1x8xf32>
    %264 = arith.divf %262, %263 : vector<1x8xf32>
    %265 = vector.broadcast %264 : vector<1x8xf32> to vector<8x8xf32>
    %266 = arith.subf %244, %265 : vector<8x8xf32>
    %267 = arith.mulf %266, %266 : vector<8x8xf32>
    %cst_61 = arith.constant dense<0.000000e+00> : vector<8xf32>
    %268 = vector.multi_reduction <add>, %267, %cst_61 [0] : vector<8x8xf32> to vector<8xf32>
    %269 = vector.shape_cast %268 : vector<8xf32> to vector<1x8xf32>
    %cst_62 = arith.constant 8.000000e+00 : f32
    %270 = vector.broadcast %cst_62 : f32 to vector<1x8xf32>
    %271 = arith.divf %269, %270 : vector<1x8xf32>
    %272 = vector.broadcast %264 : vector<1x8xf32> to vector<8x8xf32>
    %273 = arith.subf %244, %272 : vector<8x8xf32>
    %274 = vector.broadcast %259 : vector<1x8xf32> to vector<8x8xf32>
    %275 = arith.mulf %274, %273 : vector<8x8xf32>
    %cst_63 = arith.constant 9.99999974E-6 : f32
    %276 = vector.broadcast %cst_63 : f32 to vector<1x8xf32>
    %277 = arith.addf %271, %276 : vector<1x8xf32>
    %278 = math.rsqrt %277 : vector<1x8xf32>
    %279 = vector.broadcast %278 : vector<1x8xf32> to vector<8x8xf32>
    %280 = arith.mulf %275, %279 : vector<8x8xf32>
    %281 = vector.broadcast %260 : vector<1x8xf32> to vector<8x8xf32>
    %282 = arith.addf %280, %281 : vector<8x8xf32>
    %cst_64 = arith.constant 0.000000e+00 : f32
    %283 = vector.broadcast %cst_64 : f32 to vector<8x8xf32>
    %284 = arith.cmpf ogt, %282, %283 : vector<8x8xf32>
    %285 = arith.extui %284 : vector<8x8xi1> to vector<8x8xi32>
    %286 = arith.sitofp %285 : vector<8x8xi32> to vector<8x8xf32>
    %287 = arith.mulf %282, %286 : vector<8x8xf32>
    %288 = vector.shape_cast %286 : vector<8x8xf32> to vector<8x8x1xf32>
    %289 = vector.broadcast %288 : vector<8x8x1xf32> to vector<8x8x8xf32>
    %290 = arith.mulf %258, %289 : vector<8x8x8xf32>
    %291 = vector.shape_cast %286 : vector<8x8xf32> to vector<8x1x8xf32>
    %292 = vector.broadcast %291 : vector<8x1x8xf32> to vector<8x8x8xf32>
    %293 = arith.mulf %290, %292 : vector<8x8x8xf32>
    %c99 = arith.constant 99 : index
    %c0_65 = arith.constant 0 : index
    %294 = vector.load %arg1[%c99, %c0_65] : memref<120x128xf32, #tpu.memory_space<vmem>>, vector<8x1xf32>
    %c107 = arith.constant 107 : index
    %c0_66 = arith.constant 0 : index
    %295 = vector.load %arg1[%c107, %c0_66] : memref<120x128xf32, #tpu.memory_space<vmem>>, vector<1x8xf32>
    %c108 = arith.constant 108 : index
    %c0_67 = arith.constant 0 : index
    %296 = vector.load %arg1[%c108, %c0_67] : memref<120x128xf32, #tpu.memory_space<vmem>>, vector<1x1xf32>
    %c109 = arith.constant 109 : index
    %c0_68 = arith.constant 0 : index
    %297 = vector.load %arg1[%c109, %c0_68] : memref<120x128xf32, #tpu.memory_space<vmem>>, vector<1x1xf32>
    %c110 = arith.constant 110 : index
    %c0_69 = arith.constant 0 : index
    %298 = vector.load %arg1[%c110, %c0_69] : memref<120x128xf32, #tpu.memory_space<vmem>>, vector<1x1xf32>
    %299 = vector.shape_cast %9 : vector<8x8xf32> to vector<1x8x8xf32>
    %300 = vector.broadcast %299 : vector<1x8x8xf32> to vector<8x8x8xf32>
    %301 = arith.mulf %293, %300 : vector<8x8x8xf32>
    %cst_70 = arith.constant dense<0.000000e+00> : vector<8x8xf32>
    %302 = vector.multi_reduction <add>, %301, %cst_70 [2] : vector<8x8x8xf32> to vector<8x8xf32>
    %cst_71 = arith.constant dense<0.000000e+00> : vector<8xf32>
    %303 = vector.multi_reduction <add>, %302, %cst_71 [1] : vector<8x8xf32> to vector<8xf32>
    %304 = vector.shape_cast %303 : vector<8xf32> to vector<8x1xf32>
    %305 = arith.mulf %287, %287 : vector<8x8xf32>
    %cst_72 = arith.constant dense<0.000000e+00> : vector<8xf32>
    %306 = vector.multi_reduction <add>, %305, %cst_72 [1] : vector<8x8xf32> to vector<8xf32>
    %307 = vector.shape_cast %306 : vector<8xf32> to vector<8x1xf32>
    %cst_73 = arith.constant 0.000000e+00 : f32
    %308 = vector.broadcast %cst_73 : f32 to vector<1x1xf32>
    %309 = arith.maximumf %297, %308 : vector<1x1xf32>
    %310 = vector.broadcast %cst_73 : f32 to vector<1x1xf32>
    %311 = arith.subf %297, %310 : vector<1x1xf32>
    %312 = arith.cmpf one, %311, %311 : vector<1x1xf32>
    %313 = vector.broadcast %cst_73 : f32 to vector<1x1xf32>
    %314 = arith.addf %297, %313 : vector<1x1xf32>
    %315 = math.absf %311 : vector<1x1xf32>
    %cst_74 = arith.constant 0.000000e+00 : f32
    %316 = vector.broadcast %cst_74 : f32 to vector<1x1xf32>
    %317 = arith.subf %316, %315 : vector<1x1xf32>
    %318 = math.exp %317 : vector<1x1xf32>
    %319 = math.log1p %318 : vector<1x1xf32>
    %320 = arith.addf %309, %319 : vector<1x1xf32>
    %321 = arith.select %312, %314, %320 : vector<1x1xi1>, vector<1x1xf32>
    %322 = arith.addf %304, %307 : vector<8x1xf32>
    %323 = vector.broadcast %321 : vector<1x1xf32> to vector<8x1xf32>
    %324 = arith.mulf %323, %322 : vector<8x1xf32>
    %cst_75 = arith.constant 0.000000e+00 : f32
    %325 = vector.broadcast %cst_75 : f32 to vector<1x1xf32>
    %326 = arith.maximumf %298, %325 : vector<1x1xf32>
    %327 = vector.broadcast %cst_75 : f32 to vector<1x1xf32>
    %328 = arith.subf %298, %327 : vector<1x1xf32>
    %329 = arith.cmpf one, %328, %328 : vector<1x1xf32>
    %330 = vector.broadcast %cst_75 : f32 to vector<1x1xf32>
    %331 = arith.addf %298, %330 : vector<1x1xf32>
    %332 = math.absf %328 : vector<1x1xf32>
    %cst_76 = arith.constant 0.000000e+00 : f32
    %333 = vector.broadcast %cst_76 : f32 to vector<1x1xf32>
    %334 = arith.subf %333, %332 : vector<1x1xf32>
    %335 = math.exp %334 : vector<1x1xf32>
    %336 = math.log1p %335 : vector<1x1xf32>
    %337 = arith.addf %326, %336 : vector<1x1xf32>
    %338 = arith.select %329, %331, %337 : vector<1x1xi1>, vector<1x1xf32>
    %339 = vector.broadcast %338 : vector<1x1xf32> to vector<8x1xf32>
    %340 = arith.addf %324, %339 : vector<8x1xf32>
    %341 = vector.broadcast %295 : vector<1x8xf32> to vector<8x8xf32>
    %342 = arith.mulf %287, %341 : vector<8x8xf32>
    %cst_77 = arith.constant dense<0.000000e+00> : vector<8xf32>
    %343 = vector.multi_reduction <add>, %342, %cst_77 [1] : vector<8x8xf32> to vector<8xf32>
    %344 = vector.shape_cast %343 : vector<8xf32> to vector<8x1xf32>
    %345 = vector.broadcast %296 : vector<1x1xf32> to vector<8x1xf32>
    %346 = arith.addf %344, %345 : vector<8x1xf32>
    %347 = vector.broadcast %294 : vector<8x1xf32> to vector<8x8xf32>
    %348 = vector.broadcast %295 : vector<1x8xf32> to vector<8x8xf32>
    %349 = arith.mulf %347, %348 : vector<8x8xf32>
    %350 = vector.shape_cast %349 : vector<8x8xf32> to vector<1x8x8xf32>
    %351 = vector.broadcast %350 : vector<1x8x8xf32> to vector<8x8x8xf32>
    %352 = arith.mulf %293, %351 : vector<8x8x8xf32>
    %cst_78 = arith.constant dense<0.000000e+00> : vector<8x8xf32>
    %353 = vector.multi_reduction <add>, %352, %cst_78 [2] : vector<8x8x8xf32> to vector<8x8xf32>
    %cst_79 = arith.constant dense<0.000000e+00> : vector<8xf32>
    %354 = vector.multi_reduction <add>, %353, %cst_79 [1] : vector<8x8xf32> to vector<8xf32>
    %355 = vector.shape_cast %354 : vector<8xf32> to vector<8x1xf32>
    %356 = vector.shape_cast %355 : vector<8x1xf32> to vector<8x1x1xf32>
    %357 = vector.shape_cast %340 : vector<8x1xf32> to vector<8x1x1xf32>
    %358 = arith.addf %356, %357 : vector<8x1x1xf32>
    %c111 = arith.constant 111 : index
    %c0_80 = arith.constant 0 : index
    %359 = vector.load %arg1[%c111, %c0_80] : memref<120x128xf32, #tpu.memory_space<vmem>>, vector<1x1xf32>
    %c112 = arith.constant 112 : index
    %c0_81 = arith.constant 0 : index
    %360 = vector.load %arg1[%c112, %c0_81] : memref<120x128xf32, #tpu.memory_space<vmem>>, vector<1x1xf32>
    %cst_82 = arith.constant dense<0.000000e+00> : vector<1xf32>
    %361 = vector.multi_reduction <add>, %346, %cst_82 [0] : vector<8x1xf32> to vector<1xf32>
    %362 = vector.shape_cast %361 : vector<1xf32> to vector<1x1xf32>
    %cst_83 = arith.constant 8.000000e+00 : f32
    %363 = vector.broadcast %cst_83 : f32 to vector<1x1xf32>
    %364 = arith.divf %362, %363 : vector<1x1xf32>
    %365 = vector.broadcast %364 : vector<1x1xf32> to vector<8x1xf32>
    %366 = arith.subf %346, %365 : vector<8x1xf32>
    %367 = arith.mulf %366, %366 : vector<8x1xf32>
    %cst_84 = arith.constant dense<0.000000e+00> : vector<1xf32>
    %368 = vector.multi_reduction <add>, %367, %cst_84 [0] : vector<8x1xf32> to vector<1xf32>
    %369 = vector.shape_cast %368 : vector<1xf32> to vector<1x1xf32>
    %cst_85 = arith.constant 8.000000e+00 : f32
    %370 = vector.broadcast %cst_85 : f32 to vector<1x1xf32>
    %371 = arith.divf %369, %370 : vector<1x1xf32>
    %372 = vector.broadcast %364 : vector<1x1xf32> to vector<8x1xf32>
    %373 = arith.subf %346, %372 : vector<8x1xf32>
    %374 = vector.broadcast %359 : vector<1x1xf32> to vector<8x1xf32>
    %375 = arith.mulf %374, %373 : vector<8x1xf32>
    %cst_86 = arith.constant 9.99999974E-6 : f32
    %376 = vector.broadcast %cst_86 : f32 to vector<1x1xf32>
    %377 = arith.addf %371, %376 : vector<1x1xf32>
    %378 = math.rsqrt %377 : vector<1x1xf32>
    %379 = vector.broadcast %378 : vector<1x1xf32> to vector<8x1xf32>
    %380 = arith.mulf %375, %379 : vector<8x1xf32>
    %381 = vector.broadcast %360 : vector<1x1xf32> to vector<8x1xf32>
    %382 = arith.addf %380, %381 : vector<8x1xf32>
    %383 = tpu.iota {dimensions = array<i32: 1>} : vector<8x128xi32>
    %384 = vector.shape_cast %358 : vector<8x1x1xf32> to vector<8x1xf32>
    %c0_i32 = arith.constant 0 : i32
    %385 = vector.broadcast %c0_i32 : i32 to vector<8x128xi32>
    %386 = arith.cmpi eq, %383, %385 : vector<8x128xi32>
    %cst_87 = arith.constant 0.000000e+00 : f32
    %387 = vector.shape_cast %382 : vector<8x1xf32> to vector<8x1xf32>
    %388 = vector.broadcast %387 : vector<8x1xf32> to vector<8x128xf32>
    %389 = vector.broadcast %cst_87 : f32 to vector<8x128xf32>
    %390 = arith.select %386, %388, %389 : vector<8x128xi1>, vector<8x128xf32>
    %c1_i32 = arith.constant 1 : i32
    %391 = vector.broadcast %c1_i32 : i32 to vector<8x128xi32>
    %392 = arith.cmpi eq, %383, %391 : vector<8x128xi32>
    %cst_88 = arith.constant 0.000000e+00 : f32
    %393 = vector.shape_cast %384 : vector<8x1xf32> to vector<8x1xf32>
    %394 = vector.broadcast %393 : vector<8x1xf32> to vector<8x128xf32>
    %395 = vector.broadcast %cst_88 : f32 to vector<8x128xf32>
    %396 = arith.select %392, %394, %395 : vector<8x128xi1>, vector<8x128xf32>
    %397 = arith.addf %390, %396 : vector<8x128xf32>
    %c0_89 = arith.constant 0 : index
    %c0_90 = arith.constant 0 : index
    %398 = vector.load %arg2[%c0_89, %c0_90] : memref<8x128xf32, #tpu.memory_space<vmem>>, vector<8x128xf32>
    tpu.vector_store %arg2[%c0_89, %c0_90], %397 {strides = array<i32>} : memref<8x128xf32, #tpu.memory_space<vmem>>, vector<8x128xf32>,
    return
  }
}

</mosaic_0001>

<llo_original>
// kernel: tpu_custom_call.1
$region0: #{tpu_custom_call.1}
  #allocation0 [shape = 'u32[]', space=smem, size = 0x4, offset = 0x4, fixed_abs, tag = 'smem constant byte address 0x4 - core index']
  #allocation1 [shape = 'u32[144,128]{1,0:T(1,128)}', space=vmem, size = 0x12000, scoped, tag = 'internal scratch']
  %s0 = inlined_call_operand.hbm [shape: f32[8,128], index: 0, kind: input, shape index: {}]
  %s1 = inlined_call_operand.hbm [shape: f32[120,128], index: 1, kind: input, shape index: {}]
  %s2 = inlined_call_operand.hbm [shape: f32[8,128], index: 2, kind: output, shape index: {}]
  %s3 = sld [smem:[#allocation0]]
  $region26: #{tpu_custom_call.1} parent=0
    _
  %s5 = ssub.s32 1, %s3
  %s6 = scalar_select 0, %s5, %s3
  $region1: #{tpu_custom_call.1} parent=0
    #allocation2 [shape = 'u8[4096]{0}', space=vmem, size = 0x1000, scoped, tag = 'input window, operand 0, single buffered']
    #allocation3 [shape = 's32[1]{0}', space=sflag, size = 0x4, scoped, tag = 'scoped memory for tpu_custom_call.1']
    #allocation4 [shape = 's32[1]{0}', space=sflag, size = 0x4, scoped, tag = 'scoped memory for tpu_custom_call.1']
    #allocation5 [shape = 'u8[61440]{0}', space=vmem, size = 0xf000, scoped, tag = 'input window, operand 1, single buffered']
    #allocation6 [shape = 's32[1]{0}', space=sflag, size = 0x4, scoped, tag = 'scoped memory for tpu_custom_call.1']
    #allocation7 [shape = 'u8[4096]{0}', space=vmem, size = 0x1000, scoped, tag = 'output window, operand 0, single buffered']
    %7 = vsyncpa [#allocation3], 0
    %8 = vsyncpa [#allocation6], 0
    %9 = vsyncpa [#allocation4], 0
    // Predicated region
    $region2: #{tpu_custom_call.1} parent=1 // pred_check
      _
    $region3: #{tpu_custom_call.1} parent=1 // pred_check_branch
      %11 = sbr.rel (0) target = $region5
    $region4: #{tpu_custom_call.1} parent=1 // pred_region
      %s13 = ssub.s32 128, 128
      %14 = vsyncadd [#allocation3], %s13
      %s16 = sshll.u32 [#allocation2], 4
      %s17 = int_to_ptr.vmem [resolvable:$true] %s16
      %19 = dma.hbm_to_vmem [thread:$0]  %s0, 128, %s17, [#allocation3]
    $region5: #{tpu_custom_call.1} parent=1 // pred_fallthru
      _
    // Predicated region
    $region6: #{tpu_custom_call.1} parent=1 // pred_check
      _
    $region7: #{tpu_custom_call.1} parent=1 // pred_check_branch
      %21 = sbr.rel (0) target = $region9
    $region8: #{tpu_custom_call.1} parent=1 // pred_region
      %s23 = ssub.s32 1920, 1920
      %24 = vsyncadd [#allocation6], %s23
      %s25 = sshll.u32 [#allocation5], 4
      %s26 = int_to_ptr.vmem [resolvable:$true] %s25
      %31 = dma.hbm_to_vmem [thread:$0]  %s1, 1920, %s26, [#allocation6], 128, 128, 8
    $region9: #{tpu_custom_call.1} parent=1 // pred_fallthru
      _
    // Predicated region
    $region10: #{tpu_custom_call.1} parent=1 // pred_check
      _
    $region11: #{tpu_custom_call.1} parent=1 // pred_check_branch
      %33 = sbr.rel (0) target = $region13
    $region12: #{tpu_custom_call.1} parent=1 // pred_region
      %34 = dma.done [#allocation3], 128
    $region13: #{tpu_custom_call.1} parent=1 // pred_fallthru
      _
    // Predicated region
    $region14: #{tpu_custom_call.1} parent=1 // pred_check
      _
    $region15: #{tpu_custom_call.1} parent=1 // pred_check_branch
      %36 = sbr.rel (0) target = $region17
    $region16: #{tpu_custom_call.1} parent=1 // pred_region
      %37 = dma.done [#allocation6], 1920
    $region17: #{tpu_custom_call.1} parent=1 // pred_fallthru
      _
    %v38 = vlaneseq
    %v39 = vshrl.u32 %v38, 7
    %v40 = vadd.s32 %v39, 8
    %v41 = vlaneseq
    %v42 = vand.u32 %v41, 127
    %vm43 = vcmp.eq.s32.totalorder %v39, %v42
    %vm44 = vcmp.eq.s32.totalorder %v40, %v42
    %v45 = vsel %vm43, 1, 0
    %v46 = vsel %vm44, 1, 0
    %v47 = vcvt.s32.f32 %v45
    %v48 = vcvt.s32.f32 %v46
    %v49 = vld [vmem:[#allocation2] sm:$0xff]
    %v50 = vld [vmem:[#allocation5] sm:$0xff]
    %v51 = vld [vmem:[#allocation5 + $0x8] sm:$0xf]
    %v52 = vld [vmem:[#allocation5 + $0x1c] sm:$0x1]
    %v53 = vld [vmem:[#allocation5 + $0x1d] sm:$0x1]
    %v54 = vld [vmem:[#allocation5 + $0x1e] sm:$0x1]
    %v55 = vlaneseq
    %v56 = vshrl.u32 %v55, 7
    %v57 = vsub.s32 0, %v56
    %v58 = vrot.slane %v52, %v57
    %vm59 = vcmask 97280
    %v61 = vsel %vm59, %v49, 0
    %vm63 = vcmask 1043456
    %v65 = vsel %vm63, %v51, 0
    %67 = vmatprep.subr.mxu0 0.0
    %68 = vmatpush1.msra.mxu0 %v50
    %69 = vmatprep.subr.mxu0 0.0
    %70 = vmatpush1.msra.mxu0 %v65
    %71 = vmatprep.subr.mxu0 0.0
    %72 = vmatpush1.msra.mxu0 0.0
    %73 = vmatprep.subr.mxu0 0.0
    %74 = vmatpush1.msra.mxu0 0.0
    %75 = vmatprep.subr.mxu0 0.0
    %76 = vmatpush1.msra.mxu0 0.0
    %77 = vmatprep.subr.mxu0 0.0
    %78 = vmatpush1.msra.mxu0 0.0
    %79 = vmatprep.subr.mxu0 0.0
    %80 = vmatpush1.msra.mxu0 0.0
    %81 = vmatprep.subr.mxu0 0.0
    %82 = vmatpush1.msra.mxu0 0.0
    %83 = vmatprep.subr.mxu0 0.0
    %84 = vmatpush1.msra.mxu0 0.0
    %85 = vmatprep.subr.mxu0 0.0
    %86 = vmatpush1.msra.mxu0 0.0
    %87 = vmatprep.subr.mxu0 0.0
    %88 = vmatpush1.msra.mxu0 0.0
    %89 = vmatprep.subr.mxu0 0.0
    %90 = vmatpush1.msra.mxu0 0.0
    %91 = vmatprep.subr.mxu0 0.0
    %92 = vmatpush1.msra.mxu0 0.0
    %93 = vmatprep.subr.mxu0 0.0
    %94 = vmatpush1.msra.mxu0 0.0
    %95 = vmatprep.subr.mxu0 0.0
    %96 = vmatpush1.msra.mxu0 0.0
    %97 = vmatprep.subr.mxu0 0.0
    %98 = vmatpush1.msra.mxu0 0.0
    %99 = vmatprep.subr.mxu0 0.0
    %100 = vmatpush1.msra.mxu0 0.0
    %101 = vmatprep.subr.mxu0 0.0
    %102 = vmatpush1.msra.mxu0 0.0
    %103 = vmatprep.subr.mxu0 0.0
    %104 = vmatpush1.msra.mxu0 0.0
    %105 = vmatprep.subr.mxu0 0.0
    %106 = vmatpush1.msra.mxu0 0.0
    %107 = vmatprep.subr.mxu0 0.0
    %108 = vmatpush1.msra.mxu0 0.0
    %109 = vmatprep.subr.mxu0 0.0
    %110 = vmatpush1.msra.mxu0 0.0
    %111 = vmatprep.subr.mxu0 0.0
    %112 = vmatpush1.msra.mxu0 0.0
    %113 = vmatprep.subr.mxu0 0.0
    %114 = vmatpush1.msra.mxu0 0.0
    %115 = vmatprep.subr.mxu0 0.0
    %116 = vmatpush1.msra.mxu0 0.0
    %117 = vmatprep.subr.mxu0 0.0
    %118 = vmatpush1.msra.mxu0 0.0
    %119 = vmatprep.subr.mxu0 0.0
    %120 = vmatpush1.msra.mxu0 0.0
    %121 = vmatprep.subr.mxu0 0.0
    %122 = vmatpush1.msra.mxu0 0.0
    %123 = vmatprep.subr.mxu0 0.0
    %124 = vmatpush1.msra.mxu0 0.0
    %125 = vmatprep.subr.mxu0 0.0
    %126 = vmatpush1.msra.mxu0 0.0
    %127 = vmatprep.subr.mxu0 0.0
    %128 = vmatpush1.msra.mxu0 0.0
    %129 = vmatprep.subr.mxu0 0.0
    %130 = vmatpush1.msra.mxu0 0.0
    %131 = vmatprep.mubr.f32.mxu0 0.0
    %132 = vmatmul.mubr.f32.gmra.mrb[0].mxu0 %v61
    %v133 = vpop.f32.mrb[0].mxu0
    %v134 = vadd.f32 %v58, %v133
    %v135 = vpop.f32.mrb[0].mxu0
    %136 = vdwg.mxu0
    %v137 = vmul.f32 %v49, %v49
    %v138 = vsel %vm59, %v137, 0.0
    %139 = vadd.xlane.f32.xlu0 %v138
    %v140 = vpop.xlane.xlu0 %139
    %v141 = vmax.f32 %v53, 0.0
    %vm142 = vcmp.ne.f32.partialorder %v53, %v53
    %v143 = vadd.f32 %v53, 0.0
    %v144 = vand.u32 2147483647, %v53
    %v145 = vsub.f32 0.0, %v144
    %v146 = vmul.f32 %v145, 1.442695
    %v147 = vpow.pop %v146
    %v148 = vadd.f32 %v147, 1.0
    %v149 = vlog2.pop %v148
    %v150 = vmul.f32 %v149, 0.6931472
    %v151 = vmul.f32 -0.5, %v147
    %v152 = vadd.f32 %v151, 1.0
    %v153 = vmul.f32 %v152, %v147
    %v154 = vand.u32 2147483647, %v147
    %vm155 = vcmp.lt.f32.partialorder %v154, 0.0004427343
    %v156 = vsel %vm155, %v153, %v150
    %v157 = vadd.f32 %v141, %v156
    %v158 = vsel %vm142, %v143, %v157
    %v159 = vlaneseq
    %v160 = vshrl.u32 %v159, 7
    %v161 = vsub.s32 0, %v160
    %v162 = vrot.slane %v158, %v161
    %v163 = vmul.f32 %v140, %v162
    %v164 = vmax.f32 %v54, 0.0
    %vm165 = vcmp.ne.f32.partialorder %v54, %v54
    %v166 = vadd.f32 %v54, 0.0
    %v167 = vand.u32 2147483647, %v54
    %v168 = vsub.f32 0.0, %v167
    %v169 = vmul.f32 %v168, 1.442695
    %v170 = vpow.pop %v169
    %v171 = vadd.f32 %v170, 1.0
    %v172 = vlog2.pop %v171
    %v173 = vmul.f32 %v172, 0.6931472
    %v174 = vmul.f32 -0.5, %v170
    %v175 = vadd.f32 %v174, 1.0
    %v176 = vmul.f32 %v175, %v170
    %v177 = vand.u32 2147483647, %v170
    %vm178 = vcmp.lt.f32.partialorder %v177, 0.0004427343
    %v179 = vsel %vm178, %v176, %v173
    %v180 = vadd.f32 %v164, %v179
    %v181 = vsel %vm165, %v166, %v180
    %v182 = vlaneseq
    %v183 = vshrl.u32 %v182, 7
    %v184 = vsub.s32 0, %v183
    %v185 = vrot.slane %v181, %v184
    %v186 = vadd.f32 %v163, %v185
    %v187 = vlaneseq
    %v188 = vshrl.u32 %v187, 7
    %v189 = vsub.s32 0, %v188
    %v190 = vrot.slane %v186, %v189
    %192 = vbcast.lane.b32.xlu0 %v190, 256
    %v193 = vpop.permute.xlu0 %192
    %s195 = sor.u32 256, 8
    %196 = vbcast.lane.b32.xlu0 %v190, %s195
    %v197 = vpop.permute.xlu0 %196
    %v198 = vlaneseq
    %v199 = vshrl.u32 %v198, 7
    %v200 = vsub.s32 1, %v199
    %v201 = vrot.slane %v186, %v200
    %203 = vbcast.lane.b32.xlu0 %v201, 256
    %v204 = vpop.permute.xlu0 %203
    %s206 = sor.u32 256, 8
    %207 = vbcast.lane.b32.xlu0 %v201, %s206
    %v208 = vpop.permute.xlu0 %207
    %v209 = vlaneseq
    %v210 = vshrl.u32 %v209, 7
    %v211 = vsub.s32 2, %v210
    %v212 = vrot.slane %v186, %v211
    %214 = vbcast.lane.b32.xlu0 %v212, 256
    %v215 = vpop.permute.xlu0 %214
    %s217 = sor.u32 256, 8
    %218 = vbcast.lane.b32.xlu0 %v212, %s217
    %v219 = vpop.permute.xlu0 %218
    %v220 = vlaneseq
    %v221 = vshrl.u32 %v220, 7
    %v222 = vsub.s32 3, %v221
    %v223 = vrot.slane %v186, %v222
    %225 = vbcast.lane.b32.xlu0 %v223, 256
    %v226 = vpop.permute.xlu0 %225
    %s228 = sor.u32 256, 8
    %229 = vbcast.lane.b32.xlu0 %v223, %s228
    %v230 = vpop.permute.xlu0 %229
    %v231 = vlaneseq
    %v232 = vshrl.u32 %v231, 7
    %v233 = vsub.s32 4, %v232
    %v234 = vrot.slane %v186, %v233
    %236 = vbcast.lane.b32.xlu0 %v234, 256
    %v237 = vpop.permute.xlu0 %236
    %s239 = sor.u32 256, 8
    %240 = vbcast.lane.b32.xlu0 %v234, %s239
    %v241 = vpop.permute.xlu0 %240
    %v242 = vlaneseq
    %v243 = vshrl.u32 %v242, 7
    %v244 = vsub.s32 5, %v243
    %v245 = vrot.slane %v186, %v244
    %247 = vbcast.lane.b32.xlu0 %v245, 256
    %v248 = vpop.permute.xlu0 %247
    %s250 = sor.u32 256, 8
    %251 = vbcast.lane.b32.xlu0 %v245, %s250
    %v252 = vpop.permute.xlu0 %251
    %v253 = vlaneseq
    %v254 = vshrl.u32 %v253, 7
    %v255 = vsub.s32 6, %v254
    %v256 = vrot.slane %v186, %v255
    %258 = vbcast.lane.b32.xlu0 %v256, 256
    %v259 = vpop.permute.xlu0 %258
    %s261 = sor.u32 256, 8
    %262 = vbcast.lane.b32.xlu0 %v256, %s261
    %v263 = vpop.permute.xlu0 %262
    %v264 = vlaneseq
    %v265 = vshrl.u32 %v264, 7
    %v266 = vsub.s32 7, %v265
    %v267 = vrot.slane %v186, %v266
    %269 = vbcast.lane.b32.xlu0 %v267, 256
    %v270 = vpop.permute.xlu0 %269
    %s272 = sor.u32 256, 8
    %273 = vbcast.lane.b32.xlu0 %v267, %s272
    %v274 = vpop.permute.xlu0 %273
    %v275 = vmul.f32 %v193, %v47
    %v276 = vmul.f32 %v197, %v48
    %v277 = vmul.f32 %v204, %v47
    %v278 = vmul.f32 %v208, %v48
    %v279 = vmul.f32 %v215, %v47
    %v280 = vmul.f32 %v219, %v48
    %v281 = vmul.f32 %v226, %v47
    %v282 = vmul.f32 %v230, %v48
    %v283 = vmul.f32 %v237, %v47
    %v284 = vmul.f32 %v241, %v48
    %v285 = vmul.f32 %v248, %v47
    %v286 = vmul.f32 %v252, %v48
    %v287 = vmul.f32 %v259, %v47
    %v288 = vmul.f32 %v263, %v48
    %v289 = vmul.f32 %v270, %v47
    %v290 = vmul.f32 %v274, %v48
    %v291 = vld [vmem:[#allocation5 + $0x1f] sm:$0x1]
    %v292 = vld [vmem:[#allocation5 + $0x20] sm:$0x1]
    %vm293 = vcmask 130048
    %v294 = vsel %vm293, %v134, 0.0
    %v295 = vrot.slane %v294, 4
    %v296 = vadd.f32 %v294, %v295
    %v297 = vrot.slane %v296, 2
    %v298 = vadd.f32 %v296, %v297
    %v299 = vrot.slane %v298, 1
    %v300 = vadd.f32 %v298, %v299
    %v301 = vrcp.pop 8.0
    %v302 = vmul.f32 %v300, %v301
    %v303 = vsub.f32 %v134, %v302
    %v304 = vmul.f32 %v303, %v303
    %v305 = vsel %vm293, %v304, 0.0
    %v306 = vrot.slane %v305, 4
    %v307 = vadd.f32 %v305, %v306
    %v308 = vrot.slane %v307, 2
    %v309 = vadd.f32 %v307, %v308
    %v310 = vrot.slane %v309, 1
    %v311 = vadd.f32 %v309, %v310
    %v312 = vmul.f32 %v311, %v301
    %v313 = vlaneseq
    %v314 = vshrl.u32 %v313, 7
    %v315 = vsub.s32 0, %v314
    %v316 = vrot.slane %v291, %v315
    %v317 = vmul.f32 %v316, %v303
    %v318 = vadd.f32 %v312, 1e-05
    %v319 = vrsqrt.pop %v318
    %v320 = vmul.f32 %v317, %v319
    %v321 = vlaneseq
    %v322 = vshrl.u32 %v321, 7
    %v323 = vsub.s32 0, %v322
    %v324 = vrot.slane %v292, %v323
    %v325 = vadd.f32 %v320, %v324
    %vm326 = vcmp.gt.f32.partialorder %v325, 0.0
    %v327 = vsel %vm326, 1, 0
    %v328 = vcvt.s32.f32 %v327
    %v329 = vmul.f32 %v325, %v328
    %v330 = vlaneseq
    %v331 = vshrl.u32 %v330, 7
    %v332 = vsub.s32 0, %v331
    %v333 = vrot.slane %v328, %v332
    %335 = vbcast.lane.b32.xlu0 %v333, 256
    %v336 = vpop.permute.xlu0 %335
    %s338 = sor.u32 256, 8
    %339 = vbcast.lane.b32.xlu0 %v333, %s338
    %v340 = vpop.permute.xlu0 %339
    %v341 = vlaneseq
    %v342 = vshrl.u32 %v341, 7
    %v343 = vsub.s32 1, %v342
    %v344 = vrot.slane %v328, %v343
    %346 = vbcast.lane.b32.xlu0 %v344, 256
    %v347 = vpop.permute.xlu0 %346
    %s349 = sor.u32 256, 8
    %350 = vbcast.lane.b32.xlu0 %v344, %s349
    %v351 = vpop.permute.xlu0 %350
    %v352 = vlaneseq
    %v353 = vshrl.u32 %v352, 7
    %v354 = vsub.s32 2, %v353
    %v355 = vrot.slane %v328, %v354
    %357 = vbcast.lane.b32.xlu0 %v355, 256
    %v358 = vpop.permute.xlu0 %357
    %s360 = sor.u32 256, 8
    %361 = vbcast.lane.b32.xlu0 %v355, %s360
    %v362 = vpop.permute.xlu0 %361
    %v363 = vlaneseq
    %v364 = vshrl.u32 %v363, 7
    %v365 = vsub.s32 3, %v364
    %v366 = vrot.slane %v328, %v365
    %368 = vbcast.lane.b32.xlu0 %v366, 256
    %v369 = vpop.permute.xlu0 %368
    %s371 = sor.u32 256, 8
    %372 = vbcast.lane.b32.xlu0 %v366, %s371
    %v373 = vpop.permute.xlu0 %372
    %v374 = vlaneseq
    %v375 = vshrl.u32 %v374, 7
    %v376 = vsub.s32 4, %v375
    %v377 = vrot.slane %v328, %v376
    %379 = vbcast.lane.b32.xlu0 %v377, 256
    %v380 = vpop.permute.xlu0 %379
    %s382 = sor.u32 256, 8
    %383 = vbcast.lane.b32.xlu0 %v377, %s382
    %v384 = vpop.permute.xlu0 %383
    %v385 = vlaneseq
    %v386 = vshrl.u32 %v385, 7
    %v387 = vsub.s32 5, %v386
    %v388 = vrot.slane %v328, %v387
    %390 = vbcast.lane.b32.xlu0 %v388, 256
    %v391 = vpop.permute.xlu0 %390
    %s393 = sor.u32 256, 8
    %394 = vbcast.lane.b32.xlu0 %v388, %s393
    %v395 = vpop.permute.xlu0 %394
    %v396 = vlaneseq
    %v397 = vshrl.u32 %v396, 7
    %v398 = vsub.s32 6, %v397
    %v399 = vrot.slane %v328, %v398
    %401 = vbcast.lane.b32.xlu0 %v399, 256
    %v402 = vpop.permute.xlu0 %401
    %s404 = sor.u32 256, 8
    %405 = vbcast.lane.b32.xlu0 %v399, %s404
    %v406 = vpop.permute.xlu0 %405
    %v407 = vlaneseq
    %v408 = vshrl.u32 %v407, 7
    %v409 = vsub.s32 7, %v408
    %v410 = vrot.slane %v328, %v409
    %412 = vbcast.lane.b32.xlu0 %v410, 256
    %v413 = vpop.permute.xlu0 %412
    %s415 = sor.u32 256, 8
    %416 = vbcast.lane.b32.xlu0 %v410, %s415
    %v417 = vpop.permute.xlu0 %416
    %v418 = vmul.f32 %v275, %v336
    %v419 = vmul.f32 %v276, %v340
    %v420 = vmul.f32 %v277, %v347
    %v421 = vmul.f32 %v278, %v351
    %v422 = vmul.f32 %v279, %v358
    %v423 = vmul.f32 %v280, %v362
    %v424 = vmul.f32 %v281, %v369
    %v425 = vmul.f32 %v282, %v373
    %v426 = vmul.f32 %v283, %v380
    %v427 = vmul.f32 %v284, %v384
    %v428 = vmul.f32 %v285, %v391
    %v429 = vmul.f32 %v286, %v395
    %v430 = vmul.f32 %v287, %v402
    %v431 = vmul.f32 %v288, %v406
    %v432 = vmul.f32 %v289, %v413
    %v433 = vmul.f32 %v290, %v417
    %v435 = vcombine.high %v328, %v328
    %v437 = vunpack.c.l.s4 1966171168
    %v438 = vunpack.c.0.s8 %v437
    %v439 = vlaneseq
    %v440 = vshrl.u32 %v439, 7
    %v441 = vsub.s32 %v438, %v440
    %v442 = vrot.slane %v328, %v441
    %v444 = vunpack.c.l.s4 1966171168
    %v445 = vunpack.c.0.s8 %v444
    %v446 = vlaneseq
    %v447 = vshrl.u32 %v446, 7
    %v448 = vsub.s32 %v445, %v447
    %v449 = vrot.slane %v435, %v448
    %v450 = vcombine.high %v442, %v442
    %v451 = vcombine.high %v449, %v449
    %v453 = vunpack.c.l.s4 1966171168
    %v454 = vunpack.c.0.s8 %v453
    %v455 = vlaneseq
    %v456 = vshrl.u32 %v455, 7
    %v457 = vsub.s32 %v454, %v456
    %v458 = vrot.slane %v442, %v457
    %v460 = vunpack.c.l.s4 1966171168
    %v461 = vunpack.c.0.s8 %v460
    %v462 = vlaneseq
    %v463 = vshrl.u32 %v462, 7
    %v464 = vsub.s32 %v461, %v463
    %v465 = vrot.slane %v449, %v464
    %v467 = vunpack.c.l.s4 1966171168
    %v468 = vunpack.c.0.s8 %v467
    %v469 = vlaneseq
    %v470 = vshrl.u32 %v469, 7
    %v471 = vsub.s32 %v468, %v470
    %v472 = vrot.slane %v450, %v471
    %v474 = vunpack.c.l.s4 1966171168
    %v475 = vunpack.c.0.s8 %v474
    %v476 = vlaneseq
    %v477 = vshrl.u32 %v476, 7
    %v478 = vsub.s32 %v475, %v477
    %v479 = vrot.slane %v451, %v478
    %v480 = vcombine.high %v458, %v458
    %v481 = vcombine.high %v465, %v465
    %v482 = vcombine.high %v472, %v472
    %v483 = vcombine.high %v479, %v479
    %v484 = vlaneseq
    %v485 = vshrl.u32 %v484, 7
    %v486 = vsub.s32 0, %v485
    %v487 = vrot.slane %v458, %v486
    %v488 = vlaneseq
    %v489 = vshrl.u32 %v488, 7
    %v490 = vsub.s32 0, %v489
    %v491 = vrot.slane %v472, %v490
    %v492 = vlaneseq
    %v493 = vshrl.u32 %v492, 7
    %v494 = vsub.s32 0, %v493
    %v495 = vrot.slane %v480, %v494
    %v496 = vlaneseq
    %v497 = vshrl.u32 %v496, 7
    %v498 = vsub.s32 0, %v497
    %v499 = vrot.slane %v482, %v498
    %v500 = vlaneseq
    %v501 = vshrl.u32 %v500, 7
    %v502 = vsub.s32 0, %v501
    %v503 = vrot.slane %v465, %v502
    %v504 = vlaneseq
    %v505 = vshrl.u32 %v504, 7
    %v506 = vsub.s32 0, %v505
    %v507 = vrot.slane %v479, %v506
    %v508 = vlaneseq
    %v509 = vshrl.u32 %v508, 7
    %v510 = vsub.s32 0, %v509
    %v511 = vrot.slane %v481, %v510
    %v512 = vlaneseq
    %v513 = vshrl.u32 %v512, 7
    %v514 = vsub.s32 0, %v513
    %v515 = vrot.slane %v483, %v514
    %v524 = vmul.f32 %v418, %v487
    %v525 = vmul.f32 %v419, %v487
    %v526 = vmul.f32 %v420, %v491
    %v527 = vmul.f32 %v421, %v491
    %v528 = vmul.f32 %v422, %v495
    %v529 = vmul.f32 %v423, %v495
    %v530 = vmul.f32 %v424, %v499
    %v531 = vmul.f32 %v425, %v499
    %v532 = vmul.f32 %v426, %v503
    %v533 = vmul.f32 %v427, %v503
    %v534 = vmul.f32 %v428, %v507
    %v535 = vmul.f32 %v429, %v507
    %v536 = vmul.f32 %v430, %v511
    %v537 = vmul.f32 %v431, %v511
    %v538 = vmul.f32 %v432, %v515
    %v539 = vmul.f32 %v433, %v515
    %v540 = vld [vmem:[#allocation5 + $0x21] sm:$0xff]
    %v541 = vld [vmem:[#allocation5 + $0x29] sm:$0xff]
    %v542 = vld [vmem:[#allocation5 + $0x31] sm:$0xff]
    %v543 = vld [vmem:[#allocation5 + $0x39] sm:$0xff]
    %v544 = vld [vmem:[#allocation5 + $0x41] sm:$0x1]
    %v545 = vld [vmem:[#allocation5 + $0x42] sm:$0x1]
    %v546 = vld [vmem:[#allocation5 + $0x43] sm:$0x1]
    %v547 = vmul.f32 %v524, %v47
    %v548 = vmul.f32 %v525, %v48
    %v549 = vmul.f32 %v526, %v47
    %v550 = vmul.f32 %v527, %v48
    %v551 = vmul.f32 %v528, %v47
    %v552 = vmul.f32 %v529, %v48
    %v553 = vmul.f32 %v530, %v47
    %v554 = vmul.f32 %v531, %v48
    %v555 = vmul.f32 %v532, %v47
    %v556 = vmul.f32 %v533, %v48
    %v557 = vmul.f32 %v534, %v47
    %v558 = vmul.f32 %v535, %v48
    %v559 = vmul.f32 %v536, %v47
    %v560 = vmul.f32 %v537, %v48
    %v561 = vmul.f32 %v538, %v47
    %v562 = vmul.f32 %v539, %v48
    %v563 = vsel %vm293, %v547, 0.0
    %564 = vadd.xlane.f32.xlu0 %v563
    %v565 = vpop.xlane.xlu0 %564
    %v566 = vsel %vm293, %v548, 0.0
    %567 = vadd.xlane.f32.xlu0 %v566
    %v568 = vpop.xlane.xlu0 %567
    %v569 = vsel %vm293, %v549, 0.0
    %570 = vadd.xlane.f32.xlu0 %v569
    %v571 = vpop.xlane.xlu0 %570
    %v572 = vsel %vm293, %v550, 0.0
    %573 = vadd.xlane.f32.xlu0 %v572
    %v574 = vpop.xlane.xlu0 %573
    %v575 = vsel %vm293, %v551, 0.0
    %576 = vadd.xlane.f32.xlu0 %v575
    %v577 = vpop.xlane.xlu0 %576
    %v578 = vsel %vm293, %v552, 0.0
    %579 = vadd.xlane.f32.xlu0 %v578
    %v580 = vpop.xlane.xlu0 %579
    %v581 = vsel %vm293, %v553, 0.0
    %582 = vadd.xlane.f32.xlu0 %v581
    %v583 = vpop.xlane.xlu0 %582
    %v584 = vsel %vm293, %v554, 0.0
    %585 = vadd.xlane.f32.xlu0 %v584
    %v586 = vpop.xlane.xlu0 %585
    %v587 = vsel %vm293, %v555, 0.0
    %588 = vadd.xlane.f32.xlu0 %v587
    %v589 = vpop.xlane.xlu0 %588
    %v590 = vsel %vm293, %v556, 0.0
    %591 = vadd.xlane.f32.xlu0 %v590
    %v592 = vpop.xlane.xlu0 %591
    %v593 = vsel %vm293, %v557, 0.0
    %594 = vadd.xlane.f32.xlu0 %v593
    %v595 = vpop.xlane.xlu0 %594
    %v596 = vsel %vm293, %v558, 0.0
    %597 = vadd.xlane.f32.xlu0 %v596
    %v598 = vpop.xlane.xlu0 %597
    %v599 = vsel %vm293, %v559, 0.0
    %600 = vadd.xlane.f32.xlu0 %v599
    %v601 = vpop.xlane.xlu0 %600
    %v602 = vsel %vm293, %v560, 0.0
    %603 = vadd.xlane.f32.xlu0 %v602
    %v604 = vpop.xlane.xlu0 %603
    %v605 = vsel %vm293, %v561, 0.0
    %606 = vadd.xlane.f32.xlu0 %v605
    %v607 = vpop.xlane.xlu0 %606
    %v608 = vsel %vm293, %v562, 0.0
    %609 = vadd.xlane.f32.xlu0 %v608
    %v610 = vpop.xlane.xlu0 %609
    %v627 = vlaneseq
    %v628 = vshrl.u32 %v627, 7
    %v629 = vsub.s32 %v42, %v628
    %v630 = vrot.slane %v565, %v629
    %v631 = vadd.s32 %v42, 4294967288
    %v632 = vlaneseq
    %v633 = vshrl.u32 %v632, 7
    %v634 = vsub.s32 %v631, %v633
    %v635 = vrot.slane %v568, %v634
    %vm636 = vcmask 130112
    %v637 = vsel %vm636, %v635, %v630
    %v638 = vlaneseq
    %v639 = vshrl.u32 %v638, 7
    %v640 = vsub.s32 %v42, %v639
    %v641 = vrot.slane %v571, %v640
    %v642 = vlaneseq
    %v643 = vshrl.u32 %v642, 7
    %v644 = vsub.s32 %v631, %v643
    %v645 = vrot.slane %v574, %v644
    %v646 = vsel %vm636, %v645, %v641
    %v647 = vlaneseq
    %v648 = vshrl.u32 %v647, 7
    %v649 = vsub.s32 %v42, %v648
    %v650 = vrot.slane %v577, %v649
    %v651 = vlaneseq
    %v652 = vshrl.u32 %v651, 7
    %v653 = vsub.s32 %v631, %v652
    %v654 = vrot.slane %v580, %v653
    %v655 = vsel %vm636, %v654, %v650
    %v656 = vlaneseq
    %v657 = vshrl.u32 %v656, 7
    %v658 = vsub.s32 %v42, %v657
    %v659 = vrot.slane %v583, %v658
    %v660 = vlaneseq
    %v661 = vshrl.u32 %v660, 7
    %v662 = vsub.s32 %v631, %v661
    %v663 = vrot.slane %v586, %v662
    %v664 = vsel %vm636, %v663, %v659
    %v665 = vlaneseq
    %v666 = vshrl.u32 %v665, 7
    %v667 = vsub.s32 %v42, %v666
    %v668 = vrot.slane %v589, %v667
    %v669 = vlaneseq
    %v670 = vshrl.u32 %v669, 7
    %v671 = vsub.s32 %v631, %v670
    %v672 = vrot.slane %v592, %v671
    %v673 = vsel %vm636, %v672, %v668
    %v674 = vlaneseq
    %v675 = vshrl.u32 %v674, 7
    %v676 = vsub.s32 %v42, %v675
    %v677 = vrot.slane %v595, %v676
    %v678 = vlaneseq
    %v679 = vshrl.u32 %v678, 7
    %v680 = vsub.s32 %v631, %v679
    %v681 = vrot.slane %v598, %v680
    %v682 = vsel %vm636, %v681, %v677
    %v683 = vlaneseq
    %v684 = vshrl.u32 %v683, 7
    %v685 = vsub.s32 %v42, %v684
    %v686 = vrot.slane %v601, %v685
    %v687 = vlaneseq
    %v688 = vshrl.u32 %v687, 7
    %v689 = vsub.s32 %v631, %v688
    %v690 = vrot.slane %v604, %v689
    %v691 = vsel %vm636, %v690, %v686
    %v692 = vlaneseq
    %v693 = vshrl.u32 %v692, 7
    %v694 = vsub.s32 %v42, %v693
    %v695 = vrot.slane %v607, %v694
    %v696 = vlaneseq
    %v697 = vshrl.u32 %v696, 7
    %v698 = vsub.s32 %v631, %v697
    %v699 = vrot.slane %v610, %v698
    %v700 = vsel %vm636, %v699, %v695
    %vm701 = vcmask 1041409
    %v702 = vsel %vm701, %v646, %v637
    %vm703 = vcmask 1042434
    %v704 = vsel %vm703, %v655, %v702
    %vm705 = vcmask 1043459
    %v706 = vsel %vm705, %v664, %v704
    %vm707 = vcmask 1044484
    %v708 = vsel %vm707, %v673, %v706
    %vm709 = vcmask 1045509
    %v710 = vsel %vm709, %v682, %v708
    %vm711 = vcmask 1046534
    %v712 = vsel %vm711, %v691, %v710
    %vm713 = vcmask 1047559
    %v714 = vsel %vm713, %v700, %v712
    %v716 = vsel %vm293, %v714, 0.0
    %717 = vadd.xlane.f32.xlu0 %v716
    %v718 = vpop.xlane.xlu0 %717
    %v719 = vmul.f32 %v329, %v329
    %v720 = vsel %vm293, %v719, 0.0
    %721 = vadd.xlane.f32.xlu0 %v720
    %v722 = vpop.xlane.xlu0 %721
    %v723 = vmax.f32 %v545, 0.0
    %vm724 = vcmp.ne.f32.partialorder %v545, %v545
    %v725 = vadd.f32 %v545, 0.0
    %v726 = vand.u32 2147483647, %v545
    %v727 = vsub.f32 0.0, %v726
    %v728 = vmul.f32 %v727, 1.442695
    %v729 = vpow.pop %v728
    %v730 = vadd.f32 %v729, 1.0
    %v731 = vlog2.pop %v730
    %v732 = vmul.f32 %v731, 0.6931472
    %v733 = vmul.f32 -0.5, %v729
    %v734 = vadd.f32 %v733, 1.0
    %v735 = vmul.f32 %v734, %v729
    %v736 = vand.u32 2147483647, %v729
    %vm737 = vcmp.lt.f32.partialorder %v736, 0.0004427343
    %v738 = vsel %vm737, %v735, %v732
    %v739 = vadd.f32 %v723, %v738
    %v740 = vsel %vm724, %v725, %v739
    %v741 = vadd.f32 %v718, %v722
    %v742 = vlaneseq
    %v743 = vshrl.u32 %v742, 7
    %v744 = vsub.s32 0, %v743
    %v745 = vrot.slane %v740, %v744
    %v746 = vmul.f32 %v745, %v741
    %v747 = vmax.f32 %v546, 0.0
    %vm748 = vcmp.ne.f32.partialorder %v546, %v546
    %v749 = vadd.f32 %v546, 0.0
    %v750 = vand.u32 2147483647, %v546
    %v751 = vsub.f32 0.0, %v750
    %v752 = vmul.f32 %v751, 1.442695
    %v753 = vpow.pop %v752
    %v754 = vadd.f32 %v753, 1.0
    %v755 = vlog2.pop %v754
    %v756 = vmul.f32 %v755, 0.6931472
    %v757 = vmul.f32 -0.5, %v753
    %v758 = vadd.f32 %v757, 1.0
    %v759 = vmul.f32 %v758, %v753
    %v760 = vand.u32 2147483647, %v753
    %vm761 = vcmp.lt.f32.partialorder %v760, 0.0004427343
    %v762 = vsel %vm761, %v759, %v756
    %v763 = vadd.f32 %v747, %v762
    %v764 = vsel %vm748, %v749, %v763
    %v765 = vlaneseq
    %v766 = vshrl.u32 %v765, 7
    %v767 = vsub.s32 0, %v766
    %v768 = vrot.slane %v764, %v767
    %v769 = vadd.f32 %v746, %v768
    %v770 = vlaneseq
    %v771 = vshrl.u32 %v770, 7
    %v772 = vsub.s32 0, %v771
    %v773 = vrot.slane %v544, %v772
    %v775 = vsel %vm293, %v329, 0
    %777 = vmatprep.subr.mxu0 0.0
    %778 = vmatpush1.msra.mxu0 %v540
    %779 = vmatprep.subr.mxu0 0.0
    %780 = vmatpush1.msra.mxu0 %v541
    %781 = vmatprep.subr.mxu0 0.0
    %782 = vmatpush1.msra.mxu0 0.0
    %783 = vmatprep.subr.mxu0 0.0
    %784 = vmatpush1.msra.mxu0 0.0
    %785 = vmatprep.subr.mxu0 0.0
    %786 = vmatpush1.msra.mxu0 0.0
    %787 = vmatprep.subr.mxu0 0.0
    %788 = vmatpush1.msra.mxu0 0.0
    %789 = vmatprep.subr.mxu0 0.0
    %790 = vmatpush1.msra.mxu0 0.0
    %791 = vmatprep.subr.mxu0 0.0
    %792 = vmatpush1.msra.mxu0 0.0
    %793 = vmatprep.subr.mxu0 0.0
    %794 = vmatpush1.msra.mxu0 0.0
    %795 = vmatprep.subr.mxu0 0.0
    %796 = vmatpush1.msra.mxu0 0.0
    %797 = vmatprep.subr.mxu0 0.0
    %798 = vmatpush1.msra.mxu0 0.0
    %799 = vmatprep.subr.mxu0 0.0
    %800 = vmatpush1.msra.mxu0 0.0
    %801 = vmatprep.subr.mxu0 0.0
    %802 = vmatpush1.msra.mxu0 0.0
    %803 = vmatprep.subr.mxu0 0.0
    %804 = vmatpush1.msra.mxu0 0.0
    %805 = vmatprep.subr.mxu0 0.0
    %806 = vmatpush1.msra.mxu0 0.0
    %807 = vmatprep.subr.mxu0 0.0
    %808 = vmatpush1.msra.mxu0 0.0
    %809 = vmatprep.subr.mxu0 0.0
    %810 = vmatpush1.msra.mxu0 0.0
    %811 = vmatprep.subr.mxu0 0.0
    %812 = vmatpush1.msra.mxu0 0.0
    %813 = vmatprep.subr.mxu0 0.0
    %814 = vmatpush1.msra.mxu0 0.0
    %815 = vmatprep.subr.mxu0 0.0
    %816 = vmatpush1.msra.mxu0 0.0
    %817 = vmatprep.subr.mxu0 0.0
    %818 = vmatpush1.msra.mxu0 0.0
    %819 = vmatprep.subr.mxu0 0.0
    %820 = vmatpush1.msra.mxu0 0.0
    %821 = vmatprep.subr.mxu0 0.0
    %822 = vmatpush1.msra.mxu0 0.0
    %823 = vmatprep.subr.mxu0 0.0
    %824 = vmatpush1.msra.mxu0 0.0
    %825 = vmatprep.subr.mxu0 0.0
    %826 = vmatpush1.msra.mxu0 0.0
    %827 = vmatprep.subr.mxu0 0.0
    %828 = vmatpush1.msra.mxu0 0.0
    %829 = vmatprep.subr.mxu0 0.0
    %830 = vmatpush1.msra.mxu0 0.0
    %831 = vmatprep.subr.mxu0 0.0
    %832 = vmatpush1.msra.mxu0 0.0
    %833 = vmatprep.subr.mxu0 0.0
    %834 = vmatpush1.msra.mxu0 0.0
    %835 = vmatprep.subr.mxu0 0.0
    %836 = vmatpush1.msra.mxu0 0.0
    %837 = vmatprep.subr.mxu0 0.0
    %838 = vmatpush1.msra.mxu0 0.0
    %839 = vmatprep.subr.mxu0 0.0
    %840 = vmatpush1.msra.mxu0 0.0
    %841 = vmatprep.mubr.f32.mxu0 0.0
    %842 = vmatmul.mubr.f32.gmra.mrb[0].mxu0 %v775
    %v843 = vpop.f32.mrb[0].mxu0
    %v844 = vadd.f32 %v773, %v843
    %v845 = vpop.f32.mrb[0].mxu0
    %846 = vdwg.mxu0
    %v848 = vsel %vm293, %v524, 0
    %v851 = vsel %vm293, %v525, 0
    %853 = vmatprep.subr.mxu0 0.0
    %854 = vmatpush1.msra.mxu0 %v540
    %855 = vmatprep.subr.mxu0 0.0
    %856 = vmatpush1.msra.mxu0 %v541
    %857 = vmatprep.subr.mxu0 0.0
    %858 = vmatpush1.msra.mxu0 0.0
    %859 = vmatprep.subr.mxu0 0.0
    %860 = vmatpush1.msra.mxu0 0.0
    %861 = vmatprep.subr.mxu0 0.0
    %862 = vmatpush1.msra.mxu0 0.0
    %863 = vmatprep.subr.mxu0 0.0
    %864 = vmatpush1.msra.mxu0 0.0
    %865 = vmatprep.subr.mxu0 0.0
    %866 = vmatpush1.msra.mxu0 0.0
    %867 = vmatprep.subr.mxu0 0.0
    %868 = vmatpush1.msra.mxu0 0.0
    %869 = vmatprep.subr.mxu0 0.0
    %870 = vmatpush1.msra.mxu0 0.0
    %871 = vmatprep.subr.mxu0 0.0
    %872 = vmatpush1.msra.mxu0 0.0
    %873 = vmatprep.subr.mxu0 0.0
    %874 = vmatpush1.msra.mxu0 0.0
    %875 = vmatprep.subr.mxu0 0.0
    %876 = vmatpush1.msra.mxu0 0.0
    %877 = vmatprep.subr.mxu0 0.0
    %878 = vmatpush1.msra.mxu0 0.0
    %879 = vmatprep.subr.mxu0 0.0
    %880 = vmatpush1.msra.mxu0 0.0
    %881 = vmatprep.subr.mxu0 0.0
    %882 = vmatpush1.msra.mxu0 0.0
    %883 = vmatprep.subr.mxu0 0.0
    %884 = vmatpush1.msra.mxu0 0.0
    %885 = vmatprep.subr.mxu0 0.0
    %886 = vmatpush1.msra.mxu0 0.0
    %887 = vmatprep.subr.mxu0 0.0
    %888 = vmatpush1.msra.mxu0 0.0
    %889 = vmatprep.subr.mxu0 0.0
    %890 = vmatpush1.msra.mxu0 0.0
    %891 = vmatprep.subr.mxu0 0.0
    %892 = vmatpush1.msra.mxu0 0.0
    %893 = vmatprep.subr.mxu0 0.0
    %894 = vmatpush1.msra.mxu0 0.0
    %895 = vmatprep.subr.mxu0 0.0
    %896 = vmatpush1.msra.mxu0 0.0
    %897 = vmatprep.subr.mxu0 0.0
    %898 = vmatpush1.msra.mxu0 0.0
    %899 = vmatprep.subr.mxu0 0.0
    %900 = vmatpush1.msra.mxu0 0.0
    %901 = vmatprep.subr.mxu0 0.0
    %902 = vmatpush1.msra.mxu0 0.0
    %903 = vmatprep.subr.mxu0 0.0
    %904 = vmatpush1.msra.mxu0 0.0
    %905 = vmatprep.subr.mxu0 0.0
    %906 = vmatpush1.msra.mxu0 0.0
    %907 = vmatprep.subr.mxu0 0.0
    %908 = vmatpush1.msra.mxu0 0.0
    %909 = vmatprep.subr.mxu0 0.0
    %910 = vmatpush1.msra.mxu0 0.0
    %911 = vmatprep.subr.mxu0 0.0
    %912 = vmatpush1.msra.mxu0 0.0
    %913 = vmatprep.subr.mxu0 0.0
    %914 = vmatpush1.msra.mxu0 0.0
    %915 = vmatprep.subr.mxu0 0.0
    %916 = vmatpush1.msra.mxu0 0.0
    %917 = vmatprep.mubr.f32.mxu0 0.0
    %918 = vmatmul.mubr.f32.gmra.mrb[0].mxu0 %v848
    %v919 = vpop.f32.mrb[0].mxu0
    %v920 = vadd.f32 0.0, %v919
    %v921 = vpop.f32.mrb[0].mxu0
    %922 = vmatprep.mubr.f32.mxu0 0.0
    %923 = vmatmul.mubr.f32.gmra.mrb[0].mxu0 %v851
    %v924 = vpop.f32.mrb[0].mxu0
    %v925 = vadd.f32 0.0, %v924
    %v926 = vpop.f32.mrb[0].mxu0
    %927 = vdwg.mxu0
    %v929 = vsel %vm293, %v526, 0
    %v932 = vsel %vm293, %v527, 0
    %934 = vmatprep.subr.mxu0 0.0
    %935 = vmatpush1.msra.mxu0 %v540
    %936 = vmatprep.subr.mxu0 0.0
    %937 = vmatpush1.msra.mxu0 %v541
    %938 = vmatprep.subr.mxu0 0.0
    %939 = vmatpush1.msra.mxu0 0.0
    %940 = vmatprep.subr.mxu0 0.0
    %941 = vmatpush1.msra.mxu0 0.0
    %942 = vmatprep.subr.mxu0 0.0
    %943 = vmatpush1.msra.mxu0 0.0
    %944 = vmatprep.subr.mxu0 0.0
    %945 = vmatpush1.msra.mxu0 0.0
    %946 = vmatprep.subr.mxu0 0.0
    %947 = vmatpush1.msra.mxu0 0.0
    %948 = vmatprep.subr.mxu0 0.0
    %949 = vmatpush1.msra.mxu0 0.0
    %950 = vmatprep.subr.mxu0 0.0
    %951 = vmatpush1.msra.mxu0 0.0
    %952 = vmatprep.subr.mxu0 0.0
    %953 = vmatpush1.msra.mxu0 0.0
    %954 = vmatprep.subr.mxu0 0.0
    %955 = vmatpush1.msra.mxu0 0.0
    %956 = vmatprep.subr.mxu0 0.0
    %957 = vmatpush1.msra.mxu0 0.0
    %958 = vmatprep.subr.mxu0 0.0
    %959 = vmatpush1.msra.mxu0 0.0
    %960 = vmatprep.subr.mxu0 0.0
    %961 = vmatpush1.msra.mxu0 0.0
    %962 = vmatprep.subr.mxu0 0.0
    %963 = vmatpush1.msra.mxu0 0.0
    %964 = vmatprep.subr.mxu0 0.0
    %965 = vmatpush1.msra.mxu0 0.0
    %966 = vmatprep.subr.mxu0 0.0
    %967 = vmatpush1.msra.mxu0 0.0
    %968 = vmatprep.subr.mxu0 0.0
    %969 = vmatpush1.msra.mxu0 0.0
    %970 = vmatprep.subr.mxu0 0.0
    %971 = vmatpush1.msra.mxu0 0.0
    %972 = vmatprep.subr.mxu0 0.0
    %973 = vmatpush1.msra.mxu0 0.0
    %974 = vmatprep.subr.mxu0 0.0
    %975 = vmatpush1.msra.mxu0 0.0
    %976 = vmatprep.subr.mxu0 0.0
    %977 = vmatpush1.msra.mxu0 0.0
    %978 = vmatprep.subr.mxu0 0.0
    %979 = vmatpush1.msra.mxu0 0.0
    %980 = vmatprep.subr.mxu0 0.0
    %981 = vmatpush1.msra.mxu0 0.0
    %982 = vmatprep.subr.mxu0 0.0
    %983 = vmatpush1.msra.mxu0 0.0
    %984 = vmatprep.subr.mxu0 0.0
    %985 = vmatpush1.msra.mxu0 0.0
    %986 = vmatprep.subr.mxu0 0.0
    %987 = vmatpush1.msra.mxu0 0.0
    %988 = vmatprep.subr.mxu0 0.0
    %989 = vmatpush1.msra.mxu0 0.0
    %990 = vmatprep.subr.mxu0 0.0
    %991 = vmatpush1.msra.mxu0 0.0
    %992 = vmatprep.subr.mxu0 0.0
    %993 = vmatpush1.msra.mxu0 0.0
    %994 = vmatprep.subr.mxu0 0.0
    %995 = vmatpush1.msra.mxu0 0.0
    %996 = vmatprep.subr.mxu0 0.0
    %997 = vmatpush1.msra.mxu0 0.0
    %998 = vmatprep.mubr.f32.mxu0 0.0
    %999 = vmatmul.mubr.f32.gmra.mrb[0].mxu0 %v929
    %v1000 = vpop.f32.mrb[0].mxu0
    %v1001 = vadd.f32 0.0, %v1000
    %v1002 = vpop.f32.mrb[0].mxu0
    %1003 = vmatprep.mubr.f32.mxu0 0.0
    %1004 = vmatmul.mubr.f32.gmra.mrb[0].mxu0 %v932
    %v1005 = vpop.f32.mrb[0].mxu0
    %v1006 = vadd.f32 0.0, %v1005
    %v1007 = vpop.f32.mrb[0].mxu0
    %1008 = vdwg.mxu0
    %v1010 = vsel %vm293, %v528, 0
    %v1013 = vsel %vm293, %v529, 0
    %1015 = vmatprep.subr.mxu0 0.0
    %1016 = vmatpush1.msra.mxu0 %v540
    %1017 = vmatprep.subr.mxu0 0.0
    %1018 = vmatpush1.msra.mxu0 %v541
    %1019 = vmatprep.subr.mxu0 0.0
    %1020 = vmatpush1.msra.mxu0 0.0
    %1021 = vmatprep.subr.mxu0 0.0
    %1022 = vmatpush1.msra.mxu0 0.0
    %1023 = vmatprep.subr.mxu0 0.0
    %1024 = vmatpush1.msra.mxu0 0.0
    %1025 = vmatprep.subr.mxu0 0.0
    %1026 = vmatpush1.msra.mxu0 0.0
    %1027 = vmatprep.subr.mxu0 0.0
    %1028 = vmatpush1.msra.mxu0 0.0
    %1029 = vmatprep.subr.mxu0 0.0
    %1030 = vmatpush1.msra.mxu0 0.0
    %1031 = vmatprep.subr.mxu0 0.0
    %1032 = vmatpush1.msra.mxu0 0.0
    %1033 = vmatprep.subr.mxu0 0.0
    %1034 = vmatpush1.msra.mxu0 0.0
    %1035 = vmatprep.subr.mxu0 0.0
    %1036 = vmatpush1.msra.mxu0 0.0
    %1037 = vmatprep.subr.mxu0 0.0
    %1038 = vmatpush1.msra.mxu0 0.0
    %1039 = vmatprep.subr.mxu0 0.0
    %1040 = vmatpush1.msra.mxu0 0.0
    %1041 = vmatprep.subr.mxu0 0.0
    %1042 = vmatpush1.msra.mxu0 0.0
    %1043 = vmatprep.subr.mxu0 0.0
    %1044 = vmatpush1.msra.mxu0 0.0
    %1045 = vmatprep.subr.mxu0 0.0
    %1046 = vmatpush1.msra.mxu0 0.0
    %1047 = vmatprep.subr.mxu0 0.0
    %1048 = vmatpush1.msra.mxu0 0.0
    %1049 = vmatprep.subr.mxu0 0.0
    %1050 = vmatpush1.msra.mxu0 0.0
    %1051 = vmatprep.subr.mxu0 0.0
    %1052 = vmatpush1.msra.mxu0 0.0
    %1053 = vmatprep.subr.mxu0 0.0
    %1054 = vmatpush1.msra.mxu0 0.0
    %1055 = vmatprep.subr.mxu0 0.0
    %1056 = vmatpush1.msra.mxu0 0.0
    %1057 = vmatprep.subr.mxu0 0.0
    %1058 = vmatpush1.msra.mxu0 0.0
    %1059 = vmatprep.subr.mxu0 0.0
    %1060 = vmatpush1.msra.mxu0 0.0
    %1061 = vmatprep.subr.mxu0 0.0
    %1062 = vmatpush1.msra.mxu0 0.0
    %1063 = vmatprep.subr.mxu0 0.0
    %1064 = vmatpush1.msra.mxu0 0.0
    %1065 = vmatprep.subr.mxu0 0.0
    %1066 = vmatpush1.msra.mxu0 0.0
    %1067 = vmatprep.subr.mxu0 0.0
    %1068 = vmatpush1.msra.mxu0 0.0
    %1069 = vmatprep.subr.mxu0 0.0
    %1070 = vmatpush1.msra.mxu0 0.0
    %1071 = vmatprep.subr.mxu0 0.0
    %1072 = vmatpush1.msra.mxu0 0.0
    %1073 = vmatprep.subr.mxu0 0.0
    %1074 = vmatpush1.msra.mxu0 0.0
    %1075 = vmatprep.subr.mxu0 0.0
    %1076 = vmatpush1.msra.mxu0 0.0
    %1077 = vmatprep.subr.mxu0 0.0
    %1078 = vmatpush1.msra.mxu0 0.0
    %1079 = vmatprep.mubr.f32.mxu0 0.0
    %1080 = vmatmul.mubr.f32.gmra.mrb[0].mxu0 %v1010
    %v1081 = vpop.f32.mrb[0].mxu0
    %v1082 = vadd.f32 0.0, %v1081
    %v1083 = vpop.f32.mrb[0].mxu0
    %1084 = vmatprep.mubr.f32.mxu0 0.0
    %1085 = vmatmul.mubr.f32.gmra.mrb[0].mxu0 %v1013
    %v1086 = vpop.f32.mrb[0].mxu0
    %v1087 = vadd.f32 0.0, %v1086
    %v1088 = vpop.f32.mrb[0].mxu0
    %1089 = vdwg.mxu0
    %v1091 = vsel %vm293, %v530, 0
    %v1094 = vsel %vm293, %v531, 0
    %1096 = vmatprep.subr.mxu0 0.0
    %1097 = vmatpush1.msra.mxu0 %v540
    %1098 = vmatprep.subr.mxu0 0.0
    %1099 = vmatpush1.msra.mxu0 %v541
    %1100 = vmatprep.subr.mxu0 0.0
    %1101 = vmatpush1.msra.mxu0 0.0
    %1102 = vmatprep.subr.mxu0 0.0
    %1103 = vmatpush1.msra.mxu0 0.0
    %1104 = vmatprep.subr.mxu0 0.0
    %1105 = vmatpush1.msra.mxu0 0.0
    %1106 = vmatprep.subr.mxu0 0.0
    %1107 = vmatpush1.msra.mxu0 0.0
    %1108 = vmatprep.subr.mxu0 0.0
    %1109 = vmatpush1.msra.mxu0 0.0
    %1110 = vmatprep.subr.mxu0 0.0
    %1111 = vmatpush1.msra.mxu0 0.0
    %1112 = vmatprep.subr.mxu0 0.0
    %1113 = vmatpush1.msra.mxu0 0.0
    %1114 = vmatprep.subr.mxu0 0.0
    %1115 = vmatpush1.msra.mxu0 0.0
    %1116 = vmatprep.subr.mxu0 0.0
    %1117 = vmatpush1.msra.mxu0 0.0
    %1118 = vmatprep.subr.mxu0 0.0
    %1119 = vmatpush1.msra.mxu0 0.0
    %1120 = vmatprep.subr.mxu0 0.0
    %1121 = vmatpush1.msra.mxu0 0.0
    %1122 = vmatprep.subr.mxu0 0.0
    %1123 = vmatpush1.msra.mxu0 0.0
    %1124 = vmatprep.subr.mxu0 0.0
    %1125 = vmatpush1.msra.mxu0 0.0
    %1126 = vmatprep.subr.mxu0 0.0
    %1127 = vmatpush1.msra.mxu0 0.0
    %1128 = vmatprep.subr.mxu0 0.0
    %1129 = vmatpush1.msra.mxu0 0.0
    %1130 = vmatprep.subr.mxu0 0.0
    %1131 = vmatpush1.msra.mxu0 0.0
    %1132 = vmatprep.subr.mxu0 0.0
    %1133 = vmatpush1.msra.mxu0 0.0
    %1134 = vmatprep.subr.mxu0 0.0
    %1135 = vmatpush1.msra.mxu0 0.0
    %1136 = vmatprep.subr.mxu0 0.0
    %1137 = vmatpush1.msra.mxu0 0.0
    %1138 = vmatprep.subr.mxu0 0.0
    %1139 = vmatpush1.msra.mxu0 0.0
    %1140 = vmatprep.subr.mxu0 0.0
    %1141 = vmatpush1.msra.mxu0 0.0
    %1142 = vmatprep.subr.mxu0 0.0
    %1143 = vmatpush1.msra.mxu0 0.0
    %1144 = vmatprep.subr.mxu0 0.0
    %1145 = vmatpush1.msra.mxu0 0.0
    %1146 = vmatprep.subr.mxu0 0.0
    %1147 = vmatpush1.msra.mxu0 0.0
    %1148 = vmatprep.subr.mxu0 0.0
    %1149 = vmatpush1.msra.mxu0 0.0
    %1150 = vmatprep.subr.mxu0 0.0
    %1151 = vmatpush1.msra.mxu0 0.0
    %1152 = vmatprep.subr.mxu0 0.0
    %1153 = vmatpush1.msra.mxu0 0.0
    %1154 = vmatprep.subr.mxu0 0.0
    %1155 = vmatpush1.msra.mxu0 0.0
    %1156 = vmatprep.subr.mxu0 0.0
    %1157 = vmatpush1.msra.mxu0 0.0
    %1158 = vmatprep.subr.mxu0 0.0
    %1159 = vmatpush1.msra.mxu0 0.0
    %1160 = vmatprep.mubr.f32.mxu0 0.0
    %1161 = vmatmul.mubr.f32.gmra.mrb[0].mxu0 %v1091
    %v1162 = vpop.f32.mrb[0].mxu0
    %v1163 = vadd.f32 0.0, %v1162
    %v1164 = vpop.f32.mrb[0].mxu0
    %1165 = vmatprep.mubr.f32.mxu0 0.0
    %1166 = vmatmul.mubr.f32.gmra.mrb[0].mxu0 %v1094
    %v1167 = vpop.f32.mrb[0].mxu0
    %v1168 = vadd.f32 0.0, %v1167
    %v1169 = vpop.f32.mrb[0].mxu0
    %1170 = vdwg.mxu0
    %v1172 = vsel %vm293, %v532, 0
    %v1175 = vsel %vm293, %v533, 0
    %1177 = vmatprep.subr.mxu0 0.0
    %1178 = vmatpush1.msra.mxu0 %v540
    %1179 = vmatprep.subr.mxu0 0.0
    %1180 = vmatpush1.msra.mxu0 %v541
    %1181 = vmatprep.subr.mxu0 0.0
    %1182 = vmatpush1.msra.mxu0 0.0
    %1183 = vmatprep.subr.mxu0 0.0
    %1184 = vmatpush1.msra.mxu0 0.0
    %1185 = vmatprep.subr.mxu0 0.0
    %1186 = vmatpush1.msra.mxu0 0.0
    %1187 = vmatprep.subr.mxu0 0.0
    %1188 = vmatpush1.msra.mxu0 0.0
    %1189 = vmatprep.subr.mxu0 0.0
    %1190 = vmatpush1.msra.mxu0 0.0
    %1191 = vmatprep.subr.mxu0 0.0
    %1192 = vmatpush1.msra.mxu0 0.0
    %1193 = vmatprep.subr.mxu0 0.0
    %1194 = vmatpush1.msra.mxu0 0.0
    %1195 = vmatprep.subr.mxu0 0.0
    %1196 = vmatpush1.msra.mxu0 0.0
    %1197 = vmatprep.subr.mxu0 0.0
    %1198 = vmatpush1.msra.mxu0 0.0
    %1199 = vmatprep.subr.mxu0 0.0
    %1200 = vmatpush1.msra.mxu0 0.0
    %1201 = vmatprep.subr.mxu0 0.0
    %1202 = vmatpush1.msra.mxu0 0.0
    %1203 = vmatprep.subr.mxu0 0.0
    %1204 = vmatpush1.msra.mxu0 0.0
    %1205 = vmatprep.subr.mxu0 0.0
    %1206 = vmatpush1.msra.mxu0 0.0
    %1207 = vmatprep.subr.mxu0 0.0
    %1208 = vmatpush1.msra.mxu0 0.0
    %1209 = vmatprep.subr.mxu0 0.0
    %1210 = vmatpush1.msra.mxu0 0.0
    %1211 = vmatprep.subr.mxu0 0.0
    %1212 = vmatpush1.msra.mxu0 0.0
    %1213 = vmatprep.subr.mxu0 0.0
    %1214 = vmatpush1.msra.mxu0 0.0
    %1215 = vmatprep.subr.mxu0 0.0
    %1216 = vmatpush1.msra.mxu0 0.0
    %1217 = vmatprep.subr.mxu0 0.0
    %1218 = vmatpush1.msra.mxu0 0.0
    %1219 = vmatprep.subr.mxu0 0.0
    %1220 = vmatpush1.msra.mxu0 0.0
    %1221 = vmatprep.subr.mxu0 0.0
    %1222 = vmatpush1.msra.mxu0 0.0
    %1223 = vmatprep.subr.mxu0 0.0
    %1224 = vmatpush1.msra.mxu0 0.0
    %1225 = vmatprep.subr.mxu0 0.0
    %1226 = vmatpush1.msra.mxu0 0.0
    %1227 = vmatprep.subr.mxu0 0.0
    %1228 = vmatpush1.msra.mxu0 0.0
    %1229 = vmatprep.subr.mxu0 0.0
    %1230 = vmatpush1.msra.mxu0 0.0
    %1231 = vmatprep.subr.mxu0 0.0
    %1232 = vmatpush1.msra.mxu0 0.0
    %1233 = vmatprep.subr.mxu0 0.0
    %1234 = vmatpush1.msra.mxu0 0.0
    %1235 = vmatprep.subr.mxu0 0.0
    %1236 = vmatpush1.msra.mxu0 0.0
    %1237 = vmatprep.subr.mxu0 0.0
    %1238 = vmatpush1.msra.mxu0 0.0
    %1239 = vmatprep.subr.mxu0 0.0
    %1240 = vmatpush1.msra.mxu0 0.0
    %1241 = vmatprep.mubr.f32.mxu0 0.0
    %1242 = vmatmul.mubr.f32.gmra.mrb[0].mxu0 %v1172
    %v1243 = vpop.f32.mrb[0].mxu0
    %v1244 = vadd.f32 0.0, %v1243
    %v1245 = vpop.f32.mrb[0].mxu0
    %1246 = vmatprep.mubr.f32.mxu0 0.0
    %1247 = vmatmul.mubr.f32.gmra.mrb[0].mxu0 %v1175
    %v1248 = vpop.f32.mrb[0].mxu0
    %v1249 = vadd.f32 0.0, %v1248
    %v1250 = vpop.f32.mrb[0].mxu0
    %1251 = vdwg.mxu0
    %v1253 = vsel %vm293, %v534, 0
    %v1256 = vsel %vm293, %v535, 0
    %1258 = vmatprep.subr.mxu0 0.0
    %1259 = vmatpush1.msra.mxu0 %v540
    %1260 = vmatprep.subr.mxu0 0.0
    %1261 = vmatpush1.msra.mxu0 %v541
    %1262 = vmatprep.subr.mxu0 0.0
    %1263 = vmatpush1.msra.mxu0 0.0
    %1264 = vmatprep.subr.mxu0 0.0
    %1265 = vmatpush1.msra.mxu0 0.0
    %1266 = vmatprep.subr.mxu0 0.0
    %1267 = vmatpush1.msra.mxu0 0.0
    %1268 = vmatprep.subr.mxu0 0.0
    %1269 = vmatpush1.msra.mxu0 0.0
    %1270 = vmatprep.subr.mxu0 0.0
    %1271 = vmatpush1.msra.mxu0 0.0
    %1272 = vmatprep.subr.mxu0 0.0
    %1273 = vmatpush1.msra.mxu0 0.0
    %1274 = vmatprep.subr.mxu0 0.0
    %1275 = vmatpush1.msra.mxu0 0.0
    %1276 = vmatprep.subr.mxu0 0.0
    %1277 = vmatpush1.msra.mxu0 0.0
    %1278 = vmatprep.subr.mxu0 0.0
    %1279 = vmatpush1.msra.mxu0 0.0
    %1280 = vmatprep.subr.mxu0 0.0
    %1281 = vmatpush1.msra.mxu0 0.0
    %1282 = vmatprep.subr.mxu0 0.0
    %1283 = vmatpush1.msra.mxu0 0.0
    %1284 = vmatprep.subr.mxu0 0.0
    %1285 = vmatpush1.msra.mxu0 0.0
    %1286 = vmatprep.subr.mxu0 0.0
    %1287 = vmatpush1.msra.mxu0 0.0
    %1288 = vmatprep.subr.mxu0 0.0
    %1289 = vmatpush1.msra.mxu0 0.0
    %1290 = vmatprep.subr.mxu0 0.0
    %1291 = vmatpush1.msra.mxu0 0.0
    %1292 = vmatprep.subr.mxu0 0.0
    %1293 = vmatpush1.msra.mxu0 0.0
    %1294 = vmatprep.subr.mxu0 0.0
    %1295 = vmatpush1.msra.mxu0 0.0
    %1296 = vmatprep.subr.mxu0 0.0
    %1297 = vmatpush1.msra.mxu0 0.0
    %1298 = vmatprep.subr.mxu0 0.0
    %1299 = vmatpush1.msra.mxu0 0.0
    %1300 = vmatprep.subr.mxu0 0.0
    %1301 = vmatpush1.msra.mxu0 0.0
    %1302 = vmatprep.subr.mxu0 0.0
    %1303 = vmatpush1.msra.mxu0 0.0
    %1304 = vmatprep.subr.mxu0 0.0
    %1305 = vmatpush1.msra.mxu0 0.0
    %1306 = vmatprep.subr.mxu0 0.0
    %1307 = vmatpush1.msra.mxu0 0.0
    %1308 = vmatprep.subr.mxu0 0.0
    %1309 = vmatpush1.msra.mxu0 0.0
    %1310 = vmatprep.subr.mxu0 0.0
    %1311 = vmatpush1.msra.mxu0 0.0
    %1312 = vmatprep.subr.mxu0 0.0
    %1313 = vmatpush1.msra.mxu0 0.0
    %1314 = vmatprep.subr.mxu0 0.0
    %1315 = vmatpush1.msra.mxu0 0.0
    %1316 = vmatprep.subr.mxu0 0.0
    %1317 = vmatpush1.msra.mxu0 0.0
    %1318 = vmatprep.subr.mxu0 0.0
    %1319 = vmatpush1.msra.mxu0 0.0
    %1320 = vmatprep.subr.mxu0 0.0
    %1321 = vmatpush1.msra.mxu0 0.0
    %1322 = vmatprep.mubr.f32.mxu0 0.0
    %1323 = vmatmul.mubr.f32.gmra.mrb[0].mxu0 %v1253
    %v1324 = vpop.f32.mrb[0].mxu0
    %v1325 = vadd.f32 0.0, %v1324
    %v1326 = vpop.f32.mrb[0].mxu0
    %1327 = vmatprep.mubr.f32.mxu0 0.0
    %1328 = vmatmul.mubr.f32.gmra.mrb[0].mxu0 %v1256
    %v1329 = vpop.f32.mrb[0].mxu0
    %v1330 = vadd.f32 0.0, %v1329
    %v1331 = vpop.f32.mrb[0].mxu0
    %1332 = vdwg.mxu0
    %v1334 = vsel %vm293, %v536, 0
    %v1337 = vsel %vm293, %v537, 0
    %1339 = vmatprep.subr.mxu0 0.0
    %1340 = vmatpush1.msra.mxu0 %v540
    %1341 = vmatprep.subr.mxu0 0.0
    %1342 = vmatpush1.msra.mxu0 %v541
    %1343 = vmatprep.subr.mxu0 0.0
    %1344 = vmatpush1.msra.mxu0 0.0
    %1345 = vmatprep.subr.mxu0 0.0
    %1346 = vmatpush1.msra.mxu0 0.0
    %1347 = vmatprep.subr.mxu0 0.0
    %1348 = vmatpush1.msra.mxu0 0.0
    %1349 = vmatprep.subr.mxu0 0.0
    %1350 = vmatpush1.msra.mxu0 0.0
    %1351 = vmatprep.subr.mxu0 0.0
    %1352 = vmatpush1.msra.mxu0 0.0
    %1353 = vmatprep.subr.mxu0 0.0
    %1354 = vmatpush1.msra.mxu0 0.0
    %1355 = vmatprep.subr.mxu0 0.0
    %1356 = vmatpush1.msra.mxu0 0.0
    %1357 = vmatprep.subr.mxu0 0.0
    %1358 = vmatpush1.msra.mxu0 0.0
    %1359 = vmatprep.subr.mxu0 0.0
    %1360 = vmatpush1.msra.mxu0 0.0
    %1361 = vmatprep.subr.mxu0 0.0
    %1362 = vmatpush1.msra.mxu0 0.0
    %1363 = vmatprep.subr.mxu0 0.0
    %1364 = vmatpush1.msra.mxu0 0.0
    %1365 = vmatprep.subr.mxu0 0.0
    %1366 = vmatpush1.msra.mxu0 0.0
    %1367 = vmatprep.subr.mxu0 0.0
    %1368 = vmatpush1.msra.mxu0 0.0
    %1369 = vmatprep.subr.mxu0 0.0
    %1370 = vmatpush1.msra.mxu0 0.0
    %1371 = vmatprep.subr.mxu0 0.0
    %1372 = vmatpush1.msra.mxu0 0.0
    %1373 = vmatprep.subr.mxu0 0.0
    %1374 = vmatpush1.msra.mxu0 0.0
    %1375 = vmatprep.subr.mxu0 0.0
    %1376 = vmatpush1.msra.mxu0 0.0
    %1377 = vmatprep.subr.mxu0 0.0
    %1378 = vmatpush1.msra.mxu0 0.0
    %1379 = vmatprep.subr.mxu0 0.0
    %1380 = vmatpush1.msra.mxu0 0.0
    %1381 = vmatprep.subr.mxu0 0.0
    %1382 = vmatpush1.msra.mxu0 0.0
    %1383 = vmatprep.subr.mxu0 0.0
    %1384 = vmatpush1.msra.mxu0 0.0
    %1385 = vmatprep.subr.mxu0 0.0
    %1386 = vmatpush1.msra.mxu0 0.0
    %1387 = vmatprep.subr.mxu0 0.0
    %1388 = vmatpush1.msra.mxu0 0.0
    %1389 = vmatprep.subr.mxu0 0.0
    %1390 = vmatpush1.msra.mxu0 0.0
    %1391 = vmatprep.subr.mxu0 0.0
    %1392 = vmatpush1.msra.mxu0 0.0
    %1393 = vmatprep.subr.mxu0 0.0
    %1394 = vmatpush1.msra.mxu0 0.0
    %1395 = vmatprep.subr.mxu0 0.0
    %1396 = vmatpush1.msra.mxu0 0.0
    %1397 = vmatprep.subr.mxu0 0.0
    %1398 = vmatpush1.msra.mxu0 0.0
    %1399 = vmatprep.subr.mxu0 0.0
    %1400 = vmatpush1.msra.mxu0 0.0
    %1401 = vmatprep.subr.mxu0 0.0
    %1402 = vmatpush1.msra.mxu0 0.0
    %1403 = vmatprep.mubr.f32.mxu0 0.0
    %1404 = vmatmul.mubr.f32.gmra.mrb[0].mxu0 %v1334
    %v1405 = vpop.f32.mrb[0].mxu0
    %v1406 = vadd.f32 0.0, %v1405
    %v1407 = vpop.f32.mrb[0].mxu0
    %1408 = vmatprep.mubr.f32.mxu0 0.0
    %1409 = vmatmul.mubr.f32.gmra.mrb[0].mxu0 %v1337
    %v1410 = vpop.f32.mrb[0].mxu0
    %v1411 = vadd.f32 0.0, %v1410
    %v1412 = vpop.f32.mrb[0].mxu0
    %1413 = vdwg.mxu0
    %v1415 = vsel %vm293, %v538, 0
    %v1418 = vsel %vm293, %v539, 0
    %1420 = vmatprep.subr.mxu0 0.0
    %1421 = vmatpush1.msra.mxu0 %v540
    %1422 = vmatprep.subr.mxu0 0.0
    %1423 = vmatpush1.msra.mxu0 %v541
    %1424 = vmatprep.subr.mxu0 0.0
    %1425 = vmatpush1.msra.mxu0 0.0
    %1426 = vmatprep.subr.mxu0 0.0
    %1427 = vmatpush1.msra.mxu0 0.0
    %1428 = vmatprep.subr.mxu0 0.0
    %1429 = vmatpush1.msra.mxu0 0.0
    %1430 = vmatprep.subr.mxu0 0.0
    %1431 = vmatpush1.msra.mxu0 0.0
    %1432 = vmatprep.subr.mxu0 0.0
    %1433 = vmatpush1.msra.mxu0 0.0
    %1434 = vmatprep.subr.mxu0 0.0
    %1435 = vmatpush1.msra.mxu0 0.0
    %1436 = vmatprep.subr.mxu0 0.0
    %1437 = vmatpush1.msra.mxu0 0.0
    %1438 = vmatprep.subr.mxu0 0.0
    %1439 = vmatpush1.msra.mxu0 0.0
    %1440 = vmatprep.subr.mxu0 0.0
    %1441 = vmatpush1.msra.mxu0 0.0
    %1442 = vmatprep.subr.mxu0 0.0
    %1443 = vmatpush1.msra.mxu0 0.0
    %1444 = vmatprep.subr.mxu0 0.0
    %1445 = vmatpush1.msra.mxu0 0.0
    %1446 = vmatprep.subr.mxu0 0.0
    %1447 = vmatpush1.msra.mxu0 0.0
    %1448 = vmatprep.subr.mxu0 0.0
    %1449 = vmatpush1.msra.mxu0 0.0
    %1450 = vmatprep.subr.mxu0 0.0
    %1451 = vmatpush1.msra.mxu0 0.0
    %1452 = vmatprep.subr.mxu0 0.0
    %1453 = vmatpush1.msra.mxu0 0.0
    %1454 = vmatprep.subr.mxu0 0.0
    %1455 = vmatpush1.msra.mxu0 0.0
    %1456 = vmatprep.subr.mxu0 0.0
    %1457 = vmatpush1.msra.mxu0 0.0
    %1458 = vmatprep.subr.mxu0 0.0
    %1459 = vmatpush1.msra.mxu0 0.0
    %1460 = vmatprep.subr.mxu0 0.0
    %1461 = vmatpush1.msra.mxu0 0.0
    %1462 = vmatprep.subr.mxu0 0.0
    %1463 = vmatpush1.msra.mxu0 0.0
    %1464 = vmatprep.subr.mxu0 0.0
    %1465 = vmatpush1.msra.mxu0 0.0
    %1466 = vmatprep.subr.mxu0 0.0
    %1467 = vmatpush1.msra.mxu0 0.0
    %1468 = vmatprep.subr.mxu0 0.0
    %1469 = vmatpush1.msra.mxu0 0.0
    %1470 = vmatprep.subr.mxu0 0.0
    %1471 = vmatpush1.msra.mxu0 0.0
    %1472 = vmatprep.subr.mxu0 0.0
    %1473 = vmatpush1.msra.mxu0 0.0
    %1474 = vmatprep.subr.mxu0 0.0
    %1475 = vmatpush1.msra.mxu0 0.0
    %1476 = vmatprep.subr.mxu0 0.0
    %1477 = vmatpush1.msra.mxu0 0.0
    %1478 = vmatprep.subr.mxu0 0.0
    %1479 = vmatpush1.msra.mxu0 0.0
    %1480 = vmatprep.subr.mxu0 0.0
    %1481 = vmatpush1.msra.mxu0 0.0
    %1482 = vmatprep.subr.mxu0 0.0
    %1483 = vmatpush1.msra.mxu0 0.0
    %1484 = vmatprep.mubr.f32.mxu0 0.0
    %1485 = vmatmul.mubr.f32.gmra.mrb[0].mxu0 %v1415
    %v1486 = vpop.f32.mrb[0].mxu0
    %v1487 = vadd.f32 0.0, %v1486
    %v1488 = vpop.f32.mrb[0].mxu0
    %1489 = vmatprep.mubr.f32.mxu0 0.0
    %1490 = vmatmul.mubr.f32.gmra.mrb[0].mxu0 %v1418
    %v1491 = vpop.f32.mrb[0].mxu0
    %v1492 = vadd.f32 0.0, %v1491
    %v1493 = vpop.f32.mrb[0].mxu0
    %1494 = vdwg.mxu0
    %v1495 = vlaneseq
    %v1496 = vshrl.u32 %v1495, 7
    %v1497 = vsub.s32 0, %v1496
    %v1498 = vrot.slane %v769, %v1497
    %1500 = vbcast.lane.b32.xlu0 %v1498, 256
    %v1501 = vpop.permute.xlu0 %1500
    %s1503 = sor.u32 256, 8
    %1504 = vbcast.lane.b32.xlu0 %v1498, %s1503
    %v1505 = vpop.permute.xlu0 %1504
    %v1506 = vlaneseq
    %v1507 = vshrl.u32 %v1506, 7
    %v1508 = vsub.s32 1, %v1507
    %v1509 = vrot.slane %v769, %v1508
    %1511 = vbcast.lane.b32.xlu0 %v1509, 256
    %v1512 = vpop.permute.xlu0 %1511
    %s1514 = sor.u32 256, 8
    %1515 = vbcast.lane.b32.xlu0 %v1509, %s1514
    %v1516 = vpop.permute.xlu0 %1515
    %v1517 = vlaneseq
    %v1518 = vshrl.u32 %v1517, 7
    %v1519 = vsub.s32 2, %v1518
    %v1520 = vrot.slane %v769, %v1519
    %1522 = vbcast.lane.b32.xlu0 %v1520, 256
    %v1523 = vpop.permute.xlu0 %1522
    %s1525 = sor.u32 256, 8
    %1526 = vbcast.lane.b32.xlu0 %v1520, %s1525
    %v1527 = vpop.permute.xlu0 %1526
    %v1528 = vlaneseq
    %v1529 = vshrl.u32 %v1528, 7
    %v1530 = vsub.s32 3, %v1529
    %v1531 = vrot.slane %v769, %v1530
    %1533 = vbcast.lane.b32.xlu0 %v1531, 256
    %v1534 = vpop.permute.xlu0 %1533
    %s1536 = sor.u32 256, 8
    %1537 = vbcast.lane.b32.xlu0 %v1531, %s1536
    %v1538 = vpop.permute.xlu0 %1537
    %v1539 = vlaneseq
    %v1540 = vshrl.u32 %v1539, 7
    %v1541 = vsub.s32 4, %v1540
    %v1542 = vrot.slane %v769, %v1541
    %1544 = vbcast.lane.b32.xlu0 %v1542, 256
    %v1545 = vpop.permute.xlu0 %1544
    %s1547 = sor.u32 256, 8
    %1548 = vbcast.lane.b32.xlu0 %v1542, %s1547
    %v1549 = vpop.permute.xlu0 %1548
    %v1550 = vlaneseq
    %v1551 = vshrl.u32 %v1550, 7
    %v1552 = vsub.s32 5, %v1551
    %v1553 = vrot.slane %v769, %v1552
    %1555 = vbcast.lane.b32.xlu0 %v1553, 256
    %v1556 = vpop.permute.xlu0 %1555
    %s1558 = sor.u32 256, 8
    %1559 = vbcast.lane.b32.xlu0 %v1553, %s1558
    %v1560 = vpop.permute.xlu0 %1559
    %v1561 = vlaneseq
    %v1562 = vshrl.u32 %v1561, 7
    %v1563 = vsub.s32 6, %v1562
    %v1564 = vrot.slane %v769, %v1563
    %1566 = vbcast.lane.b32.xlu0 %v1564, 256
    %v1567 = vpop.permute.xlu0 %1566
    %s1569 = sor.u32 256, 8
    %1570 = vbcast.lane.b32.xlu0 %v1564, %s1569
    %v1571 = vpop.permute.xlu0 %1570
    %v1572 = vlaneseq
    %v1573 = vshrl.u32 %v1572, 7
    %v1574 = vsub.s32 7, %v1573
    %v1575 = vrot.slane %v769, %v1574
    %1577 = vbcast.lane.b32.xlu0 %v1575, 256
    %v1578 = vpop.permute.xlu0 %1577
    %s1580 = sor.u32 256, 8
    %1581 = vbcast.lane.b32.xlu0 %v1575, %s1580
    %v1582 = vpop.permute.xlu0 %1581
    %v1583 = vmul.f32 %v1501, %v47
    %v1584 = vmul.f32 %v1505, %v48
    %v1585 = vmul.f32 %v1512, %v47
    %v1586 = vmul.f32 %v1516, %v48
    %v1587 = vmul.f32 %v1523, %v47
    %v1588 = vmul.f32 %v1527, %v48
    %v1589 = vmul.f32 %v1534, %v47
    %v1590 = vmul.f32 %v1538, %v48
    %v1591 = vmul.f32 %v1545, %v47
    %v1592 = vmul.f32 %v1549, %v48
    %v1593 = vmul.f32 %v1556, %v47
    %v1594 = vmul.f32 %v1560, %v48
    %v1595 = vmul.f32 %v1567, %v47
    %v1596 = vmul.f32 %v1571, %v48
    %v1597 = vmul.f32 %v1578, %v47
    %v1598 = vmul.f32 %v1582, %v48
    %v1600 = vsel %vm293, %v542, 0
    %v1603 = vsel %vm293, %v543, 0
    %1605 = vmatprep.subr.mxu0 0.0
    %1606 = vmatpush1.msra.mxu0 %v920
    %1607 = vmatprep.subr.mxu0 0.0
    %1608 = vmatpush1.msra.mxu0 %v925
    %1609 = vmatprep.subr.mxu0 0.0
    %1610 = vmatpush1.msra.mxu0 0.0
    %1611 = vmatprep.subr.mxu0 0.0
    %1612 = vmatpush1.msra.mxu0 0.0
    %1613 = vmatprep.subr.mxu0 0.0
    %1614 = vmatpush1.msra.mxu0 0.0
    %1615 = vmatprep.subr.mxu0 0.0
    %1616 = vmatpush1.msra.mxu0 0.0
    %1617 = vmatprep.subr.mxu0 0.0
    %1618 = vmatpush1.msra.mxu0 0.0
    %1619 = vmatprep.subr.mxu0 0.0
    %1620 = vmatpush1.msra.mxu0 0.0
    %1621 = vmatprep.subr.mxu0 0.0
    %1622 = vmatpush1.msra.mxu0 0.0
    %1623 = vmatprep.subr.mxu0 0.0
    %1624 = vmatpush1.msra.mxu0 0.0
    %1625 = vmatprep.subr.mxu0 0.0
    %1626 = vmatpush1.msra.mxu0 0.0
    %1627 = vmatprep.subr.mxu0 0.0
    %1628 = vmatpush1.msra.mxu0 0.0
    %1629 = vmatprep.subr.mxu0 0.0
    %1630 = vmatpush1.msra.mxu0 0.0
    %1631 = vmatprep.subr.mxu0 0.0
    %1632 = vmatpush1.msra.mxu0 0.0
    %1633 = vmatprep.subr.mxu0 0.0
    %1634 = vmatpush1.msra.mxu0 0.0
    %1635 = vmatprep.subr.mxu0 0.0
    %1636 = vmatpush1.msra.mxu0 0.0
    %1637 = vmatprep.subr.mxu0 0.0
    %1638 = vmatpush1.msra.mxu0 0.0
    %1639 = vmatprep.subr.mxu0 0.0
    %1640 = vmatpush1.msra.mxu0 0.0
    %1641 = vmatprep.subr.mxu0 0.0
    %1642 = vmatpush1.msra.mxu0 0.0
    %1643 = vmatprep.subr.mxu0 0.0
    %1644 = vmatpush1.msra.mxu0 0.0
    %1645 = vmatprep.subr.mxu0 0.0
    %1646 = vmatpush1.msra.mxu0 0.0
    %1647 = vmatprep.subr.mxu0 0.0
    %1648 = vmatpush1.msra.mxu0 0.0
    %1649 = vmatprep.subr.mxu0 0.0
    %1650 = vmatpush1.msra.mxu0 0.0
    %1651 = vmatprep.subr.mxu0 0.0
    %1652 = vmatpush1.msra.mxu0 0.0
    %1653 = vmatprep.subr.mxu0 0.0
    %1654 = vmatpush1.msra.mxu0 0.0
    %1655 = vmatprep.subr.mxu0 0.0
    %1656 = vmatpush1.msra.mxu0 0.0
    %1657 = vmatprep.subr.mxu0 0.0
    %1658 = vmatpush1.msra.mxu0 0.0
    %1659 = vmatprep.subr.mxu0 0.0
    %1660 = vmatpush1.msra.mxu0 0.0
    %1661 = vmatprep.subr.mxu0 0.0
    %1662 = vmatpush1.msra.mxu0 0.0
    %1663 = vmatprep.subr.mxu0 0.0
    %1664 = vmatpush1.msra.mxu0 0.0
    %1665 = vmatprep.subr.mxu0 0.0
    %1666 = vmatpush1.msra.mxu0 0.0
    %1667 = vmatprep.subr.mxu0 0.0
    %1668 = vmatpush1.msra.mxu0 0.0
    %1669 = vmatprep.mubr.f32.mxu0 0.0
    %1670 = vmatmul.mubr.f32.gmra.mrb[0].mxu0 %v1600
    %v1671 = vpop.f32.mrb[0].mxu0
    %v1672 = vadd.f32 %v1583, %v1671
    %v1673 = vpop.f32.mrb[0].mxu0
    %1674 = vmatprep.mubr.f32.mxu0 0.0
    %1675 = vmatmul.mubr.f32.gmra.mrb[0].mxu0 %v1603
    %v1676 = vpop.f32.mrb[0].mxu0
    %v1677 = vadd.f32 %v1584, %v1676
    %v1678 = vpop.f32.mrb[0].mxu0
    %1679 = vdwg.mxu0
    %1680 = vmatprep.subr.mxu0 0.0
    %1681 = vmatpush1.msra.mxu0 %v1001
    %1682 = vmatprep.subr.mxu0 0.0
    %1683 = vmatpush1.msra.mxu0 %v1006
    %1684 = vmatprep.subr.mxu0 0.0
    %1685 = vmatpush1.msra.mxu0 0.0
    %1686 = vmatprep.subr.mxu0 0.0
    %1687 = vmatpush1.msra.mxu0 0.0
    %1688 = vmatprep.subr.mxu0 0.0
    %1689 = vmatpush1.msra.mxu0 0.0
    %1690 = vmatprep.subr.mxu0 0.0
    %1691 = vmatpush1.msra.mxu0 0.0
    %1692 = vmatprep.subr.mxu0 0.0
    %1693 = vmatpush1.msra.mxu0 0.0
    %1694 = vmatprep.subr.mxu0 0.0
    %1695 = vmatpush1.msra.mxu0 0.0
    %1696 = vmatprep.subr.mxu0 0.0
    %1697 = vmatpush1.msra.mxu0 0.0
    %1698 = vmatprep.subr.mxu0 0.0
    %1699 = vmatpush1.msra.mxu0 0.0
    %1700 = vmatprep.subr.mxu0 0.0
    %1701 = vmatpush1.msra.mxu0 0.0
    %1702 = vmatprep.subr.mxu0 0.0
    %1703 = vmatpush1.msra.mxu0 0.0
    %1704 = vmatprep.subr.mxu0 0.0
    %1705 = vmatpush1.msra.mxu0 0.0
    %1706 = vmatprep.subr.mxu0 0.0
    %1707 = vmatpush1.msra.mxu0 0.0
    %1708 = vmatprep.subr.mxu0 0.0
    %1709 = vmatpush1.msra.mxu0 0.0
    %1710 = vmatprep.subr.mxu0 0.0
    %1711 = vmatpush1.msra.mxu0 0.0
    %1712 = vmatprep.subr.mxu0 0.0
    %1713 = vmatpush1.msra.mxu0 0.0
    %1714 = vmatprep.subr.mxu0 0.0
    %1715 = vmatpush1.msra.mxu0 0.0
    %1716 = vmatprep.subr.mxu0 0.0
    %1717 = vmatpush1.msra.mxu0 0.0
    %1718 = vmatprep.subr.mxu0 0.0
    %1719 = vmatpush1.msra.mxu0 0.0
    %1720 = vmatprep.subr.mxu0 0.0
    %1721 = vmatpush1.msra.mxu0 0.0
    %1722 = vmatprep.subr.mxu0 0.0
    %1723 = vmatpush1.msra.mxu0 0.0
    %1724 = vmatprep.subr.mxu0 0.0
    %1725 = vmatpush1.msra.mxu0 0.0
    %1726 = vmatprep.subr.mxu0 0.0
    %1727 = vmatpush1.msra.mxu0 0.0
    %1728 = vmatprep.subr.mxu0 0.0
    %1729 = vmatpush1.msra.mxu0 0.0
    %1730 = vmatprep.subr.mxu0 0.0
    %1731 = vmatpush1.msra.mxu0 0.0
    %1732 = vmatprep.subr.mxu0 0.0
    %1733 = vmatpush1.msra.mxu0 0.0
    %1734 = vmatprep.subr.mxu0 0.0
    %1735 = vmatpush1.msra.mxu0 0.0
    %1736 = vmatprep.subr.mxu0 0.0
    %1737 = vmatpush1.msra.mxu0 0.0
    %1738 = vmatprep.subr.mxu0 0.0
    %1739 = vmatpush1.msra.mxu0 0.0
    %1740 = vmatprep.subr.mxu0 0.0
    %1741 = vmatpush1.msra.mxu0 0.0
    %1742 = vmatprep.subr.mxu0 0.0
    %1743 = vmatpush1.msra.mxu0 0.0
    %1744 = vmatprep.mubr.f32.mxu0 0.0
    %1745 = vmatmul.mubr.f32.gmra.mrb[0].mxu0 %v1600
    %v1746 = vpop.f32.mrb[0].mxu0
    %v1747 = vadd.f32 %v1585, %v1746
    %v1748 = vpop.f32.mrb[0].mxu0
    %1749 = vmatprep.mubr.f32.mxu0 0.0
    %1750 = vmatmul.mubr.f32.gmra.mrb[0].mxu0 %v1603
    %v1751 = vpop.f32.mrb[0].mxu0
    %v1752 = vadd.f32 %v1586, %v1751
    %v1753 = vpop.f32.mrb[0].mxu0
    %1754 = vdwg.mxu0
    %1755 = vmatprep.subr.mxu0 0.0
    %1756 = vmatpush1.msra.mxu0 %v1082
    %1757 = vmatprep.subr.mxu0 0.0
    %1758 = vmatpush1.msra.mxu0 %v1087
    %1759 = vmatprep.subr.mxu0 0.0
    %1760 = vmatpush1.msra.mxu0 0.0
    %1761 = vmatprep.subr.mxu0 0.0
    %1762 = vmatpush1.msra.mxu0 0.0
    %1763 = vmatprep.subr.mxu0 0.0
    %1764 = vmatpush1.msra.mxu0 0.0
    %1765 = vmatprep.subr.mxu0 0.0
    %1766 = vmatpush1.msra.mxu0 0.0
    %1767 = vmatprep.subr.mxu0 0.0
    %1768 = vmatpush1.msra.mxu0 0.0
    %1769 = vmatprep.subr.mxu0 0.0
    %1770 = vmatpush1.msra.mxu0 0.0
    %1771 = vmatprep.subr.mxu0 0.0
    %1772 = vmatpush1.msra.mxu0 0.0
    %1773 = vmatprep.subr.mxu0 0.0
    %1774 = vmatpush1.msra.mxu0 0.0
    %1775 = vmatprep.subr.mxu0 0.0
    %1776 = vmatpush1.msra.mxu0 0.0
    %1777 = vmatprep.subr.mxu0 0.0
    %1778 = vmatpush1.msra.mxu0 0.0
    %1779 = vmatprep.subr.mxu0 0.0
    %1780 = vmatpush1.msra.mxu0 0.0
    %1781 = vmatprep.subr.mxu0 0.0
    %1782 = vmatpush1.msra.mxu0 0.0
    %1783 = vmatprep.subr.mxu0 0.0
    %1784 = vmatpush1.msra.mxu0 0.0
    %1785 = vmatprep.subr.mxu0 0.0
    %1786 = vmatpush1.msra.mxu0 0.0
    %1787 = vmatprep.subr.mxu0 0.0
    %1788 = vmatpush1.msra.mxu0 0.0
    %1789 = vmatprep.subr.mxu0 0.0
    %1790 = vmatpush1.msra.mxu0 0.0
    %1791 = vmatprep.subr.mxu0 0.0
    %1792 = vmatpush1.msra.mxu0 0.0
    %1793 = vmatprep.subr.mxu0 0.0
    %1794 = vmatpush1.msra.mxu0 0.0
    %1795 = vmatprep.subr.mxu0 0.0
    %1796 = vmatpush1.msra.mxu0 0.0
    %1797 = vmatprep.subr.mxu0 0.0
    %1798 = vmatpush1.msra.mxu0 0.0
    %1799 = vmatprep.subr.mxu0 0.0
    %1800 = vmatpush1.msra.mxu0 0.0
    %1801 = vmatprep.subr.mxu0 0.0
    %1802 = vmatpush1.msra.mxu0 0.0
    %1803 = vmatprep.subr.mxu0 0.0
    %1804 = vmatpush1.msra.mxu0 0.0
    %1805 = vmatprep.subr.mxu0 0.0
    %1806 = vmatpush1.msra.mxu0 0.0
    %1807 = vmatprep.subr.mxu0 0.0
    %1808 = vmatpush1.msra.mxu0 0.0
    %1809 = vmatprep.subr.mxu0 0.0
    %1810 = vmatpush1.msra.mxu0 0.0
    %1811 = vmatprep.subr.mxu0 0.0
    %1812 = vmatpush1.msra.mxu0 0.0
    %1813 = vmatprep.subr.mxu0 0.0
    %1814 = vmatpush1.msra.mxu0 0.0
    %1815 = vmatprep.subr.mxu0 0.0
    %1816 = vmatpush1.msra.mxu0 0.0
    %1817 = vmatprep.subr.mxu0 0.0
    %1818 = vmatpush1.msra.mxu0 0.0
    %1819 = vmatprep.mubr.f32.mxu0 0.0
    %1820 = vmatmul.mubr.f32.gmra.mrb[0].mxu0 %v1600
    %v1821 = vpop.f32.mrb[0].mxu0
    %v1822 = vadd.f32 %v1587, %v1821
    %v1823 = vpop.f32.mrb[0].mxu0
    %1824 = vmatprep.mubr.f32.mxu0 0.0
    %1825 = vmatmul.mubr.f32.gmra.mrb[0].mxu0 %v1603
    %v1826 = vpop.f32.mrb[0].mxu0
    %v1827 = vadd.f32 %v1588, %v1826
    %v1828 = vpop.f32.mrb[0].mxu0
    %1829 = vdwg.mxu0
    %1830 = vmatprep.subr.mxu0 0.0
    %1831 = vmatpush1.msra.mxu0 %v1163
    %1832 = vmatprep.subr.mxu0 0.0
    %1833 = vmatpush1.msra.mxu0 %v1168
    %1834 = vmatprep.subr.mxu0 0.0
    %1835 = vmatpush1.msra.mxu0 0.0
    %1836 = vmatprep.subr.mxu0 0.0
    %1837 = vmatpush1.msra.mxu0 0.0
    %1838 = vmatprep.subr.mxu0 0.0
    %1839 = vmatpush1.msra.mxu0 0.0
    %1840 = vmatprep.subr.mxu0 0.0
    %1841 = vmatpush1.msra.mxu0 0.0
    %1842 = vmatprep.subr.mxu0 0.0
    %1843 = vmatpush1.msra.mxu0 0.0
    %1844 = vmatprep.subr.mxu0 0.0
    %1845 = vmatpush1.msra.mxu0 0.0
    %1846 = vmatprep.subr.mxu0 0.0
    %1847 = vmatpush1.msra.mxu0 0.0
    %1848 = vmatprep.subr.mxu0 0.0
    %1849 = vmatpush1.msra.mxu0 0.0
    %1850 = vmatprep.subr.mxu0 0.0
    %1851 = vmatpush1.msra.mxu0 0.0
    %1852 = vmatprep.subr.mxu0 0.0
    %1853 = vmatpush1.msra.mxu0 0.0
    %1854 = vmatprep.subr.mxu0 0.0
    %1855 = vmatpush1.msra.mxu0 0.0
    %1856 = vmatprep.subr.mxu0 0.0
    %1857 = vmatpush1.msra.mxu0 0.0
    %1858 = vmatprep.subr.mxu0 0.0
    %1859 = vmatpush1.msra.mxu0 0.0
    %1860 = vmatprep.subr.mxu0 0.0
    %1861 = vmatpush1.msra.mxu0 0.0
    %1862 = vmatprep.subr.mxu0 0.0
    %1863 = vmatpush1.msra.mxu0 0.0
    %1864 = vmatprep.subr.mxu0 0.0
    %1865 = vmatpush1.msra.mxu0 0.0
    %1866 = vmatprep.subr.mxu0 0.0
    %1867 = vmatpush1.msra.mxu0 0.0
    %1868 = vmatprep.subr.mxu0 0.0
    %1869 = vmatpush1.msra.mxu0 0.0
    %1870 = vmatprep.subr.mxu0 0.0
    %1871 = vmatpush1.msra.mxu0 0.0
    %1872 = vmatprep.subr.mxu0 0.0
    %1873 = vmatpush1.msra.mxu0 0.0
    %1874 = vmatprep.subr.mxu0 0.0
    %1875 = vmatpush1.msra.mxu0 0.0
    %1876 = vmatprep.subr.mxu0 0.0
    %1877 = vmatpush1.msra.mxu0 0.0
    %1878 = vmatprep.subr.mxu0 0.0
    %1879 = vmatpush1.msra.mxu0 0.0
    %1880 = vmatprep.subr.mxu0 0.0
    %1881 = vmatpush1.msra.mxu0 0.0
    %1882 = vmatprep.subr.mxu0 0.0
    %1883 = vmatpush1.msra.mxu0 0.0
    %1884 = vmatprep.subr.mxu0 0.0
    %1885 = vmatpush1.msra.mxu0 0.0
    %1886 = vmatprep.subr.mxu0 0.0
    %1887 = vmatpush1.msra.mxu0 0.0
    %1888 = vmatprep.subr.mxu0 0.0
    %1889 = vmatpush1.msra.mxu0 0.0
    %1890 = vmatprep.subr.mxu0 0.0
    %1891 = vmatpush1.msra.mxu0 0.0
    %1892 = vmatprep.subr.mxu0 0.0
    %1893 = vmatpush1.msra.mxu0 0.0
    %1894 = vmatprep.mubr.f32.mxu0 0.0
    %1895 = vmatmul.mubr.f32.gmra.mrb[0].mxu0 %v1600
    %v1896 = vpop.f32.mrb[0].mxu0
    %v1897 = vadd.f32 %v1589, %v1896
    %v1898 = vpop.f32.mrb[0].mxu0
    %1899 = vmatprep.mubr.f32.mxu0 0.0
    %1900 = vmatmul.mubr.f32.gmra.mrb[0].mxu0 %v1603
    %v1901 = vpop.f32.mrb[0].mxu0
    %v1902 = vadd.f32 %v1590, %v1901
    %v1903 = vpop.f32.mrb[0].mxu0
    %1904 = vdwg.mxu0
    %1905 = vmatprep.subr.mxu0 0.0
    %1906 = vmatpush1.msra.mxu0 %v1244
    %1907 = vmatprep.subr.mxu0 0.0
    %1908 = vmatpush1.msra.mxu0 %v1249
    %1909 = vmatprep.subr.mxu0 0.0
    %1910 = vmatpush1.msra.mxu0 0.0
    %1911 = vmatprep.subr.mxu0 0.0
    %1912 = vmatpush1.msra.mxu0 0.0
    %1913 = vmatprep.subr.mxu0 0.0
    %1914 = vmatpush1.msra.mxu0 0.0
    %1915 = vmatprep.subr.mxu0 0.0
    %1916 = vmatpush1.msra.mxu0 0.0
    %1917 = vmatprep.subr.mxu0 0.0
    %1918 = vmatpush1.msra.mxu0 0.0
    %1919 = vmatprep.subr.mxu0 0.0
    %1920 = vmatpush1.msra.mxu0 0.0
    %1921 = vmatprep.subr.mxu0 0.0
    %1922 = vmatpush1.msra.mxu0 0.0
    %1923 = vmatprep.subr.mxu0 0.0
    %1924 = vmatpush1.msra.mxu0 0.0
    %1925 = vmatprep.subr.mxu0 0.0
    %1926 = vmatpush1.msra.mxu0 0.0
    %1927 = vmatprep.subr.mxu0 0.0
    %1928 = vmatpush1.msra.mxu0 0.0
    %1929 = vmatprep.subr.mxu0 0.0
    %1930 = vmatpush1.msra.mxu0 0.0
    %1931 = vmatprep.subr.mxu0 0.0
    %1932 = vmatpush1.msra.mxu0 0.0
    %1933 = vmatprep.subr.mxu0 0.0
    %1934 = vmatpush1.msra.mxu0 0.0
    %1935 = vmatprep.subr.mxu0 0.0
    %1936 = vmatpush1.msra.mxu0 0.0
    %1937 = vmatprep.subr.mxu0 0.0
    %1938 = vmatpush1.msra.mxu0 0.0
    %1939 = vmatprep.subr.mxu0 0.0
    %1940 = vmatpush1.msra.mxu0 0.0
    %1941 = vmatprep.subr.mxu0 0.0
    %1942 = vmatpush1.msra.mxu0 0.0
    %1943 = vmatprep.subr.mxu0 0.0
    %1944 = vmatpush1.msra.mxu0 0.0
    %1945 = vmatprep.subr.mxu0 0.0
    %1946 = vmatpush1.msra.mxu0 0.0
    %1947 = vmatprep.subr.mxu0 0.0
    %1948 = vmatpush1.msra.mxu0 0.0
    %1949 = vmatprep.subr.mxu0 0.0
    %1950 = vmatpush1.msra.mxu0 0.0
    %1951 = vmatprep.subr.mxu0 0.0
    %1952 = vmatpush1.msra.mxu0 0.0
    %1953 = vmatprep.subr.mxu0 0.0
    %1954 = vmatpush1.msra.mxu0 0.0
    %1955 = vmatprep.subr.mxu0 0.0
    %1956 = vmatpush1.msra.mxu0 0.0
    %1957 = vmatprep.subr.mxu0 0.0
    %1958 = vmatpush1.msra.mxu0 0.0
    %1959 = vmatprep.subr.mxu0 0.0
    %1960 = vmatpush1.msra.mxu0 0.0
    %1961 = vmatprep.subr.mxu0 0.0
    %1962 = vmatpush1.msra.mxu0 0.0
    %1963 = vmatprep.subr.mxu0 0.0
    %1964 = vmatpush1.msra.mxu0 0.0
    %1965 = vmatprep.subr.mxu0 0.0
    %1966 = vmatpush1.msra.mxu0 0.0
    %1967 = vmatprep.subr.mxu0 0.0
    %1968 = vmatpush1.msra.mxu0 0.0
    %1969 = vmatprep.mubr.f32.mxu0 0.0
    %1970 = vmatmul.mubr.f32.gmra.mrb[0].mxu0 %v1600
    %v1971 = vpop.f32.mrb[0].mxu0
    %v1972 = vadd.f32 %v1591, %v1971
    %v1973 = vpop.f32.mrb[0].mxu0
    %1974 = vmatprep.mubr.f32.mxu0 0.0
    %1975 = vmatmul.mubr.f32.gmra.mrb[0].mxu0 %v1603
    %v1976 = vpop.f32.mrb[0].mxu0
    %v1977 = vadd.f32 %v1592, %v1976
    %v1978 = vpop.f32.mrb[0].mxu0
    %1979 = vdwg.mxu0
    %1980 = vmatprep.subr.mxu0 0.0
    %1981 = vmatpush1.msra.mxu0 %v1325
    %1982 = vmatprep.subr.mxu0 0.0
    %1983 = vmatpush1.msra.mxu0 %v1330
    %1984 = vmatprep.subr.mxu0 0.0
    %1985 = vmatpush1.msra.mxu0 0.0
    %1986 = vmatprep.subr.mxu0 0.0
    %1987 = vmatpush1.msra.mxu0 0.0
    %1988 = vmatprep.subr.mxu0 0.0
    %1989 = vmatpush1.msra.mxu0 0.0
    %1990 = vmatprep.subr.mxu0 0.0
    %1991 = vmatpush1.msra.mxu0 0.0
    %1992 = vmatprep.subr.mxu0 0.0
    %1993 = vmatpush1.msra.mxu0 0.0
    %1994 = vmatprep.subr.mxu0 0.0
    %1995 = vmatpush1.msra.mxu0 0.0
    %1996 = vmatprep.subr.mxu0 0.0
    %1997 = vmatpush1.msra.mxu0 0.0
    %1998 = vmatprep.subr.mxu0 0.0
    %1999 = vmatpush1.msra.mxu0 0.0
    %2000 = vmatprep.subr.mxu0 0.0
    %2001 = vmatpush1.msra.mxu0 0.0
    %2002 = vmatprep.subr.mxu0 0.0
    %2003 = vmatpush1.msra.mxu0 0.0
    %2004 = vmatprep.subr.mxu0 0.0
    %2005 = vmatpush1.msra.mxu0 0.0
    %2006 = vmatprep.subr.mxu0 0.0
    %2007 = vmatpush1.msra.mxu0 0.0
    %2008 = vmatprep.subr.mxu0 0.0
    %2009 = vmatpush1.msra.mxu0 0.0
    %2010 = vmatprep.subr.mxu0 0.0
    %2011 = vmatpush1.msra.mxu0 0.0
    %2012 = vmatprep.subr.mxu0 0.0
    %2013 = vmatpush1.msra.mxu0 0.0
    %2014 = vmatprep.subr.mxu0 0.0
    %2015 = vmatpush1.msra.mxu0 0.0
    %2016 = vmatprep.subr.mxu0 0.0
    %2017 = vmatpush1.msra.mxu0 0.0
    %2018 = vmatprep.subr.mxu0 0.0
    %2019 = vmatpush1.msra.mxu0 0.0
    %2020 = vmatprep.subr.mxu0 0.0
    %2021 = vmatpush1.msra.mxu0 0.0
    %2022 = vmatprep.subr.mxu0 0.0
    %2023 = vmatpush1.msra.mxu0 0.0
    %2024 = vmatprep.subr.mxu0 0.0
    %2025 = vmatpush1.msra.mxu0 0.0
    %2026 = vmatprep.subr.mxu0 0.0
    %2027 = vmatpush1.msra.mxu0 0.0
    %2028 = vmatprep.subr.mxu0 0.0
    %2029 = vmatpush1.msra.mxu0 0.0
    %2030 = vmatprep.subr.mxu0 0.0
    %2031 = vmatpush1.msra.mxu0 0.0
    %2032 = vmatprep.subr.mxu0 0.0
    %2033 = vmatpush1.msra.mxu0 0.0
    %2034 = vmatprep.subr.mxu0 0.0
    %2035 = vmatpush1.msra.mxu0 0.0
    %2036 = vmatprep.subr.mxu0 0.0
    %2037 = vmatpush1.msra.mxu0 0.0
    %2038 = vmatprep.subr.mxu0 0.0
    %2039 = vmatpush1.msra.mxu0 0.0
    %2040 = vmatprep.subr.mxu0 0.0
    %2041 = vmatpush1.msra.mxu0 0.0
    %2042 = vmatprep.subr.mxu0 0.0
    %2043 = vmatpush1.msra.mxu0 0.0
    %2044 = vmatprep.mubr.f32.mxu0 0.0
    %2045 = vmatmul.mubr.f32.gmra.mrb[0].mxu0 %v1600
    %v2046 = vpop.f32.mrb[0].mxu0
    %v2047 = vadd.f32 %v1593, %v2046
    %v2048 = vpop.f32.mrb[0].mxu0
    %2049 = vmatprep.mubr.f32.mxu0 0.0
    %2050 = vmatmul.mubr.f32.gmra.mrb[0].mxu0 %v1603
    %v2051 = vpop.f32.mrb[0].mxu0
    %v2052 = vadd.f32 %v1594, %v2051
    %v2053 = vpop.f32.mrb[0].mxu0
    %2054 = vdwg.mxu0
    %2055 = vmatprep.subr.mxu0 0.0
    %2056 = vmatpush1.msra.mxu0 %v1406
    %2057 = vmatprep.subr.mxu0 0.0
    %2058 = vmatpush1.msra.mxu0 %v1411
    %2059 = vmatprep.subr.mxu0 0.0
    %2060 = vmatpush1.msra.mxu0 0.0
    %2061 = vmatprep.subr.mxu0 0.0
    %2062 = vmatpush1.msra.mxu0 0.0
    %2063 = vmatprep.subr.mxu0 0.0
    %2064 = vmatpush1.msra.mxu0 0.0
    %2065 = vmatprep.subr.mxu0 0.0
    %2066 = vmatpush1.msra.mxu0 0.0
    %2067 = vmatprep.subr.mxu0 0.0
    %2068 = vmatpush1.msra.mxu0 0.0
    %2069 = vmatprep.subr.mxu0 0.0
    %2070 = vmatpush1.msra.mxu0 0.0
    %2071 = vmatprep.subr.mxu0 0.0
    %2072 = vmatpush1.msra.mxu0 0.0
    %2073 = vmatprep.subr.mxu0 0.0
    %2074 = vmatpush1.msra.mxu0 0.0
    %2075 = vmatprep.subr.mxu0 0.0
    %2076 = vmatpush1.msra.mxu0 0.0
    %2077 = vmatprep.subr.mxu0 0.0
    %2078 = vmatpush1.msra.mxu0 0.0
    %2079 = vmatprep.subr.mxu0 0.0
    %2080 = vmatpush1.msra.mxu0 0.0
    %2081 = vmatprep.subr.mxu0 0.0
    %2082 = vmatpush1.msra.mxu0 0.0
    %2083 = vmatprep.subr.mxu0 0.0
    %2084 = vmatpush1.msra.mxu0 0.0
    %2085 = vmatprep.subr.mxu0 0.0
    %2086 = vmatpush1.msra.mxu0 0.0
    %2087 = vmatprep.subr.mxu0 0.0
    %2088 = vmatpush1.msra.mxu0 0.0
    %2089 = vmatprep.subr.mxu0 0.0
    %2090 = vmatpush1.msra.mxu0 0.0
    %2091 = vmatprep.subr.mxu0 0.0
    %2092 = vmatpush1.msra.mxu0 0.0
    %2093 = vmatprep.subr.mxu0 0.0
    %2094 = vmatpush1.msra.mxu0 0.0
    %2095 = vmatprep.subr.mxu0 0.0
    %2096 = vmatpush1.msra.mxu0 0.0
    %2097 = vmatprep.subr.mxu0 0.0
    %2098 = vmatpush1.msra.mxu0 0.0
    %2099 = vmatprep.subr.mxu0 0.0
    %2100 = vmatpush1.msra.mxu0 0.0
    %2101 = vmatprep.subr.mxu0 0.0
    %2102 = vmatpush1.msra.mxu0 0.0
    %2103 = vmatprep.subr.mxu0 0.0
    %2104 = vmatpush1.msra.mxu0 0.0
    %2105 = vmatprep.subr.mxu0 0.0
    %2106 = vmatpush1.msra.mxu0 0.0
    %2107 = vmatprep.subr.mxu0 0.0
    %2108 = vmatpush1.msra.mxu0 0.0
    %2109 = vmatprep.subr.mxu0 0.0
    %2110 = vmatpush1.msra.mxu0 0.0
    %2111 = vmatprep.subr.mxu0 0.0
    %2112 = vmatpush1.msra.mxu0 0.0
    %2113 = vmatprep.subr.mxu0 0.0
    %2114 = vmatpush1.msra.mxu0 0.0
    %2115 = vmatprep.subr.mxu0 0.0
    %2116 = vmatpush1.msra.mxu0 0.0
    %2117 = vmatprep.subr.mxu0 0.0
    %2118 = vmatpush1.msra.mxu0 0.0
    %2119 = vmatprep.mubr.f32.mxu0 0.0
    %2120 = vmatmul.mubr.f32.gmra.mrb[0].mxu0 %v1600
    %v2121 = vpop.f32.mrb[0].mxu0
    %v2122 = vadd.f32 %v1595, %v2121
    %v2123 = vpop.f32.mrb[0].mxu0
    %2124 = vmatprep.mubr.f32.mxu0 0.0
    %2125 = vmatmul.mubr.f32.gmra.mrb[0].mxu0 %v1603
    %v2126 = vpop.f32.mrb[0].mxu0
    %v2127 = vadd.f32 %v1596, %v2126
    %v2128 = vpop.f32.mrb[0].mxu0
    %2129 = vdwg.mxu0
    %2130 = vmatprep.subr.mxu0 0.0
    %2131 = vmatpush1.msra.mxu0 %v1487
    %2132 = vmatprep.subr.mxu0 0.0
    %2133 = vmatpush1.msra.mxu0 %v1492
    %2134 = vmatprep.subr.mxu0 0.0
    %2135 = vmatpush1.msra.mxu0 0.0
    %2136 = vmatprep.subr.mxu0 0.0
    %2137 = vmatpush1.msra.mxu0 0.0
    %2138 = vmatprep.subr.mxu0 0.0
    %2139 = vmatpush1.msra.mxu0 0.0
    %2140 = vmatprep.subr.mxu0 0.0
    %2141 = vmatpush1.msra.mxu0 0.0
    %2142 = vmatprep.subr.mxu0 0.0
    %2143 = vmatpush1.msra.mxu0 0.0
    %2144 = vmatprep.subr.mxu0 0.0
    %2145 = vmatpush1.msra.mxu0 0.0
    %2146 = vmatprep.subr.mxu0 0.0
    %2147 = vmatpush1.msra.mxu0 0.0
    %2148 = vmatprep.subr.mxu0 0.0
    %2149 = vmatpush1.msra.mxu0 0.0
    %2150 = vmatprep.subr.mxu0 0.0
    %2151 = vmatpush1.msra.mxu0 0.0
    %2152 = vmatprep.subr.mxu0 0.0
    %2153 = vmatpush1.msra.mxu0 0.0
    %2154 = vmatprep.subr.mxu0 0.0
    %2155 = vmatpush1.msra.mxu0 0.0
    %2156 = vmatprep.subr.mxu0 0.0
    %2157 = vmatpush1.msra.mxu0 0.0
    %2158 = vmatprep.subr.mxu0 0.0
    %2159 = vmatpush1.msra.mxu0 0.0
    %2160 = vmatprep.subr.mxu0 0.0
    %2161 = vmatpush1.msra.mxu0 0.0
    %2162 = vmatprep.subr.mxu0 0.0
    %2163 = vmatpush1.msra.mxu0 0.0
    %2164 = vmatprep.subr.mxu0 0.0
    %2165 = vmatpush1.msra.mxu0 0.0
    %2166 = vmatprep.subr.mxu0 0.0
    %2167 = vmatpush1.msra.mxu0 0.0
    %2168 = vmatprep.subr.mxu0 0.0
    %2169 = vmatpush1.msra.mxu0 0.0
    %2170 = vmatprep.subr.mxu0 0.0
    %2171 = vmatpush1.msra.mxu0 0.0
    %2172 = vmatprep.subr.mxu0 0.0
    %2173 = vmatpush1.msra.mxu0 0.0
    %2174 = vmatprep.subr.mxu0 0.0
    %2175 = vmatpush1.msra.mxu0 0.0
    %2176 = vmatprep.subr.mxu0 0.0
    %2177 = vmatpush1.msra.mxu0 0.0
    %2178 = vmatprep.subr.mxu0 0.0
    %2179 = vmatpush1.msra.mxu0 0.0
    %2180 = vmatprep.subr.mxu0 0.0
    %2181 = vmatpush1.msra.mxu0 0.0
    %2182 = vmatprep.subr.mxu0 0.0
    %2183 = vmatpush1.msra.mxu0 0.0
    %2184 = vmatprep.subr.mxu0 0.0
    %2185 = vmatpush1.msra.mxu0 0.0
    %2186 = vmatprep.subr.mxu0 0.0
    %2187 = vmatpush1.msra.mxu0 0.0
    %2188 = vmatprep.subr.mxu0 0.0
    %2189 = vmatpush1.msra.mxu0 0.0
    %2190 = vmatprep.subr.mxu0 0.0
    %2191 = vmatpush1.msra.mxu0 0.0
    %2192 = vmatprep.subr.mxu0 0.0
    %2193 = vmatpush1.msra.mxu0 0.0
    %2194 = vmatprep.mubr.f32.mxu0 0.0
    %2195 = vmatmul.mubr.f32.gmra.mrb[0].mxu0 %v1600
    %v2196 = vpop.f32.mrb[0].mxu0
    %v2197 = vadd.f32 %v1597, %v2196
    %v2198 = vpop.f32.mrb[0].mxu0
    %2199 = vmatprep.mubr.f32.mxu0 0.0
    %2200 = vmatmul.mubr.f32.gmra.mrb[0].mxu0 %v1603
    %v2201 = vpop.f32.mrb[0].mxu0
    %v2202 = vadd.f32 %v1598, %v2201
    %v2203 = vpop.f32.mrb[0].mxu0
    %2204 = vdwg.mxu0
    %v2205 = vld [vmem:[#allocation5 + $0x44] sm:$0x1]
    %v2206 = vld [vmem:[#allocation5 + $0x45] sm:$0x1]
    %v2207 = vsel %vm293, %v844, 0.0
    %v2208 = vrot.slane %v2207, 4
    %v2209 = vadd.f32 %v2207, %v2208
    %v2210 = vrot.slane %v2209, 2
    %v2211 = vadd.f32 %v2209, %v2210
    %v2212 = vrot.slane %v2211, 1
    %v2213 = vadd.f32 %v2211, %v2212
    %v2214 = vmul.f32 %v2213, %v301
    %v2215 = vsub.f32 %v844, %v2214
    %v2216 = vmul.f32 %v2215, %v2215
    %v2217 = vsel %vm293, %v2216, 0.0
    %v2218 = vrot.slane %v2217, 4
    %v2219 = vadd.f32 %v2217, %v2218
    %v2220 = vrot.slane %v2219, 2
    %v2221 = vadd.f32 %v2219, %v2220
    %v2222 = vrot.slane %v2221, 1
    %v2223 = vadd.f32 %v2221, %v2222
    %v2224 = vmul.f32 %v2223, %v301
    %v2225 = vlaneseq
    %v2226 = vshrl.u32 %v2225, 7
    %v2227 = vsub.s32 0, %v2226
    %v2228 = vrot.slane %v2205, %v2227
    %v2229 = vmul.f32 %v2228, %v2215
    %v2230 = vadd.f32 %v2224, 1e-05
    %v2231 = vrsqrt.pop %v2230
    %v2232 = vmul.f32 %v2229, %v2231
    %v2233 = vlaneseq
    %v2234 = vshrl.u32 %v2233, 7
    %v2235 = vsub.s32 0, %v2234
    %v2236 = vrot.slane %v2206, %v2235
    %v2237 = vadd.f32 %v2232, %v2236
    %vm2238 = vcmp.gt.f32.partialorder %v2237, 0.0
    %v2239 = vsel %vm2238, 1, 0
    %v2240 = vcvt.s32.f32 %v2239
    %v2241 = vmul.f32 %v2237, %v2240
    %v2242 = vlaneseq
    %v2243 = vshrl.u32 %v2242, 7
    %v2244 = vsub.s32 0, %v2243
    %v2245 = vrot.slane %v2240, %v2244
    %2247 = vbcast.lane.b32.xlu0 %v2245, 256
    %v2248 = vpop.permute.xlu0 %2247
    %s2250 = sor.u32 256, 8
    %2251 = vbcast.lane.b32.xlu0 %v2245, %s2250
    %v2252 = vpop.permute.xlu0 %2251
    %v2253 = vlaneseq
    %v2254 = vshrl.u32 %v2253, 7
    %v2255 = vsub.s32 1, %v2254
    %v2256 = vrot.slane %v2240, %v2255
    %2258 = vbcast.lane.b32.xlu0 %v2256, 256
    %v2259 = vpop.permute.xlu0 %2258
    %s2261 = sor.u32 256, 8
    %2262 = vbcast.lane.b32.xlu0 %v2256, %s2261
    %v2263 = vpop.permute.xlu0 %2262
    %v2264 = vlaneseq
    %v2265 = vshrl.u32 %v2264, 7
    %v2266 = vsub.s32 2, %v2265
    %v2267 = vrot.slane %v2240, %v2266
    %2269 = vbcast.lane.b32.xlu0 %v2267, 256
    %v2270 = vpop.permute.xlu0 %2269
    %s2272 = sor.u32 256, 8
    %2273 = vbcast.lane.b32.xlu0 %v2267, %s2272
    %v2274 = vpop.permute.xlu0 %2273
    %v2275 = vlaneseq
    %v2276 = vshrl.u32 %v2275, 7
    %v2277 = vsub.s32 3, %v2276
    %v2278 = vrot.slane %v2240, %v2277
    %2280 = vbcast.lane.b32.xlu0 %v2278, 256
    %v2281 = vpop.permute.xlu0 %2280
    %s2283 = sor.u32 256, 8
    %2284 = vbcast.lane.b32.xlu0 %v2278, %s2283
    %v2285 = vpop.permute.xlu0 %2284
    %v2286 = vlaneseq
    %v2287 = vshrl.u32 %v2286, 7
    %v2288 = vsub.s32 4, %v2287
    %v2289 = vrot.slane %v2240, %v2288
    %2291 = vbcast.lane.b32.xlu0 %v2289, 256
    %v2292 = vpop.permute.xlu0 %2291
    %s2294 = sor.u32 256, 8
    %2295 = vbcast.lane.b32.xlu0 %v2289, %s2294
    %v2296 = vpop.permute.xlu0 %2295
    %v2297 = vlaneseq
    %v2298 = vshrl.u32 %v2297, 7
    %v2299 = vsub.s32 5, %v2298
    %v2300 = vrot.slane %v2240, %v2299
    %2302 = vbcast.lane.b32.xlu0 %v2300, 256
    %v2303 = vpop.permute.xlu0 %2302
    %s2305 = sor.u32 256, 8
    %2306 = vbcast.lane.b32.xlu0 %v2300, %s2305
    %v2307 = vpop.permute.xlu0 %2306
    %v2308 = vlaneseq
    %v2309 = vshrl.u32 %v2308, 7
    %v2310 = vsub.s32 6, %v2309
    %v2311 = vrot.slane %v2240, %v2310
    %2313 = vbcast.lane.b32.xlu0 %v2311, 256
    %v2314 = vpop.permute.xlu0 %2313
    %s2316 = sor.u32 256, 8
    %2317 = vbcast.lane.b32.xlu0 %v2311, %s2316
    %v2318 = vpop.permute.xlu0 %2317
    %v2319 = vlaneseq
    %v2320 = vshrl.u32 %v2319, 7
    %v2321 = vsub.s32 7, %v2320
    %v2322 = vrot.slane %v2240, %v2321
    %2324 = vbcast.lane.b32.xlu0 %v2322, 256
    %v2325 = vpop.permute.xlu0 %2324
    %s2327 = sor.u32 256, 8
    %2328 = vbcast.lane.b32.xlu0 %v2322, %s2327
    %v2329 = vpop.permute.xlu0 %2328
    %v2330 = vmul.f32 %v1672, %v2248
    %v2331 = vmul.f32 %v1677, %v2252
    %v2332 = vmul.f32 %v1747, %v2259
    %v2333 = vmul.f32 %v1752, %v2263
    %v2334 = vmul.f32 %v1822, %v2270
    %v2335 = vmul.f32 %v1827, %v2274
    %v2336 = vmul.f32 %v1897, %v2281
    %v2337 = vmul.f32 %v1902, %v2285
    %v2338 = vmul.f32 %v1972, %v2292
    %v2339 = vmul.f32 %v1977, %v2296
    %v2340 = vmul.f32 %v2047, %v2303
    %v2341 = vmul.f32 %v2052, %v2307
    %v2342 = vmul.f32 %v2122, %v2314
    %v2343 = vmul.f32 %v2127, %v2318
    %v2344 = vmul.f32 %v2197, %v2325
    %v2345 = vmul.f32 %v2202, %v2329
    %v2347 = vcombine.high %v2240, %v2240
    %v2349 = vunpack.c.l.s4 1966171168
    %v2350 = vunpack.c.0.s8 %v2349
    %v2351 = vlaneseq
    %v2352 = vshrl.u32 %v2351, 7
    %v2353 = vsub.s32 %v2350, %v2352
    %v2354 = vrot.slane %v2240, %v2353
    %v2356 = vunpack.c.l.s4 1966171168
    %v2357 = vunpack.c.0.s8 %v2356
    %v2358 = vlaneseq
    %v2359 = vshrl.u32 %v2358, 7
    %v2360 = vsub.s32 %v2357, %v2359
    %v2361 = vrot.slane %v2347, %v2360
    %v2362 = vcombine.high %v2354, %v2354
    %v2363 = vcombine.high %v2361, %v2361
    %v2365 = vunpack.c.l.s4 1966171168
    %v2366 = vunpack.c.0.s8 %v2365
    %v2367 = vlaneseq
    %v2368 = vshrl.u32 %v2367, 7
    %v2369 = vsub.s32 %v2366, %v2368
    %v2370 = vrot.slane %v2354, %v2369
    %v2372 = vunpack.c.l.s4 1966171168
    %v2373 = vunpack.c.0.s8 %v2372
    %v2374 = vlaneseq
    %v2375 = vshrl.u32 %v2374, 7
    %v2376 = vsub.s32 %v2373, %v2375
    %v2377 = vrot.slane %v2361, %v2376
    %v2379 = vunpack.c.l.s4 1966171168
    %v2380 = vunpack.c.0.s8 %v2379
    %v2381 = vlaneseq
    %v2382 = vshrl.u32 %v2381, 7
    %v2383 = vsub.s32 %v2380, %v2382
    %v2384 = vrot.slane %v2362, %v2383
    %v2386 = vunpack.c.l.s4 1966171168
    %v2387 = vunpack.c.0.s8 %v2386
    %v2388 = vlaneseq
    %v2389 = vshrl.u32 %v2388, 7
    %v2390 = vsub.s32 %v2387, %v2389
    %v2391 = vrot.slane %v2363, %v2390
    %v2392 = vcombine.high %v2370, %v2370
    %v2393 = vcombine.high %v2377, %v2377
    %v2394 = vcombine.high %v2384, %v2384
    %v2395 = vcombine.high %v2391, %v2391
    %v2396 = vlaneseq
    %v2397 = vshrl.u32 %v2396, 7
    %v2398 = vsub.s32 0, %v2397
    %v2399 = vrot.slane %v2370, %v2398
    %v2400 = vlaneseq
    %v2401 = vshrl.u32 %v2400, 7
    %v2402 = vsub.s32 0, %v2401
    %v2403 = vrot.slane %v2384, %v2402
    %v2404 = vlaneseq
    %v2405 = vshrl.u32 %v2404, 7
    %v2406 = vsub.s32 0, %v2405
    %v2407 = vrot.slane %v2392, %v2406
    %v2408 = vlaneseq
    %v2409 = vshrl.u32 %v2408, 7
    %v2410 = vsub.s32 0, %v2409
    %v2411 = vrot.slane %v2394, %v2410
    %v2412 = vlaneseq
    %v2413 = vshrl.u32 %v2412, 7
    %v2414 = vsub.s32 0, %v2413
    %v2415 = vrot.slane %v2377, %v2414
    %v2416 = vlaneseq
    %v2417 = vshrl.u32 %v2416, 7
    %v2418 = vsub.s32 0, %v2417
    %v2419 = vrot.slane %v2391, %v2418
    %v2420 = vlaneseq
    %v2421 = vshrl.u32 %v2420, 7
    %v2422 = vsub.s32 0, %v2421
    %v2423 = vrot.slane %v2393, %v2422
    %v2424 = vlaneseq
    %v2425 = vshrl.u32 %v2424, 7
    %v2426 = vsub.s32 0, %v2425
    %v2427 = vrot.slane %v2395, %v2426
    %v2436 = vmul.f32 %v2330, %v2399
    %v2437 = vmul.f32 %v2331, %v2399
    %v2438 = vmul.f32 %v2332, %v2403
    %v2439 = vmul.f32 %v2333, %v2403
    %v2440 = vmul.f32 %v2334, %v2407
    %v2441 = vmul.f32 %v2335, %v2407
    %v2442 = vmul.f32 %v2336, %v2411
    %v2443 = vmul.f32 %v2337, %v2411
    %v2444 = vmul.f32 %v2338, %v2415
    %v2445 = vmul.f32 %v2339, %v2415
    %v2446 = vmul.f32 %v2340, %v2419
    %v2447 = vmul.f32 %v2341, %v2419
    %v2448 = vmul.f32 %v2342, %v2423
    %v2449 = vmul.f32 %v2343, %v2423
    %v2450 = vmul.f32 %v2344, %v2427
    %v2451 = vmul.f32 %v2345, %v2427
    %v2452 = vld [vmem:[#allocation5 + $0x46] sm:$0xff]
    %v2453 = vld [vmem:[#allocation5 + $0x4e] sm:$0xff]
    %v2454 = vld [vmem:[#allocation5 + $0x56] sm:$0xff]
    %v2455 = vld [vmem:[#allocation5 + $0x5e] sm:$0x1]
    %v2456 = vld [vmem:[#allocation5 + $0x5f] sm:$0x1]
    %v2457 = vld [vmem:[#allocation5 + $0x60] sm:$0x1]
    %v2458 = vmul.f32 %v2436, %v47
    %v2459 = vmul.f32 %v2437, %v48
    %v2460 = vmul.f32 %v2438, %v47
    %v2461 = vmul.f32 %v2439, %v48
    %v2462 = vmul.f32 %v2440, %v47
    %v2463 = vmul.f32 %v2441, %v48
    %v2464 = vmul.f32 %v2442, %v47
    %v2465 = vmul.f32 %v2443, %v48
    %v2466 = vmul.f32 %v2444, %v47
    %v2467 = vmul.f32 %v2445, %v48
    %v2468 = vmul.f32 %v2446, %v47
    %v2469 = vmul.f32 %v2447, %v48
    %v2470 = vmul.f32 %v2448, %v47
    %v2471 = vmul.f32 %v2449, %v48
    %v2472 = vmul.f32 %v2450, %v47
    %v2473 = vmul.f32 %v2451, %v48
    %v2474 = vsel %vm293, %v2458, 0.0
    %2475 = vadd.xlane.f32.xlu0 %v2474
    %v2476 = vpop.xlane.xlu0 %2475
    %v2477 = vsel %vm293, %v2459, 0.0
    %2478 = vadd.xlane.f32.xlu0 %v2477
    %v2479 = vpop.xlane.xlu0 %2478
    %v2480 = vsel %vm293, %v2460, 0.0
    %2481 = vadd.xlane.f32.xlu0 %v2480
    %v2482 = vpop.xlane.xlu0 %2481
    %v2483 = vsel %vm293, %v2461, 0.0
    %2484 = vadd.xlane.f32.xlu0 %v2483
    %v2485 = vpop.xlane.xlu0 %2484
    %v2486 = vsel %vm293, %v2462, 0.0
    %2487 = vadd.xlane.f32.xlu0 %v2486
    %v2488 = vpop.xlane.xlu0 %2487
    %v2489 = vsel %vm293, %v2463, 0.0
    %2490 = vadd.xlane.f32.xlu0 %v2489
    %v2491 = vpop.xlane.xlu0 %2490
    %v2492 = vsel %vm293, %v2464, 0.0
    %2493 = vadd.xlane.f32.xlu0 %v2492
    %v2494 = vpop.xlane.xlu0 %2493
    %v2495 = vsel %vm293, %v2465, 0.0
    %2496 = vadd.xlane.f32.xlu0 %v2495
    %v2497 = vpop.xlane.xlu0 %2496
    %v2498 = vsel %vm293, %v2466, 0.0
    %2499 = vadd.xlane.f32.xlu0 %v2498
    %v2500 = vpop.xlane.xlu0 %2499
    %v2501 = vsel %vm293, %v2467, 0.0
    %2502 = vadd.xlane.f32.xlu0 %v2501
    %v2503 = vpop.xlane.xlu0 %2502
    %v2504 = vsel %vm293, %v2468, 0.0
    %2505 = vadd.xlane.f32.xlu0 %v2504
    %v2506 = vpop.xlane.xlu0 %2505
    %v2507 = vsel %vm293, %v2469, 0.0
    %2508 = vadd.xlane.f32.xlu0 %v2507
    %v2509 = vpop.xlane.xlu0 %2508
    %v2510 = vsel %vm293, %v2470, 0.0
    %2511 = vadd.xlane.f32.xlu0 %v2510
    %v2512 = vpop.xlane.xlu0 %2511
    %v2513 = vsel %vm293, %v2471, 0.0
    %2514 = vadd.xlane.f32.xlu0 %v2513
    %v2515 = vpop.xlane.xlu0 %2514
    %v2516 = vsel %vm293, %v2472, 0.0
    %2517 = vadd.xlane.f32.xlu0 %v2516
    %v2518 = vpop.xlane.xlu0 %2517
    %v2519 = vsel %vm293, %v2473, 0.0
    %2520 = vadd.xlane.f32.xlu0 %v2519
    %v2521 = vpop.xlane.xlu0 %2520
    %v2538 = vlaneseq
    %v2539 = vshrl.u32 %v2538, 7
    %v2540 = vsub.s32 %v42, %v2539
    %v2541 = vrot.slane %v2476, %v2540
    %v2542 = vlaneseq
    %v2543 = vshrl.u32 %v2542, 7
    %v2544 = vsub.s32 %v631, %v2543
    %v2545 = vrot.slane %v2479, %v2544
    %v2546 = vsel %vm636, %v2545, %v2541
    %v2547 = vlaneseq
    %v2548 = vshrl.u32 %v2547, 7
    %v2549 = vsub.s32 %v42, %v2548
    %v2550 = vrot.slane %v2482, %v2549
    %v2551 = vlaneseq
    %v2552 = vshrl.u32 %v2551, 7
    %v2553 = vsub.s32 %v631, %v2552
    %v2554 = vrot.slane %v2485, %v2553
    %v2555 = vsel %vm636, %v2554, %v2550
    %v2556 = vlaneseq
    %v2557 = vshrl.u32 %v2556, 7
    %v2558 = vsub.s32 %v42, %v2557
    %v2559 = vrot.slane %v2488, %v2558
    %v2560 = vlaneseq
    %v2561 = vshrl.u32 %v2560, 7
    %v2562 = vsub.s32 %v631, %v2561
    %v2563 = vrot.slane %v2491, %v2562
    %v2564 = vsel %vm636, %v2563, %v2559
    %v2565 = vlaneseq
    %v2566 = vshrl.u32 %v2565, 7
    %v2567 = vsub.s32 %v42, %v2566
    %v2568 = vrot.slane %v2494, %v2567
    %v2569 = vlaneseq
    %v2570 = vshrl.u32 %v2569, 7
    %v2571 = vsub.s32 %v631, %v2570
    %v2572 = vrot.slane %v2497, %v2571
    %v2573 = vsel %vm636, %v2572, %v2568
    %v2574 = vlaneseq
    %v2575 = vshrl.u32 %v2574, 7
    %v2576 = vsub.s32 %v42, %v2575
    %v2577 = vrot.slane %v2500, %v2576
    %v2578 = vlaneseq
    %v2579 = vshrl.u32 %v2578, 7
    %v2580 = vsub.s32 %v631, %v2579
    %v2581 = vrot.slane %v2503, %v2580
    %v2582 = vsel %vm636, %v2581, %v2577
    %v2583 = vlaneseq
    %v2584 = vshrl.u32 %v2583, 7
    %v2585 = vsub.s32 %v42, %v2584
    %v2586 = vrot.slane %v2506, %v2585
    %v2587 = vlaneseq
    %v2588 = vshrl.u32 %v2587, 7
    %v2589 = vsub.s32 %v631, %v2588
    %v2590 = vrot.slane %v2509, %v2589
    %v2591 = vsel %vm636, %v2590, %v2586
    %v2592 = vlaneseq
    %v2593 = vshrl.u32 %v2592, 7
    %v2594 = vsub.s32 %v42, %v2593
    %v2595 = vrot.slane %v2512, %v2594
    %v2596 = vlaneseq
    %v2597 = vshrl.u32 %v2596, 7
    %v2598 = vsub.s32 %v631, %v2597
    %v2599 = vrot.slane %v2515, %v2598
    %v2600 = vsel %vm636, %v2599, %v2595
    %v2601 = vlaneseq
    %v2602 = vshrl.u32 %v2601, 7
    %v2603 = vsub.s32 %v42, %v2602
    %v2604 = vrot.slane %v2518, %v2603
    %v2605 = vlaneseq
    %v2606 = vshrl.u32 %v2605, 7
    %v2607 = vsub.s32 %v631, %v2606
    %v2608 = vrot.slane %v2521, %v2607
    %v2609 = vsel %vm636, %v2608, %v2604
    %v2610 = vsel %vm701, %v2555, %v2546
    %v2611 = vsel %vm703, %v2564, %v2610
    %v2612 = vsel %vm705, %v2573, %v2611
    %v2613 = vsel %vm707, %v2582, %v2612
    %v2614 = vsel %vm709, %v2591, %v2613
    %v2615 = vsel %vm711, %v2600, %v2614
    %v2616 = vsel %vm713, %v2609, %v2615
    %v2618 = vsel %vm293, %v2616, 0.0
    %2619 = vadd.xlane.f32.xlu0 %v2618
    %v2620 = vpop.xlane.xlu0 %2619
    %v2621 = vmul.f32 %v2241, %v2241
    %v2622 = vsel %vm293, %v2621, 0.0
    %2623 = vadd.xlane.f32.xlu0 %v2622
    %v2624 = vpop.xlane.xlu0 %2623
    %v2625 = vmax.f32 %v2456, 0.0
    %vm2626 = vcmp.ne.f32.partialorder %v2456, %v2456
    %v2627 = vadd.f32 %v2456, 0.0
    %v2628 = vand.u32 2147483647, %v2456
    %v2629 = vsub.f32 0.0, %v2628
    %v2630 = vmul.f32 %v2629, 1.442695
    %v2631 = vpow.pop %v2630
    %v2632 = vadd.f32 %v2631, 1.0
    %v2633 = vlog2.pop %v2632
    %v2634 = vmul.f32 %v2633, 0.6931472
    %v2635 = vmul.f32 -0.5, %v2631
    %v2636 = vadd.f32 %v2635, 1.0
    %v2637 = vmul.f32 %v2636, %v2631
    %v2638 = vand.u32 2147483647, %v2631
    %vm2639 = vcmp.lt.f32.partialorder %v2638, 0.0004427343
    %v2640 = vsel %vm2639, %v2637, %v2634
    %v2641 = vadd.f32 %v2625, %v2640
    %v2642 = vsel %vm2626, %v2627, %v2641
    %v2643 = vadd.f32 %v2620, %v2624
    %v2644 = vlaneseq
    %v2645 = vshrl.u32 %v2644, 7
    %v2646 = vsub.s32 0, %v2645
    %v2647 = vrot.slane %v2642, %v2646
    %v2648 = vmul.f32 %v2647, %v2643
    %v2649 = vmax.f32 %v2457, 0.0
    %vm2650 = vcmp.ne.f32.partialorder %v2457, %v2457
    %v2651 = vadd.f32 %v2457, 0.0
    %v2652 = vand.u32 2147483647, %v2457
    %v2653 = vsub.f32 0.0, %v2652
    %v2654 = vmul.f32 %v2653, 1.442695
    %v2655 = vpow.pop %v2654
    %v2656 = vadd.f32 %v2655, 1.0
    %v2657 = vlog2.pop %v2656
    %v2658 = vmul.f32 %v2657, 0.6931472
    %v2659 = vmul.f32 -0.5, %v2655
    %v2660 = vadd.f32 %v2659, 1.0
    %v2661 = vmul.f32 %v2660, %v2655
    %v2662 = vand.u32 2147483647, %v2655
    %vm2663 = vcmp.lt.f32.partialorder %v2662, 0.0004427343
    %v2664 = vsel %vm2663, %v2661, %v2658
    %v2665 = vadd.f32 %v2649, %v2664
    %v2666 = vsel %vm2650, %v2651, %v2665
    %v2667 = vlaneseq
    %v2668 = vshrl.u32 %v2667, 7
    %v2669 = vsub.s32 0, %v2668
    %v2670 = vrot.slane %v2666, %v2669
    %v2671 = vadd.f32 %v2648, %v2670
    %v2672 = vlaneseq
    %v2673 = vshrl.u32 %v2672, 7
    %v2674 = vsub.s32 0, %v2673
    %v2675 = vrot.slane %v2455, %v2674
    %v2677 = vsel %vm293, %v2241, 0
    %2679 = vmatprep.subr.mxu0 0.0
    %2680 = vmatpush1.msra.mxu0 %v2452
    %2681 = vmatprep.subr.mxu0 0.0
    %2682 = vmatpush1.msra.mxu0 %v2453
    %2683 = vmatprep.subr.mxu0 0.0
    %2684 = vmatpush1.msra.mxu0 0.0
    %2685 = vmatprep.subr.mxu0 0.0
    %2686 = vmatpush1.msra.mxu0 0.0
    %2687 = vmatprep.subr.mxu0 0.0
    %2688 = vmatpush1.msra.mxu0 0.0
    %2689 = vmatprep.subr.mxu0 0.0
    %2690 = vmatpush1.msra.mxu0 0.0
    %2691 = vmatprep.subr.mxu0 0.0
    %2692 = vmatpush1.msra.mxu0 0.0
    %2693 = vmatprep.subr.mxu0 0.0
    %2694 = vmatpush1.msra.mxu0 0.0
    %2695 = vmatprep.subr.mxu0 0.0
    %2696 = vmatpush1.msra.mxu0 0.0
    %2697 = vmatprep.subr.mxu0 0.0
    %2698 = vmatpush1.msra.mxu0 0.0
    %2699 = vmatprep.subr.mxu0 0.0
    %2700 = vmatpush1.msra.mxu0 0.0
    %2701 = vmatprep.subr.mxu0 0.0
    %2702 = vmatpush1.msra.mxu0 0.0
    %2703 = vmatprep.subr.mxu0 0.0
    %2704 = vmatpush1.msra.mxu0 0.0
    %2705 = vmatprep.subr.mxu0 0.0
    %2706 = vmatpush1.msra.mxu0 0.0
    %2707 = vmatprep.subr.mxu0 0.0
    %2708 = vmatpush1.msra.mxu0 0.0
    %2709 = vmatprep.subr.mxu0 0.0
    %2710 = vmatpush1.msra.mxu0 0.0
    %2711 = vmatprep.subr.mxu0 0.0
    %2712 = vmatpush1.msra.mxu0 0.0
    %2713 = vmatprep.subr.mxu0 0.0
    %2714 = vmatpush1.msra.mxu0 0.0
    %2715 = vmatprep.subr.mxu0 0.0
    %2716 = vmatpush1.msra.mxu0 0.0
    %2717 = vmatprep.subr.mxu0 0.0
    %2718 = vmatpush1.msra.mxu0 0.0
    %2719 = vmatprep.subr.mxu0 0.0
    %2720 = vmatpush1.msra.mxu0 0.0
    %2721 = vmatprep.subr.mxu0 0.0
    %2722 = vmatpush1.msra.mxu0 0.0
    %2723 = vmatprep.subr.mxu0 0.0
    %2724 = vmatpush1.msra.mxu0 0.0
    %2725 = vmatprep.subr.mxu0 0.0
    %2726 = vmatpush1.msra.mxu0 0.0
    %2727 = vmatprep.subr.mxu0 0.0
    %2728 = vmatpush1.msra.mxu0 0.0
    %2729 = vmatprep.subr.mxu0 0.0
    %2730 = vmatpush1.msra.mxu0 0.0
    %2731 = vmatprep.subr.mxu0 0.0
    %2732 = vmatpush1.msra.mxu0 0.0
    %2733 = vmatprep.subr.mxu0 0.0
    %2734 = vmatpush1.msra.mxu0 0.0
    %2735 = vmatprep.subr.mxu0 0.0
    %2736 = vmatpush1.msra.mxu0 0.0
    %2737 = vmatprep.subr.mxu0 0.0
    %2738 = vmatpush1.msra.mxu0 0.0
    %2739 = vmatprep.subr.mxu0 0.0
    %2740 = vmatpush1.msra.mxu0 0.0
    %2741 = vmatprep.subr.mxu0 0.0
    %2742 = vmatpush1.msra.mxu0 0.0
    %2743 = vmatprep.mubr.f32.mxu0 0.0
    %2744 = vmatmul.mubr.f32.gmra.mrb[0].mxu0 %v2677
    %v2745 = vpop.f32.mrb[0].mxu0
    %v2746 = vadd.f32 %v2675, %v2745
    %v2747 = vpop.f32.mrb[0].mxu0
    %2748 = vdwg.mxu0
    %v2750 = vsel %vm293, %v2436, 0
    %v2753 = vsel %vm293, %v2437, 0
    %2755 = vmatprep.subr.mxu0 0.0
    %2756 = vmatpush1.msra.mxu0 %v2452
    %2757 = vmatprep.subr.mxu0 0.0
    %2758 = vmatpush1.msra.mxu0 %v2453
    %2759 = vmatprep.subr.mxu0 0.0
    %2760 = vmatpush1.msra.mxu0 0.0
    %2761 = vmatprep.subr.mxu0 0.0
    %2762 = vmatpush1.msra.mxu0 0.0
    %2763 = vmatprep.subr.mxu0 0.0
    %2764 = vmatpush1.msra.mxu0 0.0
    %2765 = vmatprep.subr.mxu0 0.0
    %2766 = vmatpush1.msra.mxu0 0.0
    %2767 = vmatprep.subr.mxu0 0.0
    %2768 = vmatpush1.msra.mxu0 0.0
    %2769 = vmatprep.subr.mxu0 0.0
    %2770 = vmatpush1.msra.mxu0 0.0
    %2771 = vmatprep.subr.mxu0 0.0
    %2772 = vmatpush1.msra.mxu0 0.0
    %2773 = vmatprep.subr.mxu0 0.0
    %2774 = vmatpush1.msra.mxu0 0.0
    %2775 = vmatprep.subr.mxu0 0.0
    %2776 = vmatpush1.msra.mxu0 0.0
    %2777 = vmatprep.subr.mxu0 0.0
    %2778 = vmatpush1.msra.mxu0 0.0
    %2779 = vmatprep.subr.mxu0 0.0
    %2780 = vmatpush1.msra.mxu0 0.0
    %2781 = vmatprep.subr.mxu0 0.0
    %2782 = vmatpush1.msra.mxu0 0.0
    %2783 = vmatprep.subr.mxu0 0.0
    %2784 = vmatpush1.msra.mxu0 0.0
    %2785 = vmatprep.subr.mxu0 0.0
    %2786 = vmatpush1.msra.mxu0 0.0
    %2787 = vmatprep.subr.mxu0 0.0
    %2788 = vmatpush1.msra.mxu0 0.0
    %2789 = vmatprep.subr.mxu0 0.0
    %2790 = vmatpush1.msra.mxu0 0.0
    %2791 = vmatprep.subr.mxu0 0.0
    %2792 = vmatpush1.msra.mxu0 0.0
    %2793 = vmatprep.subr.mxu0 0.0
    %2794 = vmatpush1.msra.mxu0 0.0
    %2795 = vmatprep.subr.mxu0 0.0
    %2796 = vmatpush1.msra.mxu0 0.0
    %2797 = vmatprep.subr.mxu0 0.0
    %2798 = vmatpush1.msra.mxu0 0.0
    %2799 = vmatprep.subr.mxu0 0.0
    %2800 = vmatpush1.msra.mxu0 0.0
    %2801 = vmatprep.subr.mxu0 0.0
    %2802 = vmatpush1.msra.mxu0 0.0
    %2803 = vmatprep.subr.mxu0 0.0
    %2804 = vmatpush1.msra.mxu0 0.0
    %2805 = vmatprep.subr.mxu0 0.0
    %2806 = vmatpush1.msra.mxu0 0.0
    %2807 = vmatprep.subr.mxu0 0.0
    %2808 = vmatpush1.msra.mxu0 0.0
    %2809 = vmatprep.subr.mxu0 0.0
    %2810 = vmatpush1.msra.mxu0 0.0
    %2811 = vmatprep.subr.mxu0 0.0
    %2812 = vmatpush1.msra.mxu0 0.0
    %2813 = vmatprep.subr.mxu0 0.0
    %2814 = vmatpush1.msra.mxu0 0.0
    %2815 = vmatprep.subr.mxu0 0.0
    %2816 = vmatpush1.msra.mxu0 0.0
    %2817 = vmatprep.subr.mxu0 0.0
    %2818 = vmatpush1.msra.mxu0 0.0
    %2819 = vmatprep.mubr.f32.mxu0 0.0
    %2820 = vmatmul.mubr.f32.gmra.mrb[0].mxu0 %v2750
    %v2821 = vpop.f32.mrb[0].mxu0
    %v2822 = vadd.f32 0.0, %v2821
    %v2823 = vpop.f32.mrb[0].mxu0
    %2824 = vmatprep.mubr.f32.mxu0 0.0
    %2825 = vmatmul.mubr.f32.gmra.mrb[0].mxu0 %v2753
    %v2826 = vpop.f32.mrb[0].mxu0
    %v2827 = vadd.f32 0.0, %v2826
    %v2828 = vpop.f32.mrb[0].mxu0
    %2829 = vdwg.mxu0
    %v2831 = vsel %vm293, %v2438, 0
    %v2834 = vsel %vm293, %v2439, 0
    %2836 = vmatprep.subr.mxu0 0.0
    %2837 = vmatpush1.msra.mxu0 %v2452
    %2838 = vmatprep.subr.mxu0 0.0
    %2839 = vmatpush1.msra.mxu0 %v2453
    %2840 = vmatprep.subr.mxu0 0.0
    %2841 = vmatpush1.msra.mxu0 0.0
    %2842 = vmatprep.subr.mxu0 0.0
    %2843 = vmatpush1.msra.mxu0 0.0
    %2844 = vmatprep.subr.mxu0 0.0
    %2845 = vmatpush1.msra.mxu0 0.0
    %2846 = vmatprep.subr.mxu0 0.0
    %2847 = vmatpush1.msra.mxu0 0.0
    %2848 = vmatprep.subr.mxu0 0.0
    %2849 = vmatpush1.msra.mxu0 0.0
    %2850 = vmatprep.subr.mxu0 0.0
    %2851 = vmatpush1.msra.mxu0 0.0
    %2852 = vmatprep.subr.mxu0 0.0
    %2853 = vmatpush1.msra.mxu0 0.0
    %2854 = vmatprep.subr.mxu0 0.0
    %2855 = vmatpush1.msra.mxu0 0.0
    %2856 = vmatprep.subr.mxu0 0.0
    %2857 = vmatpush1.msra.mxu0 0.0
    %2858 = vmatprep.subr.mxu0 0.0
    %2859 = vmatpush1.msra.mxu0 0.0
    %2860 = vmatprep.subr.mxu0 0.0
    %2861 = vmatpush1.msra.mxu0 0.0
    %2862 = vmatprep.subr.mxu0 0.0
    %2863 = vmatpush1.msra.mxu0 0.0
    %2864 = vmatprep.subr.mxu0 0.0
    %2865 = vmatpush1.msra.mxu0 0.0
    %2866 = vmatprep.subr.mxu0 0.0
    %2867 = vmatpush1.msra.mxu0 0.0
    %2868 = vmatprep.subr.mxu0 0.0
    %2869 = vmatpush1.msra.mxu0 0.0
    %2870 = vmatprep.subr.mxu0 0.0
    %2871 = vmatpush1.msra.mxu0 0.0
    %2872 = vmatprep.subr.mxu0 0.0
    %2873 = vmatpush1.msra.mxu0 0.0
    %2874 = vmatprep.subr.mxu0 0.0
    %2875 = vmatpush1.msra.mxu0 0.0
    %2876 = vmatprep.subr.mxu0 0.0
    %2877 = vmatpush1.msra.mxu0 0.0
    %2878 = vmatprep.subr.mxu0 0.0
    %2879 = vmatpush1.msra.mxu0 0.0
    %2880 = vmatprep.subr.mxu0 0.0
    %2881 = vmatpush1.msra.mxu0 0.0
    %2882 = vmatprep.subr.mxu0 0.0
    %2883 = vmatpush1.msra.mxu0 0.0
    %2884 = vmatprep.subr.mxu0 0.0
    %2885 = vmatpush1.msra.mxu0 0.0
    %2886 = vmatprep.subr.mxu0 0.0
    %2887 = vmatpush1.msra.mxu0 0.0
    %2888 = vmatprep.subr.mxu0 0.0
    %2889 = vmatpush1.msra.mxu0 0.0
    %2890 = vmatprep.subr.mxu0 0.0
    %2891 = vmatpush1.msra.mxu0 0.0
    %2892 = vmatprep.subr.mxu0 0.0
    %2893 = vmatpush1.msra.mxu0 0.0
    %2894 = vmatprep.subr.mxu0 0.0
    %2895 = vmatpush1.msra.mxu0 0.0
    %2896 = vmatprep.subr.mxu0 0.0
    %2897 = vmatpush1.msra.mxu0 0.0
    %2898 = vmatprep.subr.mxu0 0.0
    %2899 = vmatpush1.msra.mxu0 0.0
    %2900 = vmatprep.mubr.f32.mxu0 0.0
    %2901 = vmatmul.mubr.f32.gmra.mrb[0].mxu0 %v2831
    %v2902 = vpop.f32.mrb[0].mxu0
    %v2903 = vadd.f32 0.0, %v2902
    %v2904 = vpop.f32.mrb[0].mxu0
    %2905 = vmatprep.mubr.f32.mxu0 0.0
    %2906 = vmatmul.mubr.f32.gmra.mrb[0].mxu0 %v2834
    %v2907 = vpop.f32.mrb[0].mxu0
    %v2908 = vadd.f32 0.0, %v2907
    %v2909 = vpop.f32.mrb[0].mxu0
    %2910 = vdwg.mxu0
    %v2912 = vsel %vm293, %v2440, 0
    %v2915 = vsel %vm293, %v2441, 0
    %2917 = vmatprep.subr.mxu0 0.0
    %2918 = vmatpush1.msra.mxu0 %v2452
    %2919 = vmatprep.subr.mxu0 0.0
    %2920 = vmatpush1.msra.mxu0 %v2453
    %2921 = vmatprep.subr.mxu0 0.0
    %2922 = vmatpush1.msra.mxu0 0.0
    %2923 = vmatprep.subr.mxu0 0.0
    %2924 = vmatpush1.msra.mxu0 0.0
    %2925 = vmatprep.subr.mxu0 0.0
    %2926 = vmatpush1.msra.mxu0 0.0
    %2927 = vmatprep.subr.mxu0 0.0
    %2928 = vmatpush1.msra.mxu0 0.0
    %2929 = vmatprep.subr.mxu0 0.0
    %2930 = vmatpush1.msra.mxu0 0.0
    %2931 = vmatprep.subr.mxu0 0.0
    %2932 = vmatpush1.msra.mxu0 0.0
    %2933 = vmatprep.subr.mxu0 0.0
    %2934 = vmatpush1.msra.mxu0 0.0
    %2935 = vmatprep.subr.mxu0 0.0
    %2936 = vmatpush1.msra.mxu0 0.0
    %2937 = vmatprep.subr.mxu0 0.0
    %2938 = vmatpush1.msra.mxu0 0.0
    %2939 = vmatprep.subr.mxu0 0.0
    %2940 = vmatpush1.msra.mxu0 0.0
    %2941 = vmatprep.subr.mxu0 0.0
    %2942 = vmatpush1.msra.mxu0 0.0
    %2943 = vmatprep.subr.mxu0 0.0
    %2944 = vmatpush1.msra.mxu0 0.0
    %2945 = vmatprep.subr.mxu0 0.0
    %2946 = vmatpush1.msra.mxu0 0.0
    %2947 = vmatprep.subr.mxu0 0.0
    %2948 = vmatpush1.msra.mxu0 0.0
    %2949 = vmatprep.subr.mxu0 0.0
    %2950 = vmatpush1.msra.mxu0 0.0
    %2951 = vmatprep.subr.mxu0 0.0
    %2952 = vmatpush1.msra.mxu0 0.0
    %2953 = vmatprep.subr.mxu0 0.0
    %2954 = vmatpush1.msra.mxu0 0.0
    %2955 = vmatprep.subr.mxu0 0.0
    %2956 = vmatpush1.msra.mxu0 0.0
    %2957 = vmatprep.subr.mxu0 0.0
    %2958 = vmatpush1.msra.mxu0 0.0
    %2959 = vmatprep.subr.mxu0 0.0
    %2960 = vmatpush1.msra.mxu0 0.0
    %2961 = vmatprep.subr.mxu0 0.0
    %2962 = vmatpush1.msra.mxu0 0.0
    %2963 = vmatprep.subr.mxu0 0.0
    %2964 = vmatpush1.msra.mxu0 0.0
    %2965 = vmatprep.subr.mxu0 0.0
    %2966 = vmatpush1.msra.mxu0 0.0
    %2967 = vmatprep.subr.mxu0 0.0
    %2968 = vmatpush1.msra.mxu0 0.0
    %2969 = vmatprep.subr.mxu0 0.0
    %2970 = vmatpush1.msra.mxu0 0.0
    %2971 = vmatprep.subr.mxu0 0.0
    %2972 = vmatpush1.msra.mxu0 0.0
    %2973 = vmatprep.subr.mxu0 0.0
    %2974 = vmatpush1.msra.mxu0 0.0
    %2975 = vmatprep.subr.mxu0 0.0
    %2976 = vmatpush1.msra.mxu0 0.0
    %2977 = vmatprep.subr.mxu0 0.0
    %2978 = vmatpush1.msra.mxu0 0.0
    %2979 = vmatprep.subr.mxu0 0.0
    %2980 = vmatpush1.msra.mxu0 0.0
    %2981 = vmatprep.mubr.f32.mxu0 0.0
    %2982 = vmatmul.mubr.f32.gmra.mrb[0].mxu0 %v2912
    %v2983 = vpop.f32.mrb[0].mxu0
    %v2984 = vadd.f32 0.0, %v2983
    %v2985 = vpop.f32.mrb[0].mxu0
    %2986 = vmatprep.mubr.f32.mxu0 0.0
    %2987 = vmatmul.mubr.f32.gmra.mrb[0].mxu0 %v2915
    %v2988 = vpop.f32.mrb[0].mxu0
    %v2989 = vadd.f32 0.0, %v2988
    %v2990 = vpop.f32.mrb[0].mxu0
    %2991 = vdwg.mxu0
    %v2993 = vsel %vm293, %v2442, 0
    %v2996 = vsel %vm293, %v2443, 0
    %2998 = vmatprep.subr.mxu0 0.0
    %2999 = vmatpush1.msra.mxu0 %v2452
    %3000 = vmatprep.subr.mxu0 0.0
    %3001 = vmatpush1.msra.mxu0 %v2453
    %3002 = vmatprep.subr.mxu0 0.0
    %3003 = vmatpush1.msra.mxu0 0.0
    %3004 = vmatprep.subr.mxu0 0.0
    %3005 = vmatpush1.msra.mxu0 0.0
    %3006 = vmatprep.subr.mxu0 0.0
    %3007 = vmatpush1.msra.mxu0 0.0
    %3008 = vmatprep.subr.mxu0 0.0
    %3009 = vmatpush1.msra.mxu0 0.0
    %3010 = vmatprep.subr.mxu0 0.0
    %3011 = vmatpush1.msra.mxu0 0.0
    %3012 = vmatprep.subr.mxu0 0.0
    %3013 = vmatpush1.msra.mxu0 0.0
    %3014 = vmatprep.subr.mxu0 0.0
    %3015 = vmatpush1.msra.mxu0 0.0
    %3016 = vmatprep.subr.mxu0 0.0
    %3017 = vmatpush1.msra.mxu0 0.0
    %3018 = vmatprep.subr.mxu0 0.0
    %3019 = vmatpush1.msra.mxu0 0.0
    %3020 = vmatprep.subr.mxu0 0.0
    %3021 = vmatpush1.msra.mxu0 0.0
    %3022 = vmatprep.subr.mxu0 0.0
    %3023 = vmatpush1.msra.mxu0 0.0
    %3024 = vmatprep.subr.mxu0 0.0
    %3025 = vmatpush1.msra.mxu0 0.0
    %3026 = vmatprep.subr.mxu0 0.0
    %3027 = vmatpush1.msra.mxu0 0.0
    %3028 = vmatprep.subr.mxu0 0.0
    %3029 = vmatpush1.msra.mxu0 0.0
    %3030 = vmatprep.subr.mxu0 0.0
    %3031 = vmatpush1.msra.mxu0 0.0
    %3032 = vmatprep.subr.mxu0 0.0
    %3033 = vmatpush1.msra.mxu0 0.0
    %3034 = vmatprep.subr.mxu0 0.0
    %3035 = vmatpush1.msra.mxu0 0.0
    %3036 = vmatprep.subr.mxu0 0.0
    %3037 = vmatpush1.msra.mxu0 0.0
    %3038 = vmatprep.subr.mxu0 0.0
    %3039 = vmatpush1.msra.mxu0 0.0
    %3040 = vmatprep.subr.mxu0 0.0
    %3041 = vmatpush1.msra.mxu0 0.0
    %3042 = vmatprep.subr.mxu0 0.0
    %3043 = vmatpush1.msra.mxu0 0.0
    %3044 = vmatprep.subr.mxu0 0.0
    %3045 = vmatpush1.msra.mxu0 0.0
    %3046 = vmatprep.subr.mxu0 0.0
    %3047 = vmatpush1.msra.mxu0 0.0
    %3048 = vmatprep.subr.mxu0 0.0
    %3049 = vmatpush1.msra.mxu0 0.0
    %3050 = vmatprep.subr.mxu0 0.0
    %3051 = vmatpush1.msra.mxu0 0.0
    %3052 = vmatprep.subr.mxu0 0.0
    %3053 = vmatpush1.msra.mxu0 0.0
    %3054 = vmatprep.subr.mxu0 0.0
    %3055 = vmatpush1.msra.mxu0 0.0
    %3056 = vmatprep.subr.mxu0 0.0
    %3057 = vmatpush1.msra.mxu0 0.0
    %3058 = vmatprep.subr.mxu0 0.0
    %3059 = vmatpush1.msra.mxu0 0.0
    %3060 = vmatprep.subr.mxu0 0.0
    %3061 = vmatpush1.msra.mxu0 0.0
    %3062 = vmatprep.mubr.f32.mxu0 0.0
    %3063 = vmatmul.mubr.f32.gmra.mrb[0].mxu0 %v2993
    %v3064 = vpop.f32.mrb[0].mxu0
    %v3065 = vadd.f32 0.0, %v3064
    %v3066 = vpop.f32.mrb[0].mxu0
    %3067 = vmatprep.mubr.f32.mxu0 0.0
    %3068 = vmatmul.mubr.f32.gmra.mrb[0].mxu0 %v2996
    %v3069 = vpop.f32.mrb[0].mxu0
    %v3070 = vadd.f32 0.0, %v3069
    %v3071 = vpop.f32.mrb[0].mxu0
    %3072 = vdwg.mxu0
    %v3074 = vsel %vm293, %v2444, 0
    %v3077 = vsel %vm293, %v2445, 0
    %3079 = vmatprep.subr.mxu0 0.0
    %3080 = vmatpush1.msra.mxu0 %v2452
    %3081 = vmatprep.subr.mxu0 0.0
    %3082 = vmatpush1.msra.mxu0 %v2453
    %3083 = vmatprep.subr.mxu0 0.0
    %3084 = vmatpush1.msra.mxu0 0.0
    %3085 = vmatprep.subr.mxu0 0.0
    %3086 = vmatpush1.msra.mxu0 0.0
    %3087 = vmatprep.subr.mxu0 0.0
    %3088 = vmatpush1.msra.mxu0 0.0
    %3089 = vmatprep.subr.mxu0 0.0
    %3090 = vmatpush1.msra.mxu0 0.0
    %3091 = vmatprep.subr.mxu0 0.0
    %3092 = vmatpush1.msra.mxu0 0.0
    %3093 = vmatprep.subr.mxu0 0.0
    %3094 = vmatpush1.msra.mxu0 0.0
    %3095 = vmatprep.subr.mxu0 0.0
    %3096 = vmatpush1.msra.mxu0 0.0
    %3097 = vmatprep.subr.mxu0 0.0
    %3098 = vmatpush1.msra.mxu0 0.0
    %3099 = vmatprep.subr.mxu0 0.0
    %3100 = vmatpush1.msra.mxu0 0.0
    %3101 = vmatprep.subr.mxu0 0.0
    %3102 = vmatpush1.msra.mxu0 0.0
    %3103 = vmatprep.subr.mxu0 0.0
    %3104 = vmatpush1.msra.mxu0 0.0
    %3105 = vmatprep.subr.mxu0 0.0
    %3106 = vmatpush1.msra.mxu0 0.0
    %3107 = vmatprep.subr.mxu0 0.0
    %3108 = vmatpush1.msra.mxu0 0.0
    %3109 = vmatprep.subr.mxu0 0.0
    %3110 = vmatpush1.msra.mxu0 0.0
    %3111 = vmatprep.subr.mxu0 0.0
    %3112 = vmatpush1.msra.mxu0 0.0
    %3113 = vmatprep.subr.mxu0 0.0
    %3114 = vmatpush1.msra.mxu0 0.0
    %3115 = vmatprep.subr.mxu0 0.0
    %3116 = vmatpush1.msra.mxu0 0.0
    %3117 = vmatprep.subr.mxu0 0.0
    %3118 = vmatpush1.msra.mxu0 0.0
    %3119 = vmatprep.subr.mxu0 0.0
    %3120 = vmatpush1.msra.mxu0 0.0
    %3121 = vmatprep.subr.mxu0 0.0
    %3122 = vmatpush1.msra.mxu0 0.0
    %3123 = vmatprep.subr.mxu0 0.0
    %3124 = vmatpush1.msra.mxu0 0.0
    %3125 = vmatprep.subr.mxu0 0.0
    %3126 = vmatpush1.msra.mxu0 0.0
    %3127 = vmatprep.subr.mxu0 0.0
    %3128 = vmatpush1.msra.mxu0 0.0
    %3129 = vmatprep.subr.mxu0 0.0
    %3130 = vmatpush1.msra.mxu0 0.0
    %3131 = vmatprep.subr.mxu0 0.0
    %3132 = vmatpush1.msra.mxu0 0.0
    %3133 = vmatprep.subr.mxu0 0.0
    %3134 = vmatpush1.msra.mxu0 0.0
    %3135 = vmatprep.subr.mxu0 0.0
    %3136 = vmatpush1.msra.mxu0 0.0
    %3137 = vmatprep.subr.mxu0 0.0
    %3138 = vmatpush1.msra.mxu0 0.0
    %3139 = vmatprep.subr.mxu0 0.0
    %3140 = vmatpush1.msra.mxu0 0.0
    %3141 = vmatprep.subr.mxu0 0.0
    %3142 = vmatpush1.msra.mxu0 0.0
    %3143 = vmatprep.mubr.f32.mxu0 0.0
    %3144 = vmatmul.mubr.f32.gmra.mrb[0].mxu0 %v3074
    %v3145 = vpop.f32.mrb[0].mxu0
    %v3146 = vadd.f32 0.0, %v3145
    %v3147 = vpop.f32.mrb[0].mxu0
    %3148 = vmatprep.mubr.f32.mxu0 0.0
    %3149 = vmatmul.mubr.f32.gmra.mrb[0].mxu0 %v3077
    %v3150 = vpop.f32.mrb[0].mxu0
    %v3151 = vadd.f32 0.0, %v3150
    %v3152 = vpop.f32.mrb[0].mxu0
    %3153 = vdwg.mxu0
    %v3155 = vsel %vm293, %v2446, 0
    %v3158 = vsel %vm293, %v2447, 0
    %3160 = vmatprep.subr.mxu0 0.0
    %3161 = vmatpush1.msra.mxu0 %v2452
    %3162 = vmatprep.subr.mxu0 0.0
    %3163 = vmatpush1.msra.mxu0 %v2453
    %3164 = vmatprep.subr.mxu0 0.0
    %3165 = vmatpush1.msra.mxu0 0.0
    %3166 = vmatprep.subr.mxu0 0.0
    %3167 = vmatpush1.msra.mxu0 0.0
    %3168 = vmatprep.subr.mxu0 0.0
    %3169 = vmatpush1.msra.mxu0 0.0
    %3170 = vmatprep.subr.mxu0 0.0
    %3171 = vmatpush1.msra.mxu0 0.0
    %3172 = vmatprep.subr.mxu0 0.0
    %3173 = vmatpush1.msra.mxu0 0.0
    %3174 = vmatprep.subr.mxu0 0.0
    %3175 = vmatpush1.msra.mxu0 0.0
    %3176 = vmatprep.subr.mxu0 0.0
    %3177 = vmatpush1.msra.mxu0 0.0
    %3178 = vmatprep.subr.mxu0 0.0
    %3179 = vmatpush1.msra.mxu0 0.0
    %3180 = vmatprep.subr.mxu0 0.0
    %3181 = vmatpush1.msra.mxu0 0.0
    %3182 = vmatprep.subr.mxu0 0.0
    %3183 = vmatpush1.msra.mxu0 0.0
    %3184 = vmatprep.subr.mxu0 0.0
    %3185 = vmatpush1.msra.mxu0 0.0
    %3186 = vmatprep.subr.mxu0 0.0
    %3187 = vmatpush1.msra.mxu0 0.0
    %3188 = vmatprep.subr.mxu0 0.0
    %3189 = vmatpush1.msra.mxu0 0.0
    %3190 = vmatprep.subr.mxu0 0.0
    %3191 = vmatpush1.msra.mxu0 0.0
    %3192 = vmatprep.subr.mxu0 0.0
    %3193 = vmatpush1.msra.mxu0 0.0
    %3194 = vmatprep.subr.mxu0 0.0
    %3195 = vmatpush1.msra.mxu0 0.0
    %3196 = vmatprep.subr.mxu0 0.0
    %3197 = vmatpush1.msra.mxu0 0.0
    %3198 = vmatprep.subr.mxu0 0.0
    %3199 = vmatpush1.msra.mxu0 0.0
    %3200 = vmatprep.subr.mxu0 0.0
    %3201 = vmatpush1.msra.mxu0 0.0
    %3202 = vmatprep.subr.mxu0 0.0
    %3203 = vmatpush1.msra.mxu0 0.0
    %3204 = vmatprep.subr.mxu0 0.0
    %3205 = vmatpush1.msra.mxu0 0.0
    %3206 = vmatprep.subr.mxu0 0.0
    %3207 = vmatpush1.msra.mxu0 0.0
    %3208 = vmatprep.subr.mxu0 0.0
    %3209 = vmatpush1.msra.mxu0 0.0
    %3210 = vmatprep.subr.mxu0 0.0
    %3211 = vmatpush1.msra.mxu0 0.0
    %3212 = vmatprep.subr.mxu0 0.0
    %3213 = vmatpush1.msra.mxu0 0.0
    %3214 = vmatprep.subr.mxu0 0.0
    %3215 = vmatpush1.msra.mxu0 0.0
    %3216 = vmatprep.subr.mxu0 0.0
    %3217 = vmatpush1.msra.mxu0 0.0
    %3218 = vmatprep.subr.mxu0 0.0
    %3219 = vmatpush1.msra.mxu0 0.0
    %3220 = vmatprep.subr.mxu0 0.0
    %3221 = vmatpush1.msra.mxu0 0.0
    %3222 = vmatprep.subr.mxu0 0.0
    %3223 = vmatpush1.msra.mxu0 0.0
    %3224 = vmatprep.mubr.f32.mxu0 0.0
    %3225 = vmatmul.mubr.f32.gmra.mrb[0].mxu0 %v3155
    %v3226 = vpop.f32.mrb[0].mxu0
    %v3227 = vadd.f32 0.0, %v3226
    %v3228 = vpop.f32.mrb[0].mxu0
    %3229 = vmatprep.mubr.f32.mxu0 0.0
    %3230 = vmatmul.mubr.f32.gmra.mrb[0].mxu0 %v3158
    %v3231 = vpop.f32.mrb[0].mxu0
    %v3232 = vadd.f32 0.0, %v3231
    %v3233 = vpop.f32.mrb[0].mxu0
    %3234 = vdwg.mxu0
    %v3236 = vsel %vm293, %v2448, 0
    %v3239 = vsel %vm293, %v2449, 0
    %3241 = vmatprep.subr.mxu0 0.0
    %3242 = vmatpush1.msra.mxu0 %v2452
    %3243 = vmatprep.subr.mxu0 0.0
    %3244 = vmatpush1.msra.mxu0 %v2453
    %3245 = vmatprep.subr.mxu0 0.0
    %3246 = vmatpush1.msra.mxu0 0.0
    %3247 = vmatprep.subr.mxu0 0.0
    %3248 = vmatpush1.msra.mxu0 0.0
    %3249 = vmatprep.subr.mxu0 0.0
    %3250 = vmatpush1.msra.mxu0 0.0
    %3251 = vmatprep.subr.mxu0 0.0
    %3252 = vmatpush1.msra.mxu0 0.0
    %3253 = vmatprep.subr.mxu0 0.0
    %3254 = vmatpush1.msra.mxu0 0.0
    %3255 = vmatprep.subr.mxu0 0.0
    %3256 = vmatpush1.msra.mxu0 0.0
    %3257 = vmatprep.subr.mxu0 0.0
    %3258 = vmatpush1.msra.mxu0 0.0
    %3259 = vmatprep.subr.mxu0 0.0
    %3260 = vmatpush1.msra.mxu0 0.0
    %3261 = vmatprep.subr.mxu0 0.0
    %3262 = vmatpush1.msra.mxu0 0.0
    %3263 = vmatprep.subr.mxu0 0.0
    %3264 = vmatpush1.msra.mxu0 0.0
    %3265 = vmatprep.subr.mxu0 0.0
    %3266 = vmatpush1.msra.mxu0 0.0
    %3267 = vmatprep.subr.mxu0 0.0
    %3268 = vmatpush1.msra.mxu0 0.0
    %3269 = vmatprep.subr.mxu0 0.0
    %3270 = vmatpush1.msra.mxu0 0.0
    %3271 = vmatprep.subr.mxu0 0.0
    %3272 = vmatpush1.msra.mxu0 0.0
    %3273 = vmatprep.subr.mxu0 0.0
    %3274 = vmatpush1.msra.mxu0 0.0
    %3275 = vmatprep.subr.mxu0 0.0
    %3276 = vmatpush1.msra.mxu0 0.0
    %3277 = vmatprep.subr.mxu0 0.0
    %3278 = vmatpush1.msra.mxu0 0.0
    %3279 = vmatprep.subr.mxu0 0.0
    %3280 = vmatpush1.msra.mxu0 0.0
    %3281 = vmatprep.subr.mxu0 0.0
    %3282 = vmatpush1.msra.mxu0 0.0
    %3283 = vmatprep.subr.mxu0 0.0
    %3284 = vmatpush1.msra.mxu0 0.0
    %3285 = vmatprep.subr.mxu0 0.0
    %3286 = vmatpush1.msra.mxu0 0.0
    %3287 = vmatprep.subr.mxu0 0.0
    %3288 = vmatpush1.msra.mxu0 0.0
    %3289 = vmatprep.subr.mxu0 0.0
    %3290 = vmatpush1.msra.mxu0 0.0
    %3291 = vmatprep.subr.mxu0 0.0
    %3292 = vmatpush1.msra.mxu0 0.0
    %3293 = vmatprep.subr.mxu0 0.0
    %3294 = vmatpush1.msra.mxu0 0.0
    %3295 = vmatprep.subr.mxu0 0.0
    %3296 = vmatpush1.msra.mxu0 0.0
    %3297 = vmatprep.subr.mxu0 0.0
    %3298 = vmatpush1.msra.mxu0 0.0
    %3299 = vmatprep.subr.mxu0 0.0
    %3300 = vmatpush1.msra.mxu0 0.0
    %3301 = vmatprep.subr.mxu0 0.0
    %3302 = vmatpush1.msra.mxu0 0.0
    %3303 = vmatprep.subr.mxu0 0.0
    %3304 = vmatpush1.msra.mxu0 0.0
    %3305 = vmatprep.mubr.f32.mxu0 0.0
    %3306 = vmatmul.mubr.f32.gmra.mrb[0].mxu0 %v3236
    %v3307 = vpop.f32.mrb[0].mxu0
    %v3308 = vadd.f32 0.0, %v3307
    %v3309 = vpop.f32.mrb[0].mxu0
    %3310 = vmatprep.mubr.f32.mxu0 0.0
    %3311 = vmatmul.mubr.f32.gmra.mrb[0].mxu0 %v3239
    %v3312 = vpop.f32.mrb[0].mxu0
    %v3313 = vadd.f32 0.0, %v3312
    %v3314 = vpop.f32.mrb[0].mxu0
    %3315 = vdwg.mxu0
    %v3317 = vsel %vm293, %v2450, 0
    %v3320 = vsel %vm293, %v2451, 0
    %3322 = vmatprep.subr.mxu0 0.0
    %3323 = vmatpush1.msra.mxu0 %v2452
    %3324 = vmatprep.subr.mxu0 0.0
    %3325 = vmatpush1.msra.mxu0 %v2453
    %3326 = vmatprep.subr.mxu0 0.0
    %3327 = vmatpush1.msra.mxu0 0.0
    %3328 = vmatprep.subr.mxu0 0.0
    %3329 = vmatpush1.msra.mxu0 0.0
    %3330 = vmatprep.subr.mxu0 0.0
    %3331 = vmatpush1.msra.mxu0 0.0
    %3332 = vmatprep.subr.mxu0 0.0
    %3333 = vmatpush1.msra.mxu0 0.0
    %3334 = vmatprep.subr.mxu0 0.0
    %3335 = vmatpush1.msra.mxu0 0.0
    %3336 = vmatprep.subr.mxu0 0.0
    %3337 = vmatpush1.msra.mxu0 0.0
    %3338 = vmatprep.subr.mxu0 0.0
    %3339 = vmatpush1.msra.mxu0 0.0
    %3340 = vmatprep.subr.mxu0 0.0
    %3341 = vmatpush1.msra.mxu0 0.0
    %3342 = vmatprep.subr.mxu0 0.0
    %3343 = vmatpush1.msra.mxu0 0.0
    %3344 = vmatprep.subr.mxu0 0.0
    %3345 = vmatpush1.msra.mxu0 0.0
    %3346 = vmatprep.subr.mxu0 0.0
    %3347 = vmatpush1.msra.mxu0 0.0
    %3348 = vmatprep.subr.mxu0 0.0
    %3349 = vmatpush1.msra.mxu0 0.0
    %3350 = vmatprep.subr.mxu0 0.0
    %3351 = vmatpush1.msra.mxu0 0.0
    %3352 = vmatprep.subr.mxu0 0.0
    %3353 = vmatpush1.msra.mxu0 0.0
    %3354 = vmatprep.subr.mxu0 0.0
    %3355 = vmatpush1.msra.mxu0 0.0
    %3356 = vmatprep.subr.mxu0 0.0
    %3357 = vmatpush1.msra.mxu0 0.0
    %3358 = vmatprep.subr.mxu0 0.0
    %3359 = vmatpush1.msra.mxu0 0.0
    %3360 = vmatprep.subr.mxu0 0.0
    %3361 = vmatpush1.msra.mxu0 0.0
    %3362 = vmatprep.subr.mxu0 0.0
    %3363 = vmatpush1.msra.mxu0 0.0
    %3364 = vmatprep.subr.mxu0 0.0
    %3365 = vmatpush1.msra.mxu0 0.0
    %3366 = vmatprep.subr.mxu0 0.0
    %3367 = vmatpush1.msra.mxu0 0.0
    %3368 = vmatprep.subr.mxu0 0.0
    %3369 = vmatpush1.msra.mxu0 0.0
    %3370 = vmatprep.subr.mxu0 0.0
    %3371 = vmatpush1.msra.mxu0 0.0
    %3372 = vmatprep.subr.mxu0 0.0
    %3373 = vmatpush1.msra.mxu0 0.0
    %3374 = vmatprep.subr.mxu0 0.0
    %3375 = vmatpush1.msra.mxu0 0.0
    %3376 = vmatprep.subr.mxu0 0.0
    %3377 = vmatpush1.msra.mxu0 0.0
    %3378 = vmatprep.subr.mxu0 0.0
    %3379 = vmatpush1.msra.mxu0 0.0
    %3380 = vmatprep.subr.mxu0 0.0
    %3381 = vmatpush1.msra.mxu0 0.0
    %3382 = vmatprep.subr.mxu0 0.0
    %3383 = vmatpush1.msra.mxu0 0.0
    %3384 = vmatprep.subr.mxu0 0.0
    %3385 = vmatpush1.msra.mxu0 0.0
    %3386 = vmatprep.mubr.f32.mxu0 0.0
    %3387 = vmatmul.mubr.f32.gmra.mrb[0].mxu0 %v3317
    %v3388 = vpop.f32.mrb[0].mxu0
    %v3389 = vadd.f32 0.0, %v3388
    %v3390 = vpop.f32.mrb[0].mxu0
    %3391 = vmatprep.mubr.f32.mxu0 0.0
    %3392 = vmatmul.mubr.f32.gmra.mrb[0].mxu0 %v3320
    %v3393 = vpop.f32.mrb[0].mxu0
    %v3394 = vadd.f32 0.0, %v3393
    %v3395 = vpop.f32.mrb[0].mxu0
    %3396 = vdwg.mxu0
    %v3397 = vlaneseq
    %v3398 = vshrl.u32 %v3397, 7
    %v3399 = vsub.s32 0, %v3398
    %v3400 = vrot.slane %v2671, %v3399
    %3402 = vbcast.lane.b32.xlu0 %v3400, 256
    %v3403 = vpop.permute.xlu0 %3402
    %v3404 = vlaneseq
    %v3405 = vshrl.u32 %v3404, 7
    %v3406 = vsub.s32 1, %v3405
    %v3407 = vrot.slane %v2671, %v3406
    %3409 = vbcast.lane.b32.xlu0 %v3407, 256
    %v3410 = vpop.permute.xlu0 %3409
    %v3411 = vlaneseq
    %v3412 = vshrl.u32 %v3411, 7
    %v3413 = vsub.s32 2, %v3412
    %v3414 = vrot.slane %v2671, %v3413
    %3416 = vbcast.lane.b32.xlu0 %v3414, 256
    %v3417 = vpop.permute.xlu0 %3416
    %v3418 = vlaneseq
    %v3419 = vshrl.u32 %v3418, 7
    %v3420 = vsub.s32 3, %v3419
    %v3421 = vrot.slane %v2671, %v3420
    %3423 = vbcast.lane.b32.xlu0 %v3421, 256
    %v3424 = vpop.permute.xlu0 %3423
    %v3425 = vlaneseq
    %v3426 = vshrl.u32 %v3425, 7
    %v3427 = vsub.s32 4, %v3426
    %v3428 = vrot.slane %v2671, %v3427
    %3430 = vbcast.lane.b32.xlu0 %v3428, 256
    %v3431 = vpop.permute.xlu0 %3430
    %v3432 = vlaneseq
    %v3433 = vshrl.u32 %v3432, 7
    %v3434 = vsub.s32 5, %v3433
    %v3435 = vrot.slane %v2671, %v3434
    %3437 = vbcast.lane.b32.xlu0 %v3435, 256
    %v3438 = vpop.permute.xlu0 %3437
    %v3439 = vlaneseq
    %v3440 = vshrl.u32 %v3439, 7
    %v3441 = vsub.s32 6, %v3440
    %v3442 = vrot.slane %v2671, %v3441
    %3444 = vbcast.lane.b32.xlu0 %v3442, 256
    %v3445 = vpop.permute.xlu0 %3444
    %v3446 = vlaneseq
    %v3447 = vshrl.u32 %v3446, 7
    %v3448 = vsub.s32 7, %v3447
    %v3449 = vrot.slane %v2671, %v3448
    %3451 = vbcast.lane.b32.xlu0 %v3449, 256
    %v3452 = vpop.permute.xlu0 %3451
    %v3453 = vmul.f32 %v3403, %v47
    %v3454 = vmul.f32 %v3410, %v47
    %v3455 = vmul.f32 %v3417, %v47
    %v3456 = vmul.f32 %v3424, %v47
    %v3457 = vmul.f32 %v3431, %v47
    %v3458 = vmul.f32 %v3438, %v47
    %v3459 = vmul.f32 %v3445, %v47
    %v3460 = vmul.f32 %v3452, %v47
    %v3462 = vsel %vm293, %v2454, 0
    %3464 = vmatprep.subr.mxu0 0.0
    %3465 = vmatpush1.msra.mxu0 %v2822
    %3466 = vmatprep.subr.mxu0 0.0
    %3467 = vmatpush1.msra.mxu0 %v2827
    %3468 = vmatprep.subr.mxu0 0.0
    %3469 = vmatpush1.msra.mxu0 0.0
    %3470 = vmatprep.subr.mxu0 0.0
    %3471 = vmatpush1.msra.mxu0 0.0
    %3472 = vmatprep.subr.mxu0 0.0
    %3473 = vmatpush1.msra.mxu0 0.0
    %3474 = vmatprep.subr.mxu0 0.0
    %3475 = vmatpush1.msra.mxu0 0.0
    %3476 = vmatprep.subr.mxu0 0.0
    %3477 = vmatpush1.msra.mxu0 0.0
    %3478 = vmatprep.subr.mxu0 0.0
    %3479 = vmatpush1.msra.mxu0 0.0
    %3480 = vmatprep.subr.mxu0 0.0
    %3481 = vmatpush1.msra.mxu0 0.0
    %3482 = vmatprep.subr.mxu0 0.0
    %3483 = vmatpush1.msra.mxu0 0.0
    %3484 = vmatprep.subr.mxu0 0.0
    %3485 = vmatpush1.msra.mxu0 0.0
    %3486 = vmatprep.subr.mxu0 0.0
    %3487 = vmatpush1.msra.mxu0 0.0
    %3488 = vmatprep.subr.mxu0 0.0
    %3489 = vmatpush1.msra.mxu0 0.0
    %3490 = vmatprep.subr.mxu0 0.0
    %3491 = vmatpush1.msra.mxu0 0.0
    %3492 = vmatprep.subr.mxu0 0.0
    %3493 = vmatpush1.msra.mxu0 0.0
    %3494 = vmatprep.subr.mxu0 0.0
    %3495 = vmatpush1.msra.mxu0 0.0
    %3496 = vmatprep.subr.mxu0 0.0
    %3497 = vmatpush1.msra.mxu0 0.0
    %3498 = vmatprep.subr.mxu0 0.0
    %3499 = vmatpush1.msra.mxu0 0.0
    %3500 = vmatprep.subr.mxu0 0.0
    %3501 = vmatpush1.msra.mxu0 0.0
    %3502 = vmatprep.subr.mxu0 0.0
    %3503 = vmatpush1.msra.mxu0 0.0
    %3504 = vmatprep.subr.mxu0 0.0
    %3505 = vmatpush1.msra.mxu0 0.0
    %3506 = vmatprep.subr.mxu0 0.0
    %3507 = vmatpush1.msra.mxu0 0.0
    %3508 = vmatprep.subr.mxu0 0.0
    %3509 = vmatpush1.msra.mxu0 0.0
    %3510 = vmatprep.subr.mxu0 0.0
    %3511 = vmatpush1.msra.mxu0 0.0
    %3512 = vmatprep.subr.mxu0 0.0
    %3513 = vmatpush1.msra.mxu0 0.0
    %3514 = vmatprep.subr.mxu0 0.0
    %3515 = vmatpush1.msra.mxu0 0.0
    %3516 = vmatprep.subr.mxu0 0.0
    %3517 = vmatpush1.msra.mxu0 0.0
    %3518 = vmatprep.subr.mxu0 0.0
    %3519 = vmatpush1.msra.mxu0 0.0
    %3520 = vmatprep.subr.mxu0 0.0
    %3521 = vmatpush1.msra.mxu0 0.0
    %3522 = vmatprep.subr.mxu0 0.0
    %3523 = vmatpush1.msra.mxu0 0.0
    %3524 = vmatprep.subr.mxu0 0.0
    %3525 = vmatpush1.msra.mxu0 0.0
    %3526 = vmatprep.subr.mxu0 0.0
    %3527 = vmatpush1.msra.mxu0 0.0
    %3528 = vmatprep.mubr.f32.mxu0 0.0
    %3529 = vmatmul.mubr.f32.gmra.mrb[0].mxu0 %v3462
    %v3530 = vpop.f32.mrb[0].mxu0
    %v3531 = vadd.f32 %v3453, %v3530
    %v3532 = vpop.f32.mrb[0].mxu0
    %3533 = vdwg.mxu0
    %3534 = vmatprep.subr.mxu0 0.0
    %3535 = vmatpush1.msra.mxu0 %v2903
    %3536 = vmatprep.subr.mxu0 0.0
    %3537 = vmatpush1.msra.mxu0 %v2908
    %3538 = vmatprep.subr.mxu0 0.0
    %3539 = vmatpush1.msra.mxu0 0.0
    %3540 = vmatprep.subr.mxu0 0.0
    %3541 = vmatpush1.msra.mxu0 0.0
    %3542 = vmatprep.subr.mxu0 0.0
    %3543 = vmatpush1.msra.mxu0 0.0
    %3544 = vmatprep.subr.mxu0 0.0
    %3545 = vmatpush1.msra.mxu0 0.0
    %3546 = vmatprep.subr.mxu0 0.0
    %3547 = vmatpush1.msra.mxu0 0.0
    %3548 = vmatprep.subr.mxu0 0.0
    %3549 = vmatpush1.msra.mxu0 0.0
    %3550 = vmatprep.subr.mxu0 0.0
    %3551 = vmatpush1.msra.mxu0 0.0
    %3552 = vmatprep.subr.mxu0 0.0
    %3553 = vmatpush1.msra.mxu0 0.0
    %3554 = vmatprep.subr.mxu0 0.0
    %3555 = vmatpush1.msra.mxu0 0.0
    %3556 = vmatprep.subr.mxu0 0.0
    %3557 = vmatpush1.msra.mxu0 0.0
    %3558 = vmatprep.subr.mxu0 0.0
    %3559 = vmatpush1.msra.mxu0 0.0
    %3560 = vmatprep.subr.mxu0 0.0
    %3561 = vmatpush1.msra.mxu0 0.0
    %3562 = vmatprep.subr.mxu0 0.0
    %3563 = vmatpush1.msra.mxu0 0.0
    %3564 = vmatprep.subr.mxu0 0.0
    %3565 = vmatpush1.msra.mxu0 0.0
    %3566 = vmatprep.subr.mxu0 0.0
    %3567 = vmatpush1.msra.mxu0 0.0
    %3568 = vmatprep.subr.mxu0 0.0
    %3569 = vmatpush1.msra.mxu0 0.0
    %3570 = vmatprep.subr.mxu0 0.0
    %3571 = vmatpush1.msra.mxu0 0.0
    %3572 = vmatprep.subr.mxu0 0.0
    %3573 = vmatpush1.msra.mxu0 0.0
    %3574 = vmatprep.subr.mxu0 0.0
    %3575 = vmatpush1.msra.mxu0 0.0
    %3576 = vmatprep.subr.mxu0 0.0
    %3577 = vmatpush1.msra.mxu0 0.0
    %3578 = vmatprep.subr.mxu0 0.0
    %3579 = vmatpush1.msra.mxu0 0.0
    %3580 = vmatprep.subr.mxu0 0.0
    %3581 = vmatpush1.msra.mxu0 0.0
    %3582 = vmatprep.subr.mxu0 0.0
    %3583 = vmatpush1.msra.mxu0 0.0
    %3584 = vmatprep.subr.mxu0 0.0
    %3585 = vmatpush1.msra.mxu0 0.0
    %3586 = vmatprep.subr.mxu0 0.0
    %3587 = vmatpush1.msra.mxu0 0.0
    %3588 = vmatprep.subr.mxu0 0.0
    %3589 = vmatpush1.msra.mxu0 0.0
    %3590 = vmatprep.subr.mxu0 0.0
    %3591 = vmatpush1.msra.mxu0 0.0
    %3592 = vmatprep.subr.mxu0 0.0
    %3593 = vmatpush1.msra.mxu0 0.0
    %3594 = vmatprep.subr.mxu0 0.0
    %3595 = vmatpush1.msra.mxu0 0.0
    %3596 = vmatprep.subr.mxu0 0.0
    %3597 = vmatpush1.msra.mxu0 0.0
    %3598 = vmatprep.mubr.f32.mxu0 0.0
    %3599 = vmatmul.mubr.f32.gmra.mrb[0].mxu0 %v3462
    %v3600 = vpop.f32.mrb[0].mxu0
    %v3601 = vadd.f32 %v3454, %v3600
    %v3602 = vpop.f32.mrb[0].mxu0
    %3603 = vdwg.mxu0
    %3604 = vmatprep.subr.mxu0 0.0
    %3605 = vmatpush1.msra.mxu0 %v2984
    %3606 = vmatprep.subr.mxu0 0.0
    %3607 = vmatpush1.msra.mxu0 %v2989
    %3608 = vmatprep.subr.mxu0 0.0
    %3609 = vmatpush1.msra.mxu0 0.0
    %3610 = vmatprep.subr.mxu0 0.0
    %3611 = vmatpush1.msra.mxu0 0.0
    %3612 = vmatprep.subr.mxu0 0.0
    %3613 = vmatpush1.msra.mxu0 0.0
    %3614 = vmatprep.subr.mxu0 0.0
    %3615 = vmatpush1.msra.mxu0 0.0
    %3616 = vmatprep.subr.mxu0 0.0
    %3617 = vmatpush1.msra.mxu0 0.0
    %3618 = vmatprep.subr.mxu0 0.0
    %3619 = vmatpush1.msra.mxu0 0.0
    %3620 = vmatprep.subr.mxu0 0.0
    %3621 = vmatpush1.msra.mxu0 0.0
    %3622 = vmatprep.subr.mxu0 0.0
    %3623 = vmatpush1.msra.mxu0 0.0
    %3624 = vmatprep.subr.mxu0 0.0
    %3625 = vmatpush1.msra.mxu0 0.0
    %3626 = vmatprep.subr.mxu0 0.0
    %3627 = vmatpush1.msra.mxu0 0.0
    %3628 = vmatprep.subr.mxu0 0.0
    %3629 = vmatpush1.msra.mxu0 0.0
    %3630 = vmatprep.subr.mxu0 0.0
    %3631 = vmatpush1.msra.mxu0 0.0
    %3632 = vmatprep.subr.mxu0 0.0
    %3633 = vmatpush1.msra.mxu0 0.0
    %3634 = vmatprep.subr.mxu0 0.0
    %3635 = vmatpush1.msra.mxu0 0.0
    %3636 = vmatprep.subr.mxu0 0.0
    %3637 = vmatpush1.msra.mxu0 0.0
    %3638 = vmatprep.subr.mxu0 0.0
    %3639 = vmatpush1.msra.mxu0 0.0
    %3640 = vmatprep.subr.mxu0 0.0
    %3641 = vmatpush1.msra.mxu0 0.0
    %3642 = vmatprep.subr.mxu0 0.0
    %3643 = vmatpush1.msra.mxu0 0.0
    %3644 = vmatprep.subr.mxu0 0.0
    %3645 = vmatpush1.msra.mxu0 0.0
    %3646 = vmatprep.subr.mxu0 0.0
    %3647 = vmatpush1.msra.mxu0 0.0
    %3648 = vmatprep.subr.mxu0 0.0
    %3649 = vmatpush1.msra.mxu0 0.0
    %3650 = vmatprep.subr.mxu0 0.0
    %3651 = vmatpush1.msra.mxu0 0.0
    %3652 = vmatprep.subr.mxu0 0.0
    %3653 = vmatpush1.msra.mxu0 0.0
    %3654 = vmatprep.subr.mxu0 0.0
    %3655 = vmatpush1.msra.mxu0 0.0
    %3656 = vmatprep.subr.mxu0 0.0
    %3657 = vmatpush1.msra.mxu0 0.0
    %3658 = vmatprep.subr.mxu0 0.0
    %3659 = vmatpush1.msra.mxu0 0.0
    %3660 = vmatprep.subr.mxu0 0.0
    %3661 = vmatpush1.msra.mxu0 0.0
    %3662 = vmatprep.subr.mxu0 0.0
    %3663 = vmatpush1.msra.mxu0 0.0
    %3664 = vmatprep.subr.mxu0 0.0
    %3665 = vmatpush1.msra.mxu0 0.0
    %3666 = vmatprep.subr.mxu0 0.0
    %3667 = vmatpush1.msra.mxu0 0.0
    %3668 = vmatprep.mubr.f32.mxu0 0.0
    %3669 = vmatmul.mubr.f32.gmra.mrb[0].mxu0 %v3462
    %v3670 = vpop.f32.mrb[0].mxu0
    %v3671 = vadd.f32 %v3455, %v3670
    %v3672 = vpop.f32.mrb[0].mxu0
    %3673 = vdwg.mxu0
    %3674 = vmatprep.subr.mxu0 0.0
    %3675 = vmatpush1.msra.mxu0 %v3065
    %3676 = vmatprep.subr.mxu0 0.0
    %3677 = vmatpush1.msra.mxu0 %v3070
    %3678 = vmatprep.subr.mxu0 0.0
    %3679 = vmatpush1.msra.mxu0 0.0
    %3680 = vmatprep.subr.mxu0 0.0
    %3681 = vmatpush1.msra.mxu0 0.0
    %3682 = vmatprep.subr.mxu0 0.0
    %3683 = vmatpush1.msra.mxu0 0.0
    %3684 = vmatprep.subr.mxu0 0.0
    %3685 = vmatpush1.msra.mxu0 0.0
    %3686 = vmatprep.subr.mxu0 0.0
    %3687 = vmatpush1.msra.mxu0 0.0
    %3688 = vmatprep.subr.mxu0 0.0
    %3689 = vmatpush1.msra.mxu0 0.0
    %3690 = vmatprep.subr.mxu0 0.0
    %3691 = vmatpush1.msra.mxu0 0.0
    %3692 = vmatprep.subr.mxu0 0.0
    %3693 = vmatpush1.msra.mxu0 0.0
    %3694 = vmatprep.subr.mxu0 0.0
    %3695 = vmatpush1.msra.mxu0 0.0
    %3696 = vmatprep.subr.mxu0 0.0
    %3697 = vmatpush1.msra.mxu0 0.0
    %3698 = vmatprep.subr.mxu0 0.0
    %3699 = vmatpush1.msra.mxu0 0.0
    %3700 = vmatprep.subr.mxu0 0.0
    %3701 = vmatpush1.msra.mxu0 0.0
    %3702 = vmatprep.subr.mxu0 0.0
    %3703 = vmatpush1.msra.mxu0 0.0
    %3704 = vmatprep.subr.mxu0 0.0
    %3705 = vmatpush1.msra.mxu0 0.0
    %3706 = vmatprep.subr.mxu0 0.0
    %3707 = vmatpush1.msra.mxu0 0.0
    %3708 = vmatprep.subr.mxu0 0.0
    %3709 = vmatpush1.msra.mxu0 0.0
    %3710 = vmatprep.subr.mxu0 0.0
    %3711 = vmatpush1.msra.mxu0 0.0
    %3712 = vmatprep.subr.mxu0 0.0
    %3713 = vmatpush1.msra.mxu0 0.0
    %3714 = vmatprep.subr.mxu0 0.0
    %3715 = vmatpush1.msra.mxu0 0.0
    %3716 = vmatprep.subr.mxu0 0.0
    %3717 = vmatpush1.msra.mxu0 0.0
    %3718 = vmatprep.subr.mxu0 0.0
    %3719 = vmatpush1.msra.mxu0 0.0
    %3720 = vmatprep.subr.mxu0 0.0
    %3721 = vmatpush1.msra.mxu0 0.0
    %3722 = vmatprep.subr.mxu0 0.0
    %3723 = vmatpush1.msra.mxu0 0.0
    %3724 = vmatprep.subr.mxu0 0.0
    %3725 = vmatpush1.msra.mxu0 0.0
    %3726 = vmatprep.subr.mxu0 0.0
    %3727 = vmatpush1.msra.mxu0 0.0
    %3728 = vmatprep.subr.mxu0 0.0
    %3729 = vmatpush1.msra.mxu0 0.0
    %3730 = vmatprep.subr.mxu0 0.0
    %3731 = vmatpush1.msra.mxu0 0.0
    %3732 = vmatprep.subr.mxu0 0.0
    %3733 = vmatpush1.msra.mxu0 0.0
    %3734 = vmatprep.subr.mxu0 0.0
    %3735 = vmatpush1.msra.mxu0 0.0
    %3736 = vmatprep.subr.mxu0 0.0
    %3737 = vmatpush1.msra.mxu0 0.0
    %3738 = vmatprep.mubr.f32.mxu0 0.0
    %3739 = vmatmul.mubr.f32.gmra.mrb[0].mxu0 %v3462
    %v3740 = vpop.f32.mrb[0].mxu0
    %v3741 = vadd.f32 %v3456, %v3740
    %v3742 = vpop.f32.mrb[0].mxu0
    %3743 = vdwg.mxu0
    %3744 = vmatprep.subr.mxu0 0.0
    %3745 = vmatpush1.msra.mxu0 %v3146
    %3746 = vmatprep.subr.mxu0 0.0
    %3747 = vmatpush1.msra.mxu0 %v3151
    %3748 = vmatprep.subr.mxu0 0.0
    %3749 = vmatpush1.msra.mxu0 0.0
    %3750 = vmatprep.subr.mxu0 0.0
    %3751 = vmatpush1.msra.mxu0 0.0
    %3752 = vmatprep.subr.mxu0 0.0
    %3753 = vmatpush1.msra.mxu0 0.0
    %3754 = vmatprep.subr.mxu0 0.0
    %3755 = vmatpush1.msra.mxu0 0.0
    %3756 = vmatprep.subr.mxu0 0.0
    %3757 = vmatpush1.msra.mxu0 0.0
    %3758 = vmatprep.subr.mxu0 0.0
    %3759 = vmatpush1.msra.mxu0 0.0
    %3760 = vmatprep.subr.mxu0 0.0
    %3761 = vmatpush1.msra.mxu0 0.0
    %3762 = vmatprep.subr.mxu0 0.0
    %3763 = vmatpush1.msra.mxu0 0.0
    %3764 = vmatprep.subr.mxu0 0.0
    %3765 = vmatpush1.msra.mxu0 0.0
    %3766 = vmatprep.subr.mxu0 0.0
    %3767 = vmatpush1.msra.mxu0 0.0
    %3768 = vmatprep.subr.mxu0 0.0
    %3769 = vmatpush1.msra.mxu0 0.0
    %3770 = vmatprep.subr.mxu0 0.0
    %3771 = vmatpush1.msra.mxu0 0.0
    %3772 = vmatprep.subr.mxu0 0.0
    %3773 = vmatpush1.msra.mxu0 0.0
    %3774 = vmatprep.subr.mxu0 0.0
    %3775 = vmatpush1.msra.mxu0 0.0
    %3776 = vmatprep.subr.mxu0 0.0
    %3777 = vmatpush1.msra.mxu0 0.0
    %3778 = vmatprep.subr.mxu0 0.0
    %3779 = vmatpush1.msra.mxu0 0.0
    %3780 = vmatprep.subr.mxu0 0.0
    %3781 = vmatpush1.msra.mxu0 0.0
    %3782 = vmatprep.subr.mxu0 0.0
    %3783 = vmatpush1.msra.mxu0 0.0
    %3784 = vmatprep.subr.mxu0 0.0
    %3785 = vmatpush1.msra.mxu0 0.0
    %3786 = vmatprep.subr.mxu0 0.0
    %3787 = vmatpush1.msra.mxu0 0.0
    %3788 = vmatprep.subr.mxu0 0.0
    %3789 = vmatpush1.msra.mxu0 0.0
    %3790 = vmatprep.subr.mxu0 0.0
    %3791 = vmatpush1.msra.mxu0 0.0
    %3792 = vmatprep.subr.mxu0 0.0
    %3793 = vmatpush1.msra.mxu0 0.0
    %3794 = vmatprep.subr.mxu0 0.0
    %3795 = vmatpush1.msra.mxu0 0.0
    %3796 = vmatprep.subr.mxu0 0.0
    %3797 = vmatpush1.msra.mxu0 0.0
    %3798 = vmatprep.subr.mxu0 0.0
    %3799 = vmatpush1.msra.mxu0 0.0
    %3800 = vmatprep.subr.mxu0 0.0
    %3801 = vmatpush1.msra.mxu0 0.0
    %3802 = vmatprep.subr.mxu0 0.0
    %3803 = vmatpush1.msra.mxu0 0.0
    %3804 = vmatprep.subr.mxu0 0.0
    %3805 = vmatpush1.msra.mxu0 0.0
    %3806 = vmatprep.subr.mxu0 0.0
    %3807 = vmatpush1.msra.mxu0 0.0
    %3808 = vmatprep.mubr.f32.mxu0 0.0
    %3809 = vmatmul.mubr.f32.gmra.mrb[0].mxu0 %v3462
    %v3810 = vpop.f32.mrb[0].mxu0
    %v3811 = vadd.f32 %v3457, %v3810
    %v3812 = vpop.f32.mrb[0].mxu0
    %3813 = vdwg.mxu0
    %3814 = vmatprep.subr.mxu0 0.0
    %3815 = vmatpush1.msra.mxu0 %v3227
    %3816 = vmatprep.subr.mxu0 0.0
    %3817 = vmatpush1.msra.mxu0 %v3232
    %3818 = vmatprep.subr.mxu0 0.0
    %3819 = vmatpush1.msra.mxu0 0.0
    %3820 = vmatprep.subr.mxu0 0.0
    %3821 = vmatpush1.msra.mxu0 0.0
    %3822 = vmatprep.subr.mxu0 0.0
    %3823 = vmatpush1.msra.mxu0 0.0
    %3824 = vmatprep.subr.mxu0 0.0
    %3825 = vmatpush1.msra.mxu0 0.0
    %3826 = vmatprep.subr.mxu0 0.0
    %3827 = vmatpush1.msra.mxu0 0.0
    %3828 = vmatprep.subr.mxu0 0.0
    %3829 = vmatpush1.msra.mxu0 0.0
    %3830 = vmatprep.subr.mxu0 0.0
    %3831 = vmatpush1.msra.mxu0 0.0
    %3832 = vmatprep.subr.mxu0 0.0
    %3833 = vmatpush1.msra.mxu0 0.0
    %3834 = vmatprep.subr.mxu0 0.0
    %3835 = vmatpush1.msra.mxu0 0.0
    %3836 = vmatprep.subr.mxu0 0.0
    %3837 = vmatpush1.msra.mxu0 0.0
    %3838 = vmatprep.subr.mxu0 0.0
    %3839 = vmatpush1.msra.mxu0 0.0
    %3840 = vmatprep.subr.mxu0 0.0
    %3841 = vmatpush1.msra.mxu0 0.0
    %3842 = vmatprep.subr.mxu0 0.0
    %3843 = vmatpush1.msra.mxu0 0.0
    %3844 = vmatprep.subr.mxu0 0.0
    %3845 = vmatpush1.msra.mxu0 0.0
    %3846 = vmatprep.subr.mxu0 0.0
    %3847 = vmatpush1.msra.mxu0 0.0
    %3848 = vmatprep.subr.mxu0 0.0
    %3849 = vmatpush1.msra.mxu0 0.0
    %3850 = vmatprep.subr.mxu0 0.0
    %3851 = vmatpush1.msra.mxu0 0.0
    %3852 = vmatprep.subr.mxu0 0.0
    %3853 = vmatpush1.msra.mxu0 0.0
    %3854 = vmatprep.subr.mxu0 0.0
    %3855 = vmatpush1.msra.mxu0 0.0
    %3856 = vmatprep.subr.mxu0 0.0
    %3857 = vmatpush1.msra.mxu0 0.0
    %3858 = vmatprep.subr.mxu0 0.0
    %3859 = vmatpush1.msra.mxu0 0.0
    %3860 = vmatprep.subr.mxu0 0.0
    %3861 = vmatpush1.msra.mxu0 0.0
    %3862 = vmatprep.subr.mxu0 0.0
    %3863 = vmatpush1.msra.mxu0 0.0
    %3864 = vmatprep.subr.mxu0 0.0
    %3865 = vmatpush1.msra.mxu0 0.0
    %3866 = vmatprep.subr.mxu0 0.0
    %3867 = vmatpush1.msra.mxu0 0.0
    %3868 = vmatprep.subr.mxu0 0.0
    %3869 = vmatpush1.msra.mxu0 0.0
    %3870 = vmatprep.subr.mxu0 0.0
    %3871 = vmatpush1.msra.mxu0 0.0
    %3872 = vmatprep.subr.mxu0 0.0
    %3873 = vmatpush1.msra.mxu0 0.0
    %3874 = vmatprep.subr.mxu0 0.0
    %3875 = vmatpush1.msra.mxu0 0.0
    %3876 = vmatprep.subr.mxu0 0.0
    %3877 = vmatpush1.msra.mxu0 0.0
    %3878 = vmatprep.mubr.f32.mxu0 0.0
    %3879 = vmatmul.mubr.f32.gmra.mrb[0].mxu0 %v3462
    %v3880 = vpop.f32.mrb[0].mxu0
    %v3881 = vadd.f32 %v3458, %v3880
    %v3882 = vpop.f32.mrb[0].mxu0
    %3883 = vdwg.mxu0
    %3884 = vmatprep.subr.mxu0 0.0
    %3885 = vmatpush1.msra.mxu0 %v3308
    %3886 = vmatprep.subr.mxu0 0.0
    %3887 = vmatpush1.msra.mxu0 %v3313
    %3888 = vmatprep.subr.mxu0 0.0
    %3889 = vmatpush1.msra.mxu0 0.0
    %3890 = vmatprep.subr.mxu0 0.0
    %3891 = vmatpush1.msra.mxu0 0.0
    %3892 = vmatprep.subr.mxu0 0.0
    %3893 = vmatpush1.msra.mxu0 0.0
    %3894 = vmatprep.subr.mxu0 0.0
    %3895 = vmatpush1.msra.mxu0 0.0
    %3896 = vmatprep.subr.mxu0 0.0
    %3897 = vmatpush1.msra.mxu0 0.0
    %3898 = vmatprep.subr.mxu0 0.0
    %3899 = vmatpush1.msra.mxu0 0.0
    %3900 = vmatprep.subr.mxu0 0.0
    %3901 = vmatpush1.msra.mxu0 0.0
    %3902 = vmatprep.subr.mxu0 0.0
    %3903 = vmatpush1.msra.mxu0 0.0
    %3904 = vmatprep.subr.mxu0 0.0
    %3905 = vmatpush1.msra.mxu0 0.0
    %3906 = vmatprep.subr.mxu0 0.0
    %3907 = vmatpush1.msra.mxu0 0.0
    %3908 = vmatprep.subr.mxu0 0.0
    %3909 = vmatpush1.msra.mxu0 0.0
    %3910 = vmatprep.subr.mxu0 0.0
    %3911 = vmatpush1.msra.mxu0 0.0
    %3912 = vmatprep.subr.mxu0 0.0
    %3913 = vmatpush1.msra.mxu0 0.0
    %3914 = vmatprep.subr.mxu0 0.0
    %3915 = vmatpush1.msra.mxu0 0.0
    %3916 = vmatprep.subr.mxu0 0.0
    %3917 = vmatpush1.msra.mxu0 0.0
    %3918 = vmatprep.subr.mxu0 0.0
    %3919 = vmatpush1.msra.mxu0 0.0
    %3920 = vmatprep.subr.mxu0 0.0
    %3921 = vmatpush1.msra.mxu0 0.0
    %3922 = vmatprep.subr.mxu0 0.0
    %3923 = vmatpush1.msra.mxu0 0.0
    %3924 = vmatprep.subr.mxu0 0.0
    %3925 = vmatpush1.msra.mxu0 0.0
    %3926 = vmatprep.subr.mxu0 0.0
    %3927 = vmatpush1.msra.mxu0 0.0
    %3928 = vmatprep.subr.mxu0 0.0
    %3929 = vmatpush1.msra.mxu0 0.0
    %3930 = vmatprep.subr.mxu0 0.0
    %3931 = vmatpush1.msra.mxu0 0.0
    %3932 = vmatprep.subr.mxu0 0.0
    %3933 = vmatpush1.msra.mxu0 0.0
    %3934 = vmatprep.subr.mxu0 0.0
    %3935 = vmatpush1.msra.mxu0 0.0
    %3936 = vmatprep.subr.mxu0 0.0
    %3937 = vmatpush1.msra.mxu0 0.0
    %3938 = vmatprep.subr.mxu0 0.0
    %3939 = vmatpush1.msra.mxu0 0.0
    %3940 = vmatprep.subr.mxu0 0.0
    %3941 = vmatpush1.msra.mxu0 0.0
    %3942 = vmatprep.subr.mxu0 0.0
    %3943 = vmatpush1.msra.mxu0 0.0
    %3944 = vmatprep.subr.mxu0 0.0
    %3945 = vmatpush1.msra.mxu0 0.0
    %3946 = vmatprep.subr.mxu0 0.0
    %3947 = vmatpush1.msra.mxu0 0.0
    %3948 = vmatprep.mubr.f32.mxu0 0.0
    %3949 = vmatmul.mubr.f32.gmra.mrb[0].mxu0 %v3462
    %v3950 = vpop.f32.mrb[0].mxu0
    %v3951 = vadd.f32 %v3459, %v3950
    %v3952 = vpop.f32.mrb[0].mxu0
    %3953 = vdwg.mxu0
    %3954 = vmatprep.subr.mxu0 0.0
    %3955 = vmatpush1.msra.mxu0 %v3389
    %3956 = vmatprep.subr.mxu0 0.0
    %3957 = vmatpush1.msra.mxu0 %v3394
    %3958 = vmatprep.subr.mxu0 0.0
    %3959 = vmatpush1.msra.mxu0 0.0
    %3960 = vmatprep.subr.mxu0 0.0
    %3961 = vmatpush1.msra.mxu0 0.0
    %3962 = vmatprep.subr.mxu0 0.0
    %3963 = vmatpush1.msra.mxu0 0.0
    %3964 = vmatprep.subr.mxu0 0.0
    %3965 = vmatpush1.msra.mxu0 0.0
    %3966 = vmatprep.subr.mxu0 0.0
    %3967 = vmatpush1.msra.mxu0 0.0
    %3968 = vmatprep.subr.mxu0 0.0
    %3969 = vmatpush1.msra.mxu0 0.0
    %3970 = vmatprep.subr.mxu0 0.0
    %3971 = vmatpush1.msra.mxu0 0.0
    %3972 = vmatprep.subr.mxu0 0.0
    %3973 = vmatpush1.msra.mxu0 0.0
    %3974 = vmatprep.subr.mxu0 0.0
    %3975 = vmatpush1.msra.mxu0 0.0
    %3976 = vmatprep.subr.mxu0 0.0
    %3977 = vmatpush1.msra.mxu0 0.0
    %3978 = vmatprep.subr.mxu0 0.0
    %3979 = vmatpush1.msra.mxu0 0.0
    %3980 = vmatprep.subr.mxu0 0.0
    %3981 = vmatpush1.msra.mxu0 0.0
    %3982 = vmatprep.subr.mxu0 0.0
    %3983 = vmatpush1.msra.mxu0 0.0
    %3984 = vmatprep.subr.mxu0 0.0
    %3985 = vmatpush1.msra.mxu0 0.0
    %3986 = vmatprep.subr.mxu0 0.0
    %3987 = vmatpush1.msra.mxu0 0.0
    %3988 = vmatprep.subr.mxu0 0.0
    %3989 = vmatpush1.msra.mxu0 0.0
    %3990 = vmatprep.subr.mxu0 0.0
    %3991 = vmatpush1.msra.mxu0 0.0
    %3992 = vmatprep.subr.mxu0 0.0
    %3993 = vmatpush1.msra.mxu0 0.0
    %3994 = vmatprep.subr.mxu0 0.0
    %3995 = vmatpush1.msra.mxu0 0.0
    %3996 = vmatprep.subr.mxu0 0.0
    %3997 = vmatpush1.msra.mxu0 0.0
    %3998 = vmatprep.subr.mxu0 0.0
    %3999 = vmatpush1.msra.mxu0 0.0
    %4000 = vmatprep.subr.mxu0 0.0
    %4001 = vmatpush1.msra.mxu0 0.0
    %4002 = vmatprep.subr.mxu0 0.0
    %4003 = vmatpush1.msra.mxu0 0.0
    %4004 = vmatprep.subr.mxu0 0.0
    %4005 = vmatpush1.msra.mxu0 0.0
    %4006 = vmatprep.subr.mxu0 0.0
    %4007 = vmatpush1.msra.mxu0 0.0
    %4008 = vmatprep.subr.mxu0 0.0
    %4009 = vmatpush1.msra.mxu0 0.0
    %4010 = vmatprep.subr.mxu0 0.0
    %4011 = vmatpush1.msra.mxu0 0.0
    %4012 = vmatprep.subr.mxu0 0.0
    %4013 = vmatpush1.msra.mxu0 0.0
    %4014 = vmatprep.subr.mxu0 0.0
    %4015 = vmatpush1.msra.mxu0 0.0
    %4016 = vmatprep.subr.mxu0 0.0
    %4017 = vmatpush1.msra.mxu0 0.0
    %4018 = vmatprep.mubr.f32.mxu0 0.0
    %4019 = vmatmul.mubr.f32.gmra.mrb[0].mxu0 %v3462
    %v4020 = vpop.f32.mrb[0].mxu0
    %v4021 = vadd.f32 %v3460, %v4020
    %v4022 = vpop.f32.mrb[0].mxu0
    %4023 = vdwg.mxu0
    %v4024 = vld [vmem:[#allocation5 + $0x61] sm:$0x1]
    %v4025 = vld [vmem:[#allocation5 + $0x62] sm:$0x1]
    %vm4026 = vcmask 64512
    %v4027 = vsel %vm4026, %v2746, 0.0
    %v4028 = vrot.slane %v4027, 4
    %v4029 = vadd.f32 %v4027, %v4028
    %v4030 = vrot.slane %v4029, 2
    %v4031 = vadd.f32 %v4029, %v4030
    %v4032 = vrot.slane %v4031, 1
    %v4033 = vadd.f32 %v4031, %v4032
    %v4034 = vmul.f32 %v4033, %v301
    %v4035 = vsub.f32 %v2746, %v4034
    %v4036 = vmul.f32 %v4035, %v4035
    %v4037 = vsel %vm4026, %v4036, 0.0
    %v4038 = vrot.slane %v4037, 4
    %v4039 = vadd.f32 %v4037, %v4038
    %v4040 = vrot.slane %v4039, 2
    %v4041 = vadd.f32 %v4039, %v4040
    %v4042 = vrot.slane %v4041, 1
    %v4043 = vadd.f32 %v4041, %v4042
    %v4044 = vmul.f32 %v4043, %v301
    %v4045 = vlaneseq
    %v4046 = vshrl.u32 %v4045, 7
    %v4047 = vsub.s32 0, %v4046
    %v4048 = vrot.slane %v4024, %v4047
    %v4049 = vmul.f32 %v4048, %v4035
    %v4050 = vadd.f32 %v4044, 1e-05
    %v4051 = vrsqrt.pop %v4050
    %v4052 = vmul.f32 %v4049, %v4051
    %v4053 = vlaneseq
    %v4054 = vshrl.u32 %v4053, 7
    %v4055 = vsub.s32 0, %v4054
    %v4056 = vrot.slane %v4025, %v4055
    %v4057 = vadd.f32 %v4052, %v4056
    %vm4058 = vcmp.gt.f32.partialorder %v4057, 0.0
    %v4059 = vsel %vm4058, 1, 0
    %v4060 = vcvt.s32.f32 %v4059
    %v4061 = vmul.f32 %v4057, %v4060
    %v4062 = vlaneseq
    %v4063 = vshrl.u32 %v4062, 7
    %v4064 = vsub.s32 0, %v4063
    %v4065 = vrot.slane %v4060, %v4064
    %4067 = vbcast.lane.b32.xlu0 %v4065, 256
    %v4068 = vpop.permute.xlu0 %4067
    %v4069 = vlaneseq
    %v4070 = vshrl.u32 %v4069, 7
    %v4071 = vsub.s32 1, %v4070
    %v4072 = vrot.slane %v4060, %v4071
    %4074 = vbcast.lane.b32.xlu0 %v4072, 256
    %v4075 = vpop.permute.xlu0 %4074
    %v4076 = vlaneseq
    %v4077 = vshrl.u32 %v4076, 7
    %v4078 = vsub.s32 2, %v4077
    %v4079 = vrot.slane %v4060, %v4078
    %4081 = vbcast.lane.b32.xlu0 %v4079, 256
    %v4082 = vpop.permute.xlu0 %4081
    %v4083 = vlaneseq
    %v4084 = vshrl.u32 %v4083, 7
    %v4085 = vsub.s32 3, %v4084
    %v4086 = vrot.slane %v4060, %v4085
    %4088 = vbcast.lane.b32.xlu0 %v4086, 256
    %v4089 = vpop.permute.xlu0 %4088
    %v4090 = vlaneseq
    %v4091 = vshrl.u32 %v4090, 7
    %v4092 = vsub.s32 4, %v4091
    %v4093 = vrot.slane %v4060, %v4092
    %4095 = vbcast.lane.b32.xlu0 %v4093, 256
    %v4096 = vpop.permute.xlu0 %4095
    %v4097 = vlaneseq
    %v4098 = vshrl.u32 %v4097, 7
    %v4099 = vsub.s32 5, %v4098
    %v4100 = vrot.slane %v4060, %v4099
    %4102 = vbcast.lane.b32.xlu0 %v4100, 256
    %v4103 = vpop.permute.xlu0 %4102
    %v4104 = vlaneseq
    %v4105 = vshrl.u32 %v4104, 7
    %v4106 = vsub.s32 6, %v4105
    %v4107 = vrot.slane %v4060, %v4106
    %4109 = vbcast.lane.b32.xlu0 %v4107, 256
    %v4110 = vpop.permute.xlu0 %4109
    %v4111 = vlaneseq
    %v4112 = vshrl.u32 %v4111, 7
    %v4113 = vsub.s32 7, %v4112
    %v4114 = vrot.slane %v4060, %v4113
    %4116 = vbcast.lane.b32.xlu0 %v4114, 256
    %v4117 = vpop.permute.xlu0 %4116
    %v4118 = vmul.f32 %v3531, %v4068
    %v4119 = vmul.f32 %v3601, %v4075
    %v4120 = vmul.f32 %v3671, %v4082
    %v4121 = vmul.f32 %v3741, %v4089
    %v4122 = vmul.f32 %v3811, %v4096
    %v4123 = vmul.f32 %v3881, %v4103
    %v4124 = vmul.f32 %v3951, %v4110
    %v4125 = vmul.f32 %v4021, %v4117
    %v4127 = vcombine.high %v4060, %v4060
    %v4129 = vunpack.c.l.s4 1966171168
    %v4130 = vunpack.c.0.s8 %v4129
    %v4131 = vlaneseq
    %v4132 = vshrl.u32 %v4131, 7
    %v4133 = vsub.s32 %v4130, %v4132
    %v4134 = vrot.slane %v4060, %v4133
    %v4136 = vunpack.c.l.s4 1966171168
    %v4137 = vunpack.c.0.s8 %v4136
    %v4138 = vlaneseq
    %v4139 = vshrl.u32 %v4138, 7
    %v4140 = vsub.s32 %v4137, %v4139
    %v4141 = vrot.slane %v4127, %v4140
    %v4142 = vcombine.high %v4134, %v4134
    %v4143 = vcombine.high %v4141, %v4141
    %v4145 = vunpack.c.l.s4 1966171168
    %v4146 = vunpack.c.0.s8 %v4145
    %v4147 = vlaneseq
    %v4148 = vshrl.u32 %v4147, 7
    %v4149 = vsub.s32 %v4146, %v4148
    %v4150 = vrot.slane %v4134, %v4149
    %v4152 = vunpack.c.l.s4 1966171168
    %v4153 = vunpack.c.0.s8 %v4152
    %v4154 = vlaneseq
    %v4155 = vshrl.u32 %v4154, 7
    %v4156 = vsub.s32 %v4153, %v4155
    %v4157 = vrot.slane %v4141, %v4156
    %v4159 = vunpack.c.l.s4 1966171168
    %v4160 = vunpack.c.0.s8 %v4159
    %v4161 = vlaneseq
    %v4162 = vshrl.u32 %v4161, 7
    %v4163 = vsub.s32 %v4160, %v4162
    %v4164 = vrot.slane %v4142, %v4163
    %v4166 = vunpack.c.l.s4 1966171168
    %v4167 = vunpack.c.0.s8 %v4166
    %v4168 = vlaneseq
    %v4169 = vshrl.u32 %v4168, 7
    %v4170 = vsub.s32 %v4167, %v4169
    %v4171 = vrot.slane %v4143, %v4170
    %v4172 = vcombine.high %v4150, %v4150
    %v4173 = vcombine.high %v4157, %v4157
    %v4174 = vcombine.high %v4164, %v4164
    %v4175 = vcombine.high %v4171, %v4171
    %v4176 = vlaneseq
    %v4177 = vshrl.u32 %v4176, 7
    %v4178 = vsub.s32 0, %v4177
    %v4179 = vrot.slane %v4150, %v4178
    %v4180 = vlaneseq
    %v4181 = vshrl.u32 %v4180, 7
    %v4182 = vsub.s32 0, %v4181
    %v4183 = vrot.slane %v4164, %v4182
    %v4184 = vlaneseq
    %v4185 = vshrl.u32 %v4184, 7
    %v4186 = vsub.s32 0, %v4185
    %v4187 = vrot.slane %v4172, %v4186
    %v4188 = vlaneseq
    %v4189 = vshrl.u32 %v4188, 7
    %v4190 = vsub.s32 0, %v4189
    %v4191 = vrot.slane %v4174, %v4190
    %v4192 = vlaneseq
    %v4193 = vshrl.u32 %v4192, 7
    %v4194 = vsub.s32 0, %v4193
    %v4195 = vrot.slane %v4157, %v4194
    %v4196 = vlaneseq
    %v4197 = vshrl.u32 %v4196, 7
    %v4198 = vsub.s32 0, %v4197
    %v4199 = vrot.slane %v4171, %v4198
    %v4200 = vlaneseq
    %v4201 = vshrl.u32 %v4200, 7
    %v4202 = vsub.s32 0, %v4201
    %v4203 = vrot.slane %v4173, %v4202
    %v4204 = vlaneseq
    %v4205 = vshrl.u32 %v4204, 7
    %v4206 = vsub.s32 0, %v4205
    %v4207 = vrot.slane %v4175, %v4206
    %v4216 = vmul.f32 %v4118, %v4179
    %v4217 = vmul.f32 %v4119, %v4183
    %v4218 = vmul.f32 %v4120, %v4187
    %v4219 = vmul.f32 %v4121, %v4191
    %v4220 = vmul.f32 %v4122, %v4195
    %v4221 = vmul.f32 %v4123, %v4199
    %v4222 = vmul.f32 %v4124, %v4203
    %v4223 = vmul.f32 %v4125, %v4207
    %v4224 = vld [vmem:[#allocation5 + $0x63] sm:$0xff]
    %v4225 = vld [vmem:[#allocation5 + $0x6b] sm:$0x1]
    %v4226 = vld [vmem:[#allocation5 + $0x6c] sm:$0x1]
    %v4227 = vld [vmem:[#allocation5 + $0x6d] sm:$0x1]
    %v4228 = vld [vmem:[#allocation5 + $0x6e] sm:$0x1]
    %v4229 = vmul.f32 %v4216, %v47
    %v4230 = vmul.f32 %v4217, %v47
    %v4231 = vmul.f32 %v4218, %v47
    %v4232 = vmul.f32 %v4219, %v47
    %v4233 = vmul.f32 %v4220, %v47
    %v4234 = vmul.f32 %v4221, %v47
    %v4235 = vmul.f32 %v4222, %v47
    %v4236 = vmul.f32 %v4223, %v47
    %v4237 = vsel %vm4026, %v4229, 0.0
    %4238 = vadd.xlane.f32.xlu0 %v4237
    %v4239 = vpop.xlane.xlu0 %4238
    %v4240 = vsel %vm4026, %v4230, 0.0
    %4241 = vadd.xlane.f32.xlu0 %v4240
    %v4242 = vpop.xlane.xlu0 %4241
    %v4243 = vsel %vm4026, %v4231, 0.0
    %4244 = vadd.xlane.f32.xlu0 %v4243
    %v4245 = vpop.xlane.xlu0 %4244
    %v4246 = vsel %vm4026, %v4232, 0.0
    %4247 = vadd.xlane.f32.xlu0 %v4246
    %v4248 = vpop.xlane.xlu0 %4247
    %v4249 = vsel %vm4026, %v4233, 0.0
    %4250 = vadd.xlane.f32.xlu0 %v4249
    %v4251 = vpop.xlane.xlu0 %4250
    %v4252 = vsel %vm4026, %v4234, 0.0
    %4253 = vadd.xlane.f32.xlu0 %v4252
    %v4254 = vpop.xlane.xlu0 %4253
    %v4255 = vsel %vm4026, %v4235, 0.0
    %4256 = vadd.xlane.f32.xlu0 %v4255
    %v4257 = vpop.xlane.xlu0 %4256
    %v4258 = vsel %vm4026, %v4236, 0.0
    %4259 = vadd.xlane.f32.xlu0 %v4258
    %v4260 = vpop.xlane.xlu0 %4259
    %v4269 = vlaneseq
    %v4270 = vshrl.u32 %v4269, 7
    %v4271 = vsub.s32 %v42, %v4270
    %v4272 = vrot.slane %v4239, %v4271
    %v4273 = vlaneseq
    %v4274 = vshrl.u32 %v4273, 7
    %v4275 = vsub.s32 %v42, %v4274
    %v4276 = vrot.slane %v4242, %v4275
    %v4277 = vlaneseq
    %v4278 = vshrl.u32 %v4277, 7
    %v4279 = vsub.s32 %v42, %v4278
    %v4280 = vrot.slane %v4245, %v4279
    %v4281 = vlaneseq
    %v4282 = vshrl.u32 %v4281, 7
    %v4283 = vsub.s32 %v42, %v4282
    %v4284 = vrot.slane %v4248, %v4283
    %v4285 = vlaneseq
    %v4286 = vshrl.u32 %v4285, 7
    %v4287 = vsub.s32 %v42, %v4286
    %v4288 = vrot.slane %v4251, %v4287
    %v4289 = vlaneseq
    %v4290 = vshrl.u32 %v4289, 7
    %v4291 = vsub.s32 %v42, %v4290
    %v4292 = vrot.slane %v4254, %v4291
    %v4293 = vlaneseq
    %v4294 = vshrl.u32 %v4293, 7
    %v4295 = vsub.s32 %v42, %v4294
    %v4296 = vrot.slane %v4257, %v4295
    %v4297 = vlaneseq
    %v4298 = vshrl.u32 %v4297, 7
    %v4299 = vsub.s32 %v42, %v4298
    %v4300 = vrot.slane %v4260, %v4299
    %v4301 = vsel %vm701, %v4276, %v4272
    %v4302 = vsel %vm703, %v4280, %v4301
    %v4303 = vsel %vm705, %v4284, %v4302
    %v4304 = vsel %vm707, %v4288, %v4303
    %v4305 = vsel %vm709, %v4292, %v4304
    %v4306 = vsel %vm711, %v4296, %v4305
    %v4307 = vsel %vm713, %v4300, %v4306
    %v4309 = vsel %vm4026, %v4307, 0.0
    %4310 = vadd.xlane.f32.xlu0 %v4309
    %v4311 = vpop.xlane.xlu0 %4310
    %v4312 = vmul.f32 %v4061, %v4061
    %v4313 = vsel %vm4026, %v4312, 0.0
    %4314 = vadd.xlane.f32.xlu0 %v4313
    %v4315 = vpop.xlane.xlu0 %4314
    %v4316 = vmax.f32 %v4227, 0.0
    %vm4317 = vcmp.ne.f32.partialorder %v4227, %v4227
    %v4318 = vadd.f32 %v4227, 0.0
    %v4319 = vand.u32 2147483647, %v4227
    %v4320 = vsub.f32 0.0, %v4319
    %v4321 = vmul.f32 %v4320, 1.442695
    %v4322 = vpow.pop %v4321
    %v4323 = vadd.f32 %v4322, 1.0
    %v4324 = vlog2.pop %v4323
    %v4325 = vmul.f32 %v4324, 0.6931472
    %v4326 = vmul.f32 -0.5, %v4322
    %v4327 = vadd.f32 %v4326, 1.0
    %v4328 = vmul.f32 %v4327, %v4322
    %v4329 = vand.u32 2147483647, %v4322
    %vm4330 = vcmp.lt.f32.partialorder %v4329, 0.0004427343
    %v4331 = vsel %vm4330, %v4328, %v4325
    %v4332 = vadd.f32 %v4316, %v4331
    %v4333 = vsel %vm4317, %v4318, %v4332
    %v4334 = vadd.f32 %v4311, %v4315
    %v4335 = vlaneseq
    %v4336 = vshrl.u32 %v4335, 7
    %v4337 = vsub.s32 0, %v4336
    %v4338 = vrot.slane %v4333, %v4337
    %v4339 = vmul.f32 %v4338, %v4334
    %v4340 = vmax.f32 %v4228, 0.0
    %vm4341 = vcmp.ne.f32.partialorder %v4228, %v4228
    %v4342 = vadd.f32 %v4228, 0.0
    %v4343 = vand.u32 2147483647, %v4228
    %v4344 = vsub.f32 0.0, %v4343
    %v4345 = vmul.f32 %v4344, 1.442695
    %v4346 = vpow.pop %v4345
    %v4347 = vadd.f32 %v4346, 1.0
    %v4348 = vlog2.pop %v4347
    %v4349 = vmul.f32 %v4348, 0.6931472
    %v4350 = vmul.f32 -0.5, %v4346
    %v4351 = vadd.f32 %v4350, 1.0
    %v4352 = vmul.f32 %v4351, %v4346
    %v4353 = vand.u32 2147483647, %v4346
    %vm4354 = vcmp.lt.f32.partialorder %v4353, 0.0004427343
    %v4355 = vsel %vm4354, %v4352, %v4349
    %v4356 = vadd.f32 %v4340, %v4355
    %v4357 = vsel %vm4341, %v4342, %v4356
    %v4358 = vlaneseq
    %v4359 = vshrl.u32 %v4358, 7
    %v4360 = vsub.s32 0, %v4359
    %v4361 = vrot.slane %v4357, %v4360
    %v4362 = vadd.f32 %v4339, %v4361
    %v4363 = vlaneseq
    %v4364 = vshrl.u32 %v4363, 7
    %v4365 = vsub.s32 0, %v4364
    %v4366 = vrot.slane %v4225, %v4365
    %v4367 = vmul.f32 %v4061, %v4366
    %v4368 = vsel %vm4026, %v4367, 0.0
    %4369 = vadd.xlane.f32.xlu0 %v4368
    %v4370 = vpop.xlane.xlu0 %4369
    %v4371 = vlaneseq
    %v4372 = vshrl.u32 %v4371, 7
    %v4373 = vsub.s32 0, %v4372
    %v4374 = vrot.slane %v4226, %v4373
    %v4375 = vadd.f32 %v4370, %v4374
    %4377 = vset.pattern.permute.xlu0 0
    %4378 = vperm.xlu0 %4377, %v4224
    %v4379 = vpop.permute.xlu0 %4378
    %v4381 = vmul.f32 %v4379, %v4366
    %v4382 = vmul.f32 %v4216, %v4381
    %v4383 = vmul.f32 %v4217, %v4381
    %v4384 = vmul.f32 %v4218, %v4381
    %v4385 = vmul.f32 %v4219, %v4381
    %v4386 = vmul.f32 %v4220, %v4381
    %v4387 = vmul.f32 %v4221, %v4381
    %v4388 = vmul.f32 %v4222, %v4381
    %v4389 = vmul.f32 %v4223, %v4381
    %v4390 = vsel %vm4026, %v4382, 0.0
    %4391 = vadd.xlane.f32.xlu0 %v4390
    %v4392 = vpop.xlane.xlu0 %4391
    %v4393 = vsel %vm4026, %v4383, 0.0
    %4394 = vadd.xlane.f32.xlu0 %v4393
    %v4395 = vpop.xlane.xlu0 %4394
    %v4396 = vsel %vm4026, %v4384, 0.0
    %4397 = vadd.xlane.f32.xlu0 %v4396
    %v4398 = vpop.xlane.xlu0 %4397
    %v4399 = vsel %vm4026, %v4385, 0.0
    %4400 = vadd.xlane.f32.xlu0 %v4399
    %v4401 = vpop.xlane.xlu0 %4400
    %v4402 = vsel %vm4026, %v4386, 0.0
    %4403 = vadd.xlane.f32.xlu0 %v4402
    %v4404 = vpop.xlane.xlu0 %4403
    %v4405 = vsel %vm4026, %v4387, 0.0
    %4406 = vadd.xlane.f32.xlu0 %v4405
    %v4407 = vpop.xlane.xlu0 %4406
    %v4408 = vsel %vm4026, %v4388, 0.0
    %4409 = vadd.xlane.f32.xlu0 %v4408
    %v4410 = vpop.xlane.xlu0 %4409
    %v4411 = vsel %vm4026, %v4389, 0.0
    %4412 = vadd.xlane.f32.xlu0 %v4411
    %v4413 = vpop.xlane.xlu0 %4412
    %v4422 = vlaneseq
    %v4423 = vshrl.u32 %v4422, 7
    %v4424 = vsub.s32 %v42, %v4423
    %v4425 = vrot.slane %v4392, %v4424
    %v4426 = vlaneseq
    %v4427 = vshrl.u32 %v4426, 7
    %v4428 = vsub.s32 %v42, %v4427
    %v4429 = vrot.slane %v4395, %v4428
    %v4430 = vlaneseq
    %v4431 = vshrl.u32 %v4430, 7
    %v4432 = vsub.s32 %v42, %v4431
    %v4433 = vrot.slane %v4398, %v4432
    %v4434 = vlaneseq
    %v4435 = vshrl.u32 %v4434, 7
    %v4436 = vsub.s32 %v42, %v4435
    %v4437 = vrot.slane %v4401, %v4436
    %v4438 = vlaneseq
    %v4439 = vshrl.u32 %v4438, 7
    %v4440 = vsub.s32 %v42, %v4439
    %v4441 = vrot.slane %v4404, %v4440
    %v4442 = vlaneseq
    %v4443 = vshrl.u32 %v4442, 7
    %v4444 = vsub.s32 %v42, %v4443
    %v4445 = vrot.slane %v4407, %v4444
    %v4446 = vlaneseq
    %v4447 = vshrl.u32 %v4446, 7
    %v4448 = vsub.s32 %v42, %v4447
    %v4449 = vrot.slane %v4410, %v4448
    %v4450 = vlaneseq
    %v4451 = vshrl.u32 %v4450, 7
    %v4452 = vsub.s32 %v42, %v4451
    %v4453 = vrot.slane %v4413, %v4452
    %v4454 = vsel %vm701, %v4429, %v4425
    %v4455 = vsel %vm703, %v4433, %v4454
    %v4456 = vsel %vm705, %v4437, %v4455
    %v4457 = vsel %vm707, %v4441, %v4456
    %v4458 = vsel %vm709, %v4445, %v4457
    %v4459 = vsel %vm711, %v4449, %v4458
    %v4460 = vsel %vm713, %v4453, %v4459
    %v4462 = vsel %vm4026, %v4460, 0.0
    %4463 = vadd.xlane.f32.xlu0 %v4462
    %v4464 = vpop.xlane.xlu0 %4463
    %v4466 = vlaneseq
    %v4467 = vshrl.u32 %v4466, 7
    %v4468 = vsub.s32 0, %v4467
    %v4469 = vrot.slane %v4464, %v4468
    %v4470 = vlaneseq
    %v4471 = vshrl.u32 %v4470, 7
    %v4472 = vsub.s32 1, %v4471
    %v4473 = vrot.slane %v4464, %v4472
    %v4474 = vlaneseq
    %v4475 = vshrl.u32 %v4474, 7
    %v4476 = vsub.s32 2, %v4475
    %v4477 = vrot.slane %v4464, %v4476
    %v4478 = vlaneseq
    %v4479 = vshrl.u32 %v4478, 7
    %v4480 = vsub.s32 3, %v4479
    %v4481 = vrot.slane %v4464, %v4480
    %v4482 = vlaneseq
    %v4483 = vshrl.u32 %v4482, 7
    %v4484 = vsub.s32 4, %v4483
    %v4485 = vrot.slane %v4464, %v4484
    %v4486 = vlaneseq
    %v4487 = vshrl.u32 %v4486, 7
    %v4488 = vsub.s32 5, %v4487
    %v4489 = vrot.slane %v4464, %v4488
    %v4490 = vlaneseq
    %v4491 = vshrl.u32 %v4490, 7
    %v4492 = vsub.s32 6, %v4491
    %v4493 = vrot.slane %v4464, %v4492
    %v4494 = vlaneseq
    %v4495 = vshrl.u32 %v4494, 7
    %v4496 = vsub.s32 7, %v4495
    %v4497 = vrot.slane %v4464, %v4496
    %v4507 = vcombine.high %v4362, %v4362
    %v4509 = vunpack.c.l.s4 1966171168
    %v4510 = vunpack.c.0.s8 %v4509
    %v4511 = vlaneseq
    %v4512 = vshrl.u32 %v4511, 7
    %v4513 = vsub.s32 %v4510, %v4512
    %v4514 = vrot.slane %v4362, %v4513
    %v4516 = vunpack.c.l.s4 1966171168
    %v4517 = vunpack.c.0.s8 %v4516
    %v4518 = vlaneseq
    %v4519 = vshrl.u32 %v4518, 7
    %v4520 = vsub.s32 %v4517, %v4519
    %v4521 = vrot.slane %v4507, %v4520
    %v4522 = vcombine.high %v4514, %v4514
    %v4523 = vcombine.high %v4521, %v4521
    %v4525 = vunpack.c.l.s4 1966171168
    %v4526 = vunpack.c.0.s8 %v4525
    %v4527 = vlaneseq
    %v4528 = vshrl.u32 %v4527, 7
    %v4529 = vsub.s32 %v4526, %v4528
    %v4530 = vrot.slane %v4514, %v4529
    %v4532 = vunpack.c.l.s4 1966171168
    %v4533 = vunpack.c.0.s8 %v4532
    %v4534 = vlaneseq
    %v4535 = vshrl.u32 %v4534, 7
    %v4536 = vsub.s32 %v4533, %v4535
    %v4537 = vrot.slane %v4521, %v4536
    %v4539 = vunpack.c.l.s4 1966171168
    %v4540 = vunpack.c.0.s8 %v4539
    %v4541 = vlaneseq
    %v4542 = vshrl.u32 %v4541, 7
    %v4543 = vsub.s32 %v4540, %v4542
    %v4544 = vrot.slane %v4522, %v4543
    %v4546 = vunpack.c.l.s4 1966171168
    %v4547 = vunpack.c.0.s8 %v4546
    %v4548 = vlaneseq
    %v4549 = vshrl.u32 %v4548, 7
    %v4550 = vsub.s32 %v4547, %v4549
    %v4551 = vrot.slane %v4523, %v4550
    %v4552 = vcombine.high %v4530, %v4530
    %v4553 = vcombine.high %v4537, %v4537
    %v4554 = vcombine.high %v4544, %v4544
    %v4555 = vcombine.high %v4551, %v4551
    %v4564 = vadd.f32 %v4469, %v4530
    %v4565 = vadd.f32 %v4473, %v4544
    %v4566 = vadd.f32 %v4477, %v4552
    %v4567 = vadd.f32 %v4481, %v4554
    %v4568 = vadd.f32 %v4485, %v4537
    %v4569 = vadd.f32 %v4489, %v4551
    %v4570 = vadd.f32 %v4493, %v4553
    %v4571 = vadd.f32 %v4497, %v4555
    %v4572 = vld [vmem:[#allocation5 + $0x6f] sm:$0x1]
    %v4573 = vld [vmem:[#allocation5 + $0x70] sm:$0x1]
    %vm4574 = vcmask 7168
    %v4575 = vsel %vm4574, %v4375, 0.0
    %v4576 = vrot.slane %v4575, 4
    %v4577 = vadd.f32 %v4575, %v4576
    %v4578 = vrot.slane %v4577, 2
    %v4579 = vadd.f32 %v4577, %v4578
    %v4580 = vrot.slane %v4579, 1
    %v4581 = vadd.f32 %v4579, %v4580
    %v4582 = vmul.f32 %v4581, %v301
    %v4583 = vsub.f32 %v4375, %v4582
    %v4584 = vmul.f32 %v4583, %v4583
    %v4585 = vsel %vm4574, %v4584, 0.0
    %v4586 = vrot.slane %v4585, 4
    %v4587 = vadd.f32 %v4585, %v4586
    %v4588 = vrot.slane %v4587, 2
    %v4589 = vadd.f32 %v4587, %v4588
    %v4590 = vrot.slane %v4589, 1
    %v4591 = vadd.f32 %v4589, %v4590
    %v4592 = vmul.f32 %v4591, %v301
    %v4593 = vlaneseq
    %v4594 = vshrl.u32 %v4593, 7
    %v4595 = vsub.s32 0, %v4594
    %v4596 = vrot.slane %v4572, %v4595
    %v4597 = vmul.f32 %v4596, %v4583
    %v4598 = vadd.f32 %v4592, 1e-05
    %v4599 = vrsqrt.pop %v4598
    %v4600 = vmul.f32 %v4597, %v4599
    %v4601 = vlaneseq
    %v4602 = vshrl.u32 %v4601, 7
    %v4603 = vsub.s32 0, %v4602
    %v4604 = vrot.slane %v4573, %v4603
    %v4605 = vadd.f32 %v4600, %v4604
    %vm4606 = vcmp.eq.s32.totalorder %v42, 0
    %4608 = vset.pattern.permute.xlu0 0
    %4609 = vperm.xlu0 %4608, %v4605
    %v4610 = vpop.permute.xlu0 %4609
    %v4612 = vsel %vm4606, %v4610, 0.0
    %vm4613 = vcmp.eq.s32.totalorder %v42, 1
    %4615 = vset.pattern.permute.xlu0 0
    %4616 = vperm.xlu0 %4615, %v4564
    %v4617 = vpop.permute.xlu0 %4616
    %v4619 = vlaneseq
    %v4620 = vshrl.u32 %v4619, 7
    %v4621 = vsub.s32 0, %v4620
    %v4622 = vrot.slane %v4617, %v4621
    %4624 = vset.pattern.permute.xlu0 0
    %4625 = vperm.xlu0 %4624, %v4565
    %v4626 = vpop.permute.xlu0 %4625
    %v4628 = vlaneseq
    %v4629 = vshrl.u32 %v4628, 7
    %v4630 = vsub.s32 0, %v4629
    %v4631 = vrot.slane %v4626, %v4630
    %4633 = vset.pattern.permute.xlu0 0
    %4634 = vperm.xlu0 %4633, %v4566
    %v4635 = vpop.permute.xlu0 %4634
    %v4637 = vlaneseq
    %v4638 = vshrl.u32 %v4637, 7
    %v4639 = vsub.s32 0, %v4638
    %v4640 = vrot.slane %v4635, %v4639
    %4642 = vset.pattern.permute.xlu0 0
    %4643 = vperm.xlu0 %4642, %v4567
    %v4644 = vpop.permute.xlu0 %4643
    %v4646 = vlaneseq
    %v4647 = vshrl.u32 %v4646, 7
    %v4648 = vsub.s32 0, %v4647
    %v4649 = vrot.slane %v4644, %v4648
    %4651 = vset.pattern.permute.xlu0 0
    %4652 = vperm.xlu0 %4651, %v4568
    %v4653 = vpop.permute.xlu0 %4652
    %v4655 = vlaneseq
    %v4656 = vshrl.u32 %v4655, 7
    %v4657 = vsub.s32 0, %v4656
    %v4658 = vrot.slane %v4653, %v4657
    %4660 = vset.pattern.permute.xlu0 0
    %4661 = vperm.xlu0 %4660, %v4569
    %v4662 = vpop.permute.xlu0 %4661
    %v4664 = vlaneseq
    %v4665 = vshrl.u32 %v4664, 7
    %v4666 = vsub.s32 0, %v4665
    %v4667 = vrot.slane %v4662, %v4666
    %4669 = vset.pattern.permute.xlu0 0
    %4670 = vperm.xlu0 %4669, %v4570
    %v4671 = vpop.permute.xlu0 %4670
    %v4673 = vlaneseq
    %v4674 = vshrl.u32 %v4673, 7
    %v4675 = vsub.s32 0, %v4674
    %v4676 = vrot.slane %v4671, %v4675
    %4678 = vset.pattern.permute.xlu0 0
    %4679 = vperm.xlu0 %4678, %v4571
    %v4680 = vpop.permute.xlu0 %4679
    %v4682 = vlaneseq
    %v4683 = vshrl.u32 %v4682, 7
    %v4684 = vsub.s32 0, %v4683
    %v4685 = vrot.slane %v4680, %v4684
    %v4694 = vcombine.low %v4622, %v4631
    %v4695 = vcombine.low %v4640, %v4649
    %v4696 = vcombine.low %v4658, %v4667
    %v4697 = vcombine.low %v4676, %v4685
    %v4699 = vunpack.c.l.s4 1966171168
    %v4700 = vunpack.c.0.s8 %v4699
    %v4701 = vlaneseq
    %v4702 = vshrl.u32 %v4701, 7
    %v4703 = vsub.s32 %v4700, %v4702
    %v4704 = vrot.slane %v4694, %v4703
    %v4706 = vunpack.c.l.s4 1966171168
    %v4707 = vunpack.c.0.s8 %v4706
    %v4708 = vlaneseq
    %v4709 = vshrl.u32 %v4708, 7
    %v4710 = vsub.s32 %v4707, %v4709
    %v4711 = vrot.slane %v4695, %v4710
    %v4713 = vunpack.c.l.s4 1966171168
    %v4714 = vunpack.c.0.s8 %v4713
    %v4715 = vlaneseq
    %v4716 = vshrl.u32 %v4715, 7
    %v4717 = vsub.s32 %v4714, %v4716
    %v4718 = vrot.slane %v4696, %v4717
    %v4720 = vunpack.c.l.s4 1966171168
    %v4721 = vunpack.c.0.s8 %v4720
    %v4722 = vlaneseq
    %v4723 = vshrl.u32 %v4722, 7
    %v4724 = vsub.s32 %v4721, %v4723
    %v4725 = vrot.slane %v4697, %v4724
    %v4726 = vcombine.low %v4704, %v4711
    %v4727 = vcombine.low %v4718, %v4725
    %v4729 = vunpack.c.l.s4 1966171168
    %v4730 = vunpack.c.0.s8 %v4729
    %v4731 = vlaneseq
    %v4732 = vshrl.u32 %v4731, 7
    %v4733 = vsub.s32 %v4730, %v4732
    %v4734 = vrot.slane %v4726, %v4733
    %v4736 = vunpack.c.l.s4 1966171168
    %v4737 = vunpack.c.0.s8 %v4736
    %v4738 = vlaneseq
    %v4739 = vshrl.u32 %v4738, 7
    %v4740 = vsub.s32 %v4737, %v4739
    %v4741 = vrot.slane %v4727, %v4740
    %v4742 = vcombine.low %v4734, %v4741
    %v4744 = vsel %vm4613, %v4742, 0.0
    %v4745 = vadd.f32 %v4612, %v4744
    %4746 = vst [vmem:[#allocation7] sm:$0xff] %v4745
    // Predicated region
    $region18: #{tpu_custom_call.1} parent=1 // pred_check
      _
    $region19: #{tpu_custom_call.1} parent=1 // pred_check_branch
      %4748 = sbr.rel (0) target = $region21
    $region20: #{tpu_custom_call.1} parent=1 // pred_region
      %s4750 = ssub.s32 128, 128
      %4751 = vsyncadd [#allocation4], %s4750
      %s4753 = sshll.u32 [#allocation7], 4
      %s4754 = int_to_ptr.vmem [resolvable:$true] %s4753
      %4756 = dma.vmem_to_hbm [thread:$0]  %s4754, 128, %s2, [#allocation4]
    $region21: #{tpu_custom_call.1} parent=1 // pred_fallthru
      _
    // Predicated region
    $region22: #{tpu_custom_call.1} parent=1 // pred_check
      _
    $region23: #{tpu_custom_call.1} parent=1 // pred_check_branch
      %4758 = sbr.rel (0) target = $region25
    $region24: #{tpu_custom_call.1} parent=1 // pred_region
      %4759 = dma.done [#allocation4], 128
    $region25: #{tpu_custom_call.1} parent=1 // pred_fallthru
      _
    %4760 = vsyncpa [#allocation3], 1
    %4761 = vsyncpa [#allocation6], 1
    %4762 = vsyncpa [#allocation4], 1

</llo_original>
